<compile_context>
chip_gen: v5e
topology: v5e:2x2
jax: 0.10.0
libtpu: 0.0.40
codegen_flags: <defaults>
</compile_context>

<pallas_src>
from functools import partial

import jax
import jax.numpy as jnp
from jax import lax
from jax.experimental import pallas as pl
from jax.experimental.pallas import tpu as pltpu

NEG_SLOPE = 0.01  # nn.LeakyReLU() default negative_slope


def _leaky_relu(x):
    return jnp.where(x >= 0, x, NEG_SLOPE * x)


def _pick_row_chunk(H, W):
    """Row-chunk TH so TH*W (matmul M dim) is a multiple of 128 when possible."""
    for t in (8, 16, 32, 4, 2, 1):
        if H % t == 0 and (t * W) % 128 == 0:
            return t
    return H  # fallback: single chunk (still correct)


def _vmem_limit_bytes():
    """Per-generation VMEM limit: ~3/4 of physical (96 MiB v5e/v6e, 48 MiB v7x)."""
    try:
        cap = pltpu.get_tpu_info().vmem_capacity_bytes
    except Exception:
        return 64 * 1024 * 1024
    return int(min(96 * 1024 * 1024, (cap * 3) // 4))


def _conv_block_kernel(x_ref, w1_ref, b1_ref, w2t_ref, b2_ref, o_ref,
                       xp_ref, y1p_ref, *,
                       K, H, W, Cin, C1, H2, W2, stride, pad, padw, TH):
    """Fused conv1(s=1)+LReLU -> conv2(s=stride)+LReLU for one batch image.

    x_ref   : (1, H, W, Cin)              bf16 input image
    w1_ref  : (K*K*Cin, C1)               bf16, rows ordered (kh, kw, cin)
    b1_ref  : (1, C1)                     f32
    w2t_ref : (C1, K*K*C1)                bf16, cols ordered (kh, kw, c)
    b2_ref  : (C1, 1)                     f32
    o_ref   : (1, C1, H2*W2)              bf16 output, channel-major (== NCHW flat)
    xp_ref  : (H+2p, padw+W+p, Cin)       bf16 scratch, padded input
    y1p_ref : (H+2p, padw+W+p, C1)        f32 scratch, padded conv1 output
    """

    # ---- zero only the thin halo that the conv taps actually read -----------
    # The interior is fully rewritten every grid step, so a full-buffer memset
    # (32x the useful data at small C) is wasted vst traffic.  Done every step
    # (not pl.when(pid==0)) so it is correct under megacore batch partitioning.
    def zero_halo(ref, nc, dt):
        cw = W + 2 * pad
        ref[0:pad, padw - pad:padw + W + pad, :] = jnp.zeros((pad, cw, nc), dt)
        ref[pad + H:pad + H + pad, padw - pad:padw + W + pad, :] = (
            jnp.zeros((pad, cw, nc), dt))
        ref[pad:pad + H, padw - pad:padw, :] = jnp.zeros((H, pad, nc), dt)
        ref[pad:pad + H, padw + W:padw + W + pad, :] = jnp.zeros((H, pad, nc), dt)

    zero_halo(xp_ref, Cin, jnp.bfloat16)
    zero_halo(y1p_ref, C1, jnp.float32)

    # Interior of padded input; left halo over-allocated to `padw` columns so
    # this store starts on a sublane-tile boundary (dense stores).
    xp_ref[pad:pad + H, padw:padw + W, :] = x_ref[0]

    # ---- conv1 (stride 1) + bias + LeakyReLU --------------------------------
    # im2col: one (TH*W, K*K*Cin) @ (K*K*Cin, C1) MXU contraction per row chunk.
    w1 = w1_ref[...]                                     # (K*K*Cin, C1) bf16
    b1 = jnp.broadcast_to(b1_ref[...], (TH * W, C1))     # hoisted broadcast
    n_chunks = H // TH

    def conv1_chunk(ci, carry):
        r0 = pl.multiple_of(ci * TH, TH)
        pieces = []
        for kh in range(K):
            for kw in range(K):
                c0 = padw - pad + kw
                pieces.append(xp_ref[pl.ds(r0 + kh, TH), c0:c0 + W, :])
        slab = jnp.concatenate(pieces, axis=-1)          # (TH, W, K*K*Cin)
        slab = slab.reshape(TH * W, K * K * Cin)         # bf16
        acc = jnp.dot(slab, w1, preferred_element_type=jnp.float32)
        acc = _leaky_relu(acc + b1)                      # (TH*W, C1) f32
        y1p_ref[pl.ds(pad + r0, TH), padw:padw + W, :] = (
            acc.reshape(TH, W, C1).astype(y1p_ref.dtype))
        return carry

    # fori_loop (not a Python for) keeps live ranges to one chunk; unroll for
    # short trip counts so the LLO scheduler sees the whole body.
    lax.fori_loop(0, n_chunks, conv1_chunk, 0, unroll=n_chunks <= 4)

    # ---- conv2 (stride = `stride`) + bias + LeakyReLU -----------------------
    # Strided tap reads decimate in-kernel: only H2*W2 outputs are computed.
    # TODO(synk): a bf16 y1p scratch would halve this buffer, but the stride-2
    # sublane taps are kept on the known-good f32 strided-load lowering path.
    pieces = []
    for kh in range(K):
        for kw in range(K):
            c0 = padw - pad + kw
            if stride == 1:
                t = y1p_ref[kh:kh + H2, c0:c0 + W2, :]
            else:
                t = y1p_ref[pl.ds(kh, H2, stride=stride),
                            pl.ds(c0, W2, stride=stride), :]
            pieces.append(t)                             # (H2, W2, C1)
    slab2 = jnp.concatenate(pieces, axis=-1)             # (H2, W2, K*K*C1)
    slab2 = slab2.reshape(H2 * W2, K * K * C1).astype(jnp.bfloat16)
    # Transposed contraction (A . B^T, flash-attn style) so the result comes
    # out channel-major: (C1, KKC1) . (H2*W2, KKC1)^T -> (C1, H2*W2).
    acc2 = lax.dot_general(w2t_ref[...], slab2, (((1,), (1,)), ((), ())),
                           preferred_element_type=jnp.float32)
    acc2 = _leaky_relu(acc2 + b2_ref[...])               # b2 (C1,1) bcast over lanes
    # Lane-dense bf16 store: H2*W2 lanes instead of C1, no output transpose
    # needed in the wrapper (already NCHW order).
    o_ref[0] = acc2.astype(jnp.bfloat16)


def conv_block_nhwc(x_nhwc, params, pool=True):
    """Fused ConvBlock; NHWC input -> channel-major (N, C1, H2, W2) bf16 output."""
    w1, b1, w2, b2 = params["w1"], params["b1"], params["w2"], params["b2"]
    K = w1.shape[0]
    Cin = w1.shape[2]
    C1 = w1.shape[3]
    stride = 2 if pool else 1
    pad = K // 2

    x = x_nhwc.astype(jnp.bfloat16)
    N, H, W, _ = x.shape
    H2 = (H + 2 * pad - K) // stride + 1
    W2 = (W + 2 * pad - K) // stride + 1
    TH = _pick_row_chunk(H, W)
    padw = ((max(pad, 1) + 15) // 16) * 16   # sublane-tile aligned left halo

    # Weights flattened so each conv is ONE MXU contraction; conv2 weights are
    # pre-transposed so the kernel emits a channel-major (lane-dense) result.
    w1f = w1.reshape(K * K * Cin, C1).astype(jnp.bfloat16)
    w2t = jnp.transpose(w2.reshape(K * K * C1, C1)).astype(jnp.bfloat16)
    b1f = b1.reshape(1, C1).astype(jnp.float32)
    b2f = b2.reshape(C1, 1).astype(jnp.float32)

    Hp = H + 2 * pad
    Wp = padw + W + pad

    flops = int(2 * N * K * K * (H * W * Cin * C1 + H2 * W2 * C1 * C1))
    bytes_accessed = int(N * H * W * Cin * 2            # bf16 input
                         + (w1f.size + w2t.size) * 2    # bf16 weights
                         + (b1f.size + b2f.size) * 4    # f32 biases
                         + N * H2 * W2 * C1 * 2)        # bf16 output

    kernel = partial(_conv_block_kernel, K=K, H=H, W=W, Cin=Cin, C1=C1,
                     H2=H2, W2=W2, stride=stride, pad=pad, padw=padw, TH=TH)

    # TODO(synk): for large H/W add a row-tile grid axis (halo re-read or
    # manual-DMA halos) so per-step scratches stay a few MiB on v7x's 64 MiB
    # VMEM and both TensorCores get spatial work; whole-image-per-batch blocks
    # are fine at these shapes.
    out = pl.pallas_call(
        kernel,
        out_shape=jax.ShapeDtypeStruct((N, C1, H2 * W2), jnp.bfloat16),
        grid=(N,),
        in_specs=[
            pl.BlockSpec((1, H, W, Cin), lambda n: (n, 0, 0, 0)),
            pl.BlockSpec((K * K * Cin, C1), lambda n: (0, 0)),
            pl.BlockSpec((1, C1), lambda n: (0, 0)),
            pl.BlockSpec((C1, K * K * C1), lambda n: (0, 0)),
            pl.BlockSpec((C1, 1), lambda n: (0, 0)),
        ],
        out_specs=pl.BlockSpec((1, C1, H2 * W2), lambda n: (n, 0, 0)),
        scratch_shapes=[
            pltpu.VMEM((Hp, Wp, Cin), jnp.bfloat16),   # padded input
            pltpu.VMEM((Hp, Wp, C1), jnp.float32),     # padded conv1 output
        ],
        compiler_params=pltpu.CompilerParams(
            dimension_semantics=("parallel",),
            vmem_limit_bytes=_vmem_limit_bytes()),
        cost_estimate=pl.CostEstimate(
            flops=flops, transcendentals=0, bytes_accessed=bytes_accessed),
    )(x, w1f, b1f, w2t, b2f)

    # Free row-major reshape: kernel output is already in NCHW element order.
    return out.reshape(N, C1, H2, W2)


@partial(jax.jit, static_argnames="pool")
def conv_block(x_nchw, params, pool=True):
    """Module-facing ConvBlock forward: NCHW f32 in -> NCHW f32 out."""
    # Cast first so the layout transpose moves 2-byte data; the kernel emits a
    # channel-major result, so NO output transpose is needed.
    x = jnp.transpose(x_nchw.astype(jnp.bfloat16), (0, 2, 3, 1))
    y = conv_block_nhwc(x, params, pool=pool)
    return y.astype(jnp.float32)


def init_params(key, in_dim, out_dim, kernel):
    """Deterministic synthetic weights, PyTorch Conv2d shapes converted to HWIO."""
    k1, k2, k3, k4 = jax.random.split(key, 4)
    w1 = jax.random.normal(k1, (out_dim, in_dim, kernel, kernel), jnp.float32) * 0.1
    b1 = jax.random.normal(k2, (out_dim,), jnp.float32) * 0.1
    w2 = jax.random.normal(k3, (out_dim, out_dim, kernel, kernel), jnp.float32) * 0.1
    b2 = jax.random.normal(k4, (out_dim,), jnp.float32) * 0.1
    to_hwio = lambda w: jnp.transpose(w, (2, 3, 1, 0))   # OIHW -> HWIO
    return {"w1": to_hwio(w1), "b1": b1, "w2": to_hwio(w2), "b2": b2}


def _ref_conv_block(x_nchw, params, pool=True):
    """Pure-JAX f32 reference (lax conv) for a correctness check."""
    def conv(x, w, b, s):
        pad = w.shape[0] // 2
        y = jax.lax.conv_general_dilated(
            x, w, window_strides=(s, s),
            padding=((pad, pad), (pad, pad)),
            dimension_numbers=("NHWC", "HWIO", "NHWC"))
        y = y + b[None, None, None, :]
        return jnp.where(y >= 0, y, NEG_SLOPE * y)

    x = jnp.transpose(x_nchw, (0, 2, 3, 1))
    y = conv(x, params["w1"], params["b1"], 1)
    y = conv(y, params["w2"], params["b2"], 2 if pool else 1)
    return jnp.transpose(y, (0, 3, 1, 2))


if __name__ == "__main__":
    key = jax.random.PRNGKey(0)
    kx, kp = jax.random.split(key)

    N, C, HW = 2, 4, 16
    x = jax.random.normal(kx, (N, C, HW, HW), jnp.float32)
    params = init_params(kp, in_dim=C, out_dim=C, kernel=3)

    out = jax.block_until_ready(conv_block(x, params, pool=True))
    assert out.shape == (N, C, HW // 2, HW // 2), out.shape

    ref = jax.block_until_ready(_ref_conv_block(x, params, pool=True))
    # Kernel uses bf16 MXU operands and emits bf16 (f32 accumulation); compare
    # to the pure-f32 reference with a tolerance covering bf16 rounding but far
    # below any structural error (wrong tap / pad / stride would be O(0.1+)).
    err = float(jnp.max(jnp.abs(out - ref)))
    assert jnp.allclose(out, ref, atol=6e-2, rtol=5e-2), err

    print("KERNEL_OK")
</pallas_src>

<mosaic_0001>
module attributes {stable_mosaic.version = 11 : i64} {
  func.func @_conv_block_kernel(%arg0: i32, %arg1: memref<1x16x16x4xbf16, #tpu.memory_space<vmem>>, %arg2: memref<36x4xbf16, #tpu.memory_space<vmem>>, %arg3: memref<1x4xf32, #tpu.memory_space<vmem>>, %arg4: memref<4x36xbf16, #tpu.memory_space<vmem>>, %arg5: memref<4x1xf32, #tpu.memory_space<vmem>>, %arg6: memref<1x4x64xbf16, #tpu.memory_space<vmem>>, %arg7: memref<18x33x4xbf16, #tpu.memory_space<vmem>>, %arg8: memref<18x33x4xf32, #tpu.memory_space<vmem>>) attributes {dimension_semantics = [#tpu.dimension_semantics<parallel>], iteration_bounds = array<i64: 2>, scalar_prefetch = 0 : i64, scratch_operands = 2 : i64, tpu.core_type = #tpu.core_type<tc>, window_params = [{transform_indices = @transform_0, window_bounds = array<i64: 1, 16, 16, 4>}, {pipeline_mode = #tpu.pipeline_mode<synchronous>, transform_indices = @transform_1, window_bounds = array<i64: 36, 4>}, {pipeline_mode = #tpu.pipeline_mode<synchronous>, transform_indices = @transform_2, window_bounds = array<i64: 1, 4>}, {pipeline_mode = #tpu.pipeline_mode<synchronous>, transform_indices = @transform_3, window_bounds = array<i64: 4, 36>}, {pipeline_mode = #tpu.pipeline_mode<synchronous>, transform_indices = @transform_4, window_bounds = array<i64: 4, 1>}, {transform_indices = @transform_5, window_bounds = array<i64: 1, 4, 64>}]} {
    %cst = arith.constant 0.000000e+00 : bf16
    %0 = vector.broadcast %cst : bf16 to vector<1x18x4xbf16>
    %c0 = arith.constant 0 : index
    %c15 = arith.constant 15 : index
    %c0_0 = arith.constant 0 : index
    %1 = vector.load %arg7[%c0, %c15, %c0_0] : memref<18x33x4xbf16, #tpu.memory_space<vmem>>, vector<1x18x4xbf16>
    tpu.vector_store %arg7[%c0, %c15, %c0_0], %0 {strides = array<i32>} : memref<18x33x4xbf16, #tpu.memory_space<vmem>>, vector<1x18x4xbf16>,
    %cst_1 = arith.constant 0.000000e+00 : bf16
    %2 = vector.broadcast %cst_1 : bf16 to vector<1x18x4xbf16>
    %c17 = arith.constant 17 : index
    %c15_2 = arith.constant 15 : index
    %c0_3 = arith.constant 0 : index
    %3 = vector.load %arg7[%c17, %c15_2, %c0_3] : memref<18x33x4xbf16, #tpu.memory_space<vmem>>, vector<1x18x4xbf16>
    tpu.vector_store %arg7[%c17, %c15_2, %c0_3], %2 {strides = array<i32>} : memref<18x33x4xbf16, #tpu.memory_space<vmem>>, vector<1x18x4xbf16>,
    %cst_4 = arith.constant 0.000000e+00 : bf16
    %4 = vector.broadcast %cst_4 : bf16 to vector<16x1x4xbf16>
    %c1 = arith.constant 1 : index
    %c15_5 = arith.constant 15 : index
    %c0_6 = arith.constant 0 : index
    %5 = vector.load %arg7[%c1, %c15_5, %c0_6] : memref<18x33x4xbf16, #tpu.memory_space<vmem>>, vector<16x1x4xbf16>
    tpu.vector_store %arg7[%c1, %c15_5, %c0_6], %4 {strides = array<i32>} : memref<18x33x4xbf16, #tpu.memory_space<vmem>>, vector<16x1x4xbf16>,
    %cst_7 = arith.constant 0.000000e+00 : bf16
    %6 = vector.broadcast %cst_7 : bf16 to vector<16x1x4xbf16>
    %c1_8 = arith.constant 1 : index
    %c32 = arith.constant 32 : index
    %c0_9 = arith.constant 0 : index
    %7 = vector.load %arg7[%c1_8, %c32, %c0_9] : memref<18x33x4xbf16, #tpu.memory_space<vmem>>, vector<16x1x4xbf16>
    tpu.vector_store %arg7[%c1_8, %c32, %c0_9], %6 {strides = array<i32>} : memref<18x33x4xbf16, #tpu.memory_space<vmem>>, vector<16x1x4xbf16>,
    %cst_10 = arith.constant 0.000000e+00 : f32
    %8 = vector.broadcast %cst_10 : f32 to vector<1x18x4xf32>
    %c0_11 = arith.constant 0 : index
    %c15_12 = arith.constant 15 : index
    %c0_13 = arith.constant 0 : index
    %9 = vector.load %arg8[%c0_11, %c15_12, %c0_13] : memref<18x33x4xf32, #tpu.memory_space<vmem>>, vector<1x18x4xf32>
    tpu.vector_store %arg8[%c0_11, %c15_12, %c0_13], %8 {strides = array<i32>} : memref<18x33x4xf32, #tpu.memory_space<vmem>>, vector<1x18x4xf32>,
    %cst_14 = arith.constant 0.000000e+00 : f32
    %10 = vector.broadcast %cst_14 : f32 to vector<1x18x4xf32>
    %c17_15 = arith.constant 17 : index
    %c15_16 = arith.constant 15 : index
    %c0_17 = arith.constant 0 : index
    %11 = vector.load %arg8[%c17_15, %c15_16, %c0_17] : memref<18x33x4xf32, #tpu.memory_space<vmem>>, vector<1x18x4xf32>
    tpu.vector_store %arg8[%c17_15, %c15_16, %c0_17], %10 {strides = array<i32>} : memref<18x33x4xf32, #tpu.memory_space<vmem>>, vector<1x18x4xf32>,
    %cst_18 = arith.constant 0.000000e+00 : f32
    %12 = vector.broadcast %cst_18 : f32 to vector<16x1x4xf32>
    %c1_19 = arith.constant 1 : index
    %c15_20 = arith.constant 15 : index
    %c0_21 = arith.constant 0 : index
    %13 = vector.load %arg8[%c1_19, %c15_20, %c0_21] : memref<18x33x4xf32, #tpu.memory_space<vmem>>, vector<16x1x4xf32>
    tpu.vector_store %arg8[%c1_19, %c15_20, %c0_21], %12 {strides = array<i32>} : memref<18x33x4xf32, #tpu.memory_space<vmem>>, vector<16x1x4xf32>,
    %cst_22 = arith.constant 0.000000e+00 : f32
    %14 = vector.broadcast %cst_22 : f32 to vector<16x1x4xf32>
    %c1_23 = arith.constant 1 : index
    %c32_24 = arith.constant 32 : index
    %c0_25 = arith.constant 0 : index
    %15 = vector.load %arg8[%c1_23, %c32_24, %c0_25] : memref<18x33x4xf32, #tpu.memory_space<vmem>>, vector<16x1x4xf32>
    tpu.vector_store %arg8[%c1_23, %c32_24, %c0_25], %14 {strides = array<i32>} : memref<18x33x4xf32, #tpu.memory_space<vmem>>, vector<16x1x4xf32>,
    %c0_26 = arith.constant 0 : index
    %c0_27 = arith.constant 0 : index
    %c0_28 = arith.constant 0 : index
    %c0_29 = arith.constant 0 : index
    %16 = vector.load %arg1[%c0_26, %c0_27, %c0_28, %c0_29] : memref<1x16x16x4xbf16, #tpu.memory_space<vmem>>, vector<1x16x16x4xbf16>
    %17 = vector.shape_cast %16 : vector<1x16x16x4xbf16> to vector<16x16x4xbf16>
    %c1_30 = arith.constant 1 : index
    %c16 = arith.constant 16 : index
    %c0_31 = arith.constant 0 : index
    %18 = vector.load %arg7[%c1_30, %c16, %c0_31] : memref<18x33x4xbf16, #tpu.memory_space<vmem>>, vector<16x16x4xbf16>
    tpu.vector_store %arg7[%c1_30, %c16, %c0_31], %17 {strides = array<i32>} : memref<18x33x4xbf16, #tpu.memory_space<vmem>>, vector<16x16x4xbf16>,
    %c0_32 = arith.constant 0 : index
    %c0_33 = arith.constant 0 : index
    %19 = vector.load %arg2[%c0_32, %c0_33] : memref<36x4xbf16, #tpu.memory_space<vmem>>, vector<36x4xbf16>
    %c0_34 = arith.constant 0 : index
    %c0_35 = arith.constant 0 : index
    %20 = vector.load %arg3[%c0_34, %c0_35] : memref<1x4xf32, #tpu.memory_space<vmem>>, vector<1x4xf32>
    %21 = vector.shape_cast %20 : vector<1x4xf32> to vector<1x4xf32>
    %22 = vector.broadcast %21 : vector<1x4xf32> to vector<128x4xf32>
    %c0_i32 = arith.constant 0 : i32
    %c8_i32 = arith.constant 8 : i32
    %23 = arith.muli %c0_i32, %c8_i32 : i32
    %24 = tpu.assume_multiple %23, 8 : i32
    %c0_i32_36 = arith.constant 0 : i32
    %25 = arith.addi %24, %c0_i32_36 : i32
    %26 = arith.index_cast %25 : i32 to index
    %c15_37 = arith.constant 15 : index
    %c0_38 = arith.constant 0 : index
    %27 = vector.load %arg7[%26, %c15_37, %c0_38] : memref<18x33x4xbf16, #tpu.memory_space<vmem>>, vector<8x16x4xbf16>
    %c0_i32_39 = arith.constant 0 : i32
    %28 = arith.addi %24, %c0_i32_39 : i32
    %29 = arith.index_cast %28 : i32 to index
    %c16_40 = arith.constant 16 : index
    %c0_41 = arith.constant 0 : index
    %30 = vector.load %arg7[%29, %c16_40, %c0_41] : memref<18x33x4xbf16, #tpu.memory_space<vmem>>, vector<8x16x4xbf16>
    %c0_i32_42 = arith.constant 0 : i32
    %31 = arith.addi %24, %c0_i32_42 : i32
    %32 = arith.index_cast %31 : i32 to index
    %c17_43 = arith.constant 17 : index
    %c0_44 = arith.constant 0 : index
    %33 = vector.load %arg7[%32, %c17_43, %c0_44] : memref<18x33x4xbf16, #tpu.memory_space<vmem>>, vector<8x16x4xbf16>
    %c1_i32 = arith.constant 1 : i32
    %34 = arith.addi %24, %c1_i32 : i32
    %35 = arith.index_cast %34 : i32 to index
    %c15_45 = arith.constant 15 : index
    %c0_46 = arith.constant 0 : index
    %36 = vector.load %arg7[%35, %c15_45, %c0_46] : memref<18x33x4xbf16, #tpu.memory_space<vmem>>, vector<8x16x4xbf16>
    %c1_i32_47 = arith.constant 1 : i32
    %37 = arith.addi %24, %c1_i32_47 : i32
    %38 = arith.index_cast %37 : i32 to index
    %c16_48 = arith.constant 16 : index
    %c0_49 = arith.constant 0 : index
    %39 = vector.load %arg7[%38, %c16_48, %c0_49] : memref<18x33x4xbf16, #tpu.memory_space<vmem>>, vector<8x16x4xbf16>
    %c1_i32_50 = arith.constant 1 : i32
    %40 = arith.addi %24, %c1_i32_50 : i32
    %41 = arith.index_cast %40 : i32 to index
    %c17_51 = arith.constant 17 : index
    %c0_52 = arith.constant 0 : index
    %42 = vector.load %arg7[%41, %c17_51, %c0_52] : memref<18x33x4xbf16, #tpu.memory_space<vmem>>, vector<8x16x4xbf16>
    %c2_i32 = arith.constant 2 : i32
    %43 = arith.addi %24, %c2_i32 : i32
    %44 = arith.index_cast %43 : i32 to index
    %c15_53 = arith.constant 15 : index
    %c0_54 = arith.constant 0 : index
    %45 = vector.load %arg7[%44, %c15_53, %c0_54] : memref<18x33x4xbf16, #tpu.memory_space<vmem>>, vector<8x16x4xbf16>
    %c2_i32_55 = arith.constant 2 : i32
    %46 = arith.addi %24, %c2_i32_55 : i32
    %47 = arith.index_cast %46 : i32 to index
    %c16_56 = arith.constant 16 : index
    %c0_57 = arith.constant 0 : index
    %48 = vector.load %arg7[%47, %c16_56, %c0_57] : memref<18x33x4xbf16, #tpu.memory_space<vmem>>, vector<8x16x4xbf16>
    %c2_i32_58 = arith.constant 2 : i32
    %49 = arith.addi %24, %c2_i32_58 : i32
    %50 = arith.index_cast %49 : i32 to index
    %c17_59 = arith.constant 17 : index
    %c0_60 = arith.constant 0 : index
    %51 = vector.load %arg7[%50, %c17_59, %c0_60] : memref<18x33x4xbf16, #tpu.memory_space<vmem>>, vector<8x16x4xbf16>
    %52 = tpu.concatenate %27, %30, %33, %36, %39, %42, %45, %48, %51 in 2 : vector<8x16x4xbf16>, vector<8x16x4xbf16>, vector<8x16x4xbf16>, vector<8x16x4xbf16>, vector<8x16x4xbf16>, vector<8x16x4xbf16>, vector<8x16x4xbf16>, vector<8x16x4xbf16>, vector<8x16x4xbf16> -> vector<8x16x36xbf16>
    %53 = vector.shape_cast %52 : vector<8x16x36xbf16> to vector<128x36xbf16>
    %cst_61 = arith.constant dense<0.000000e+00> : vector<128x4xf32>
    %54 = tpu.matmul %53, %19, %cst_61 {dimension_numbers = #tpu.dot_dimension_numbers<[1], [0], [0], [1], [0, 0, 1, 1], [], []>} : vector<128x36xbf16>, vector<36x4xbf16>, vector<128x4xf32> -> vector<128x4xf32>
    %55 = arith.addf %54, %22 : vector<128x4xf32>
    %cst_62 = arith.constant 0.000000e+00 : f32
    %56 = vector.broadcast %cst_62 : f32 to vector<128x4xf32>
    %57 = arith.cmpf oge, %55, %56 : vector<128x4xf32>
    %cst_63 = arith.constant 0.00999999977 : f32
    %58 = vector.broadcast %cst_63 : f32 to vector<128x4xf32>
    %59 = arith.mulf %58, %55 : vector<128x4xf32>
    %60 = arith.select %57, %55, %59 : vector<128x4xi1>, vector<128x4xf32>
    %61 = vector.shape_cast %60 : vector<128x4xf32> to vector<8x16x4xf32>
    %c1_i32_64 = arith.constant 1 : i32
    %62 = arith.addi %c1_i32_64, %24 : i32
    %63 = arith.index_cast %62 : i32 to index
    %c16_65 = arith.constant 16 : index
    %c0_66 = arith.constant 0 : index
    %64 = vector.load %arg8[%63, %c16_65, %c0_66] : memref<18x33x4xf32, #tpu.memory_space<vmem>>, vector<8x16x4xf32>
    tpu.vector_store %arg8[%63, %c16_65, %c0_66], %61 {strides = array<i32>} : memref<18x33x4xf32, #tpu.memory_space<vmem>>, vector<8x16x4xf32>,
    %c1_i32_67 = arith.constant 1 : i32
    %c8_i32_68 = arith.constant 8 : i32
    %65 = arith.muli %c1_i32_67, %c8_i32_68 : i32
    %66 = tpu.assume_multiple %65, 8 : i32
    %c0_i32_69 = arith.constant 0 : i32
    %67 = arith.addi %66, %c0_i32_69 : i32
    %68 = arith.index_cast %67 : i32 to index
    %c15_70 = arith.constant 15 : index
    %c0_71 = arith.constant 0 : index
    %69 = vector.load %arg7[%68, %c15_70, %c0_71] : memref<18x33x4xbf16, #tpu.memory_space<vmem>>, vector<8x16x4xbf16>
    %c0_i32_72 = arith.constant 0 : i32
    %70 = arith.addi %66, %c0_i32_72 : i32
    %71 = arith.index_cast %70 : i32 to index
    %c16_73 = arith.constant 16 : index
    %c0_74 = arith.constant 0 : index
    %72 = vector.load %arg7[%71, %c16_73, %c0_74] : memref<18x33x4xbf16, #tpu.memory_space<vmem>>, vector<8x16x4xbf16>
    %c0_i32_75 = arith.constant 0 : i32
    %73 = arith.addi %66, %c0_i32_75 : i32
    %74 = arith.index_cast %73 : i32 to index
    %c17_76 = arith.constant 17 : index
    %c0_77 = arith.constant 0 : index
    %75 = vector.load %arg7[%74, %c17_76, %c0_77] : memref<18x33x4xbf16, #tpu.memory_space<vmem>>, vector<8x16x4xbf16>
    %c1_i32_78 = arith.constant 1 : i32
    %76 = arith.addi %66, %c1_i32_78 : i32
    %77 = arith.index_cast %76 : i32 to index
    %c15_79 = arith.constant 15 : index
    %c0_80 = arith.constant 0 : index
    %78 = vector.load %arg7[%77, %c15_79, %c0_80] : memref<18x33x4xbf16, #tpu.memory_space<vmem>>, vector<8x16x4xbf16>
    %c1_i32_81 = arith.constant 1 : i32
    %79 = arith.addi %66, %c1_i32_81 : i32
    %80 = arith.index_cast %79 : i32 to index
    %c16_82 = arith.constant 16 : index
    %c0_83 = arith.constant 0 : index
    %81 = vector.load %arg7[%80, %c16_82, %c0_83] : memref<18x33x4xbf16, #tpu.memory_space<vmem>>, vector<8x16x4xbf16>
    %c1_i32_84 = arith.constant 1 : i32
    %82 = arith.addi %66, %c1_i32_84 : i32
    %83 = arith.index_cast %82 : i32 to index
    %c17_85 = arith.constant 17 : index
    %c0_86 = arith.constant 0 : index
    %84 = vector.load %arg7[%83, %c17_85, %c0_86] : memref<18x33x4xbf16, #tpu.memory_space<vmem>>, vector<8x16x4xbf16>
    %c2_i32_87 = arith.constant 2 : i32
    %85 = arith.addi %66, %c2_i32_87 : i32
    %86 = arith.index_cast %85 : i32 to index
    %c15_88 = arith.constant 15 : index
    %c0_89 = arith.constant 0 : index
    %87 = vector.load %arg7[%86, %c15_88, %c0_89] : memref<18x33x4xbf16, #tpu.memory_space<vmem>>, vector<8x16x4xbf16>
    %c2_i32_90 = arith.constant 2 : i32
    %88 = arith.addi %66, %c2_i32_90 : i32
    %89 = arith.index_cast %88 : i32 to index
    %c16_91 = arith.constant 16 : index
    %c0_92 = arith.constant 0 : index
    %90 = vector.load %arg7[%89, %c16_91, %c0_92] : memref<18x33x4xbf16, #tpu.memory_space<vmem>>, vector<8x16x4xbf16>
    %c2_i32_93 = arith.constant 2 : i32
    %91 = arith.addi %66, %c2_i32_93 : i32
    %92 = arith.index_cast %91 : i32 to index
    %c17_94 = arith.constant 17 : index
    %c0_95 = arith.constant 0 : index
    %93 = vector.load %arg7[%92, %c17_94, %c0_95] : memref<18x33x4xbf16, #tpu.memory_space<vmem>>, vector<8x16x4xbf16>
    %94 = tpu.concatenate %69, %72, %75, %78, %81, %84, %87, %90, %93 in 2 : vector<8x16x4xbf16>, vector<8x16x4xbf16>, vector<8x16x4xbf16>, vector<8x16x4xbf16>, vector<8x16x4xbf16>, vector<8x16x4xbf16>, vector<8x16x4xbf16>, vector<8x16x4xbf16>, vector<8x16x4xbf16> -> vector<8x16x36xbf16>
    %95 = vector.shape_cast %94 : vector<8x16x36xbf16> to vector<128x36xbf16>
    %cst_96 = arith.constant dense<0.000000e+00> : vector<128x4xf32>
    %96 = tpu.matmul %95, %19, %cst_96 {dimension_numbers = #tpu.dot_dimension_numbers<[1], [0], [0], [1], [0, 0, 1, 1], [], []>} : vector<128x36xbf16>, vector<36x4xbf16>, vector<128x4xf32> -> vector<128x4xf32>
    %97 = arith.addf %96, %22 : vector<128x4xf32>
    %cst_97 = arith.constant 0.000000e+00 : f32
    %98 = vector.broadcast %cst_97 : f32 to vector<128x4xf32>
    %99 = arith.cmpf oge, %97, %98 : vector<128x4xf32>
    %cst_98 = arith.constant 0.00999999977 : f32
    %100 = vector.broadcast %cst_98 : f32 to vector<128x4xf32>
    %101 = arith.mulf %100, %97 : vector<128x4xf32>
    %102 = arith.select %99, %97, %101 : vector<128x4xi1>, vector<128x4xf32>
    %103 = vector.shape_cast %102 : vector<128x4xf32> to vector<8x16x4xf32>
    %c1_i32_99 = arith.constant 1 : i32
    %104 = arith.addi %c1_i32_99, %66 : i32
    %105 = arith.index_cast %104 : i32 to index
    %c16_100 = arith.constant 16 : index
    %c0_101 = arith.constant 0 : index
    %106 = vector.load %arg8[%105, %c16_100, %c0_101] : memref<18x33x4xf32, #tpu.memory_space<vmem>>, vector<8x16x4xf32>
    tpu.vector_store %arg8[%105, %c16_100, %c0_101], %103 {strides = array<i32>} : memref<18x33x4xf32, #tpu.memory_space<vmem>>, vector<8x16x4xf32>,
    %c2_i32_102 = arith.constant 2 : i32
    %c0_103 = arith.constant 0 : index
    %c15_104 = arith.constant 15 : index
    %c0_105 = arith.constant 0 : index
    %107 = tpu.strided_load %arg8[%c0_103, %c15_104, %c0_105] {strides = array<i32: 2, 2, 1>} : memref<18x33x4xf32, #tpu.memory_space<vmem>>, vector<8x8x4xf32>
    %c0_106 = arith.constant 0 : index
    %c16_107 = arith.constant 16 : index
    %c0_108 = arith.constant 0 : index
    %108 = tpu.strided_load %arg8[%c0_106, %c16_107, %c0_108] {strides = array<i32: 2, 2, 1>} : memref<18x33x4xf32, #tpu.memory_space<vmem>>, vector<8x8x4xf32>
    %c0_109 = arith.constant 0 : index
    %c17_110 = arith.constant 17 : index
    %c0_111 = arith.constant 0 : index
    %109 = tpu.strided_load %arg8[%c0_109, %c17_110, %c0_111] {strides = array<i32: 2, 2, 1>} : memref<18x33x4xf32, #tpu.memory_space<vmem>>, vector<8x8x4xf32>
    %c1_112 = arith.constant 1 : index
    %c15_113 = arith.constant 15 : index
    %c0_114 = arith.constant 0 : index
    %110 = tpu.strided_load %arg8[%c1_112, %c15_113, %c0_114] {strides = array<i32: 2, 2, 1>} : memref<18x33x4xf32, #tpu.memory_space<vmem>>, vector<8x8x4xf32>
    %c1_115 = arith.constant 1 : index
    %c16_116 = arith.constant 16 : index
    %c0_117 = arith.constant 0 : index
    %111 = tpu.strided_load %arg8[%c1_115, %c16_116, %c0_117] {strides = array<i32: 2, 2, 1>} : memref<18x33x4xf32, #tpu.memory_space<vmem>>, vector<8x8x4xf32>
    %c1_118 = arith.constant 1 : index
    %c17_119 = arith.constant 17 : index
    %c0_120 = arith.constant 0 : index
    %112 = tpu.strided_load %arg8[%c1_118, %c17_119, %c0_120] {strides = array<i32: 2, 2, 1>} : memref<18x33x4xf32, #tpu.memory_space<vmem>>, vector<8x8x4xf32>
    %c2 = arith.constant 2 : index
    %c15_121 = arith.constant 15 : index
    %c0_122 = arith.constant 0 : index
    %113 = tpu.strided_load %arg8[%c2, %c15_121, %c0_122] {strides = array<i32: 2, 2, 1>} : memref<18x33x4xf32, #tpu.memory_space<vmem>>, vector<8x8x4xf32>
    %c2_123 = arith.constant 2 : index
    %c16_124 = arith.constant 16 : index
    %c0_125 = arith.constant 0 : index
    %114 = tpu.strided_load %arg8[%c2_123, %c16_124, %c0_125] {strides = array<i32: 2, 2, 1>} : memref<18x33x4xf32, #tpu.memory_space<vmem>>, vector<8x8x4xf32>
    %c2_126 = arith.constant 2 : index
    %c17_127 = arith.constant 17 : index
    %c0_128 = arith.constant 0 : index
    %115 = tpu.strided_load %arg8[%c2_126, %c17_127, %c0_128] {strides = array<i32: 2, 2, 1>} : memref<18x33x4xf32, #tpu.memory_space<vmem>>, vector<8x8x4xf32>
    %116 = tpu.concatenate %107, %108, %109, %110, %111, %112, %113, %114, %115 in 2 : vector<8x8x4xf32>, vector<8x8x4xf32>, vector<8x8x4xf32>, vector<8x8x4xf32>, vector<8x8x4xf32>, vector<8x8x4xf32>, vector<8x8x4xf32>, vector<8x8x4xf32>, vector<8x8x4xf32> -> vector<8x8x36xf32>
    %117 = vector.shape_cast %116 : vector<8x8x36xf32> to vector<64x36xf32>
    %118 = arith.truncf %117 : vector<64x36xf32> to vector<64x36xbf16>
    %c0_129 = arith.constant 0 : index
    %c0_130 = arith.constant 0 : index
    %119 = vector.load %arg4[%c0_129, %c0_130] : memref<4x36xbf16, #tpu.memory_space<vmem>>, vector<4x36xbf16>
    %cst_131 = arith.constant dense<0.000000e+00> : vector<4x64xf32>
    %120 = tpu.matmul %119, %118, %cst_131 {dimension_numbers = #tpu.dot_dimension_numbers<[1], [1], [0], [0], [0, 0, 1, 0], [], []>} : vector<4x36xbf16>, vector<64x36xbf16>, vector<4x64xf32> -> vector<4x64xf32>
    %c0_132 = arith.constant 0 : index
    %c0_133 = arith.constant 0 : index
    %121 = vector.load %arg5[%c0_132, %c0_133] : memref<4x1xf32, #tpu.memory_space<vmem>>, vector<4x1xf32>
    %122 = vector.broadcast %121 : vector<4x1xf32> to vector<4x64xf32>
    %123 = arith.addf %120, %122 : vector<4x64xf32>
    %cst_134 = arith.constant 0.000000e+00 : f32
    %124 = vector.broadcast %cst_134 : f32 to vector<4x64xf32>
    %125 = arith.cmpf oge, %123, %124 : vector<4x64xf32>
    %cst_135 = arith.constant 0.00999999977 : f32
    %126 = vector.broadcast %cst_135 : f32 to vector<4x64xf32>
    %127 = arith.mulf %126, %123 : vector<4x64xf32>
    %128 = arith.select %125, %123, %127 : vector<4x64xi1>, vector<4x64xf32>
    %129 = arith.truncf %128 : vector<4x64xf32> to vector<4x64xbf16>
    %c0_136 = arith.constant 0 : index
    %c0_137 = arith.constant 0 : index
    %c0_138 = arith.constant 0 : index
    %130 = vector.load %arg6[%c0_136, %c0_137, %c0_138] : memref<1x4x64xbf16, #tpu.memory_space<vmem>>, vector<1x4x64xbf16>
    %131 = vector.shape_cast %130 : vector<1x4x64xbf16> to vector<4x64xbf16>
    %132 = vector.shape_cast %129 : vector<4x64xbf16> to vector<1x4x64xbf16>
    tpu.vector_store %arg6[%c0_136, %c0_137, %c0_138], %132 {strides = array<i32>} : memref<1x4x64xbf16, #tpu.memory_space<vmem>>, vector<1x4x64xbf16>,
    return
  }
  func.func @transform_0(%arg0: i32) -> (i32, i32, i32, i32) {
    %c0_i32 = arith.constant 0 : i32
    %c0_i32_0 = arith.constant 0 : i32
    %c0_i32_1 = arith.constant 0 : i32
    %c0_i32_2 = arith.constant 0 : i32
    return %arg0, %c0_i32, %c0_i32_0, %c0_i32_1 : i32, i32, i32, i32
  }
  func.func @transform_1(%arg0: i32) -> (i32, i32) {
    %c0_i32 = arith.constant 0 : i32
    %c0_i32_0 = arith.constant 0 : i32
    %c0_i32_1 = arith.constant 0 : i32
    return %c0_i32, %c0_i32_0 : i32, i32
  }
  func.func @transform_2(%arg0: i32) -> (i32, i32) {
    %c0_i32 = arith.constant 0 : i32
    %c0_i32_0 = arith.constant 0 : i32
    %c0_i32_1 = arith.constant 0 : i32
    return %c0_i32, %c0_i32_0 : i32, i32
  }
  func.func @transform_3(%arg0: i32) -> (i32, i32) {
    %c0_i32 = arith.constant 0 : i32
    %c0_i32_0 = arith.constant 0 : i32
    %c0_i32_1 = arith.constant 0 : i32
    return %c0_i32, %c0_i32_0 : i32, i32
  }
  func.func @transform_4(%arg0: i32) -> (i32, i32) {
    %c0_i32 = arith.constant 0 : i32
    %c0_i32_0 = arith.constant 0 : i32
    %c0_i32_1 = arith.constant 0 : i32
    return %c0_i32, %c0_i32_0 : i32, i32
  }
  func.func @transform_5(%arg0: i32) -> (i32, i32, i32) {
    %c0_i32 = arith.constant 0 : i32
    %c0_i32_0 = arith.constant 0 : i32
    %c0_i32_1 = arith.constant 0 : i32
    return %arg0, %c0_i32, %c0_i32_0 : i32, i32, i32
  }
}

</mosaic_0001>

<llo_original>
// kernel: conv_block.1
$region0: #{conv_block.1}
  #allocation0 [shape = 'u32[]', space=smem, size = 0x4, offset = 0x4, fixed_abs, tag = 'smem constant byte address 0x4 - core index']
  #allocation1 [shape = 'u32[72,128]{1,0:T(1,128)}', space=vmem, size = 0x9000, scoped, tag = 'internal scratch']
  #allocation2 [shape = 'bf16[18,33,4]{2,1,0:T(8,128)(2,1)}', space=vmem, size = 0x2d000, scoped, tag = 'scratch operand']
  #allocation3 [shape = 'f32[18,33,4]{2,1,0:T(8,128)}', space=vmem, size = 0x5a000, scoped, tag = 'scratch operand']
  %s0 = inlined_call_operand.vmem [shape: bf16[2,16,16,4], index: 0, kind: input, shape index: {}]
  %s1 = inlined_call_operand.vmem [shape: bf16[36,4], index: 1, kind: input, shape index: {}]
  %s2 = inlined_call_operand.vmem [shape: f32[1,4], index: 2, kind: input, shape index: {}]
  %s3 = inlined_call_operand.vmem [shape: bf16[4,36], index: 3, kind: input, shape index: {}]
  %s4 = inlined_call_operand.vmem [shape: f32[4,1], index: 4, kind: input, shape index: {}]
  %s5 = inlined_call_operand.vmem [shape: bf16[2,4,64], index: 5, kind: output, shape index: {}]
  %s6 = sld [smem:[#allocation0]]
  $region53: #{conv_block.1} parent=0
    _
  %s8 = ssub.s32 1, %s6
  %s9 = scalar_select 0, %s8, %s6
  loop: start=0, step=1, limit=4
  $region2: #{conv_block.1} parent=0 // loop_pre_header
    _
  $region3: #{conv_block.1} parent=0 // loop_header
    %s11 = sphi 0, %s15
    %p12 = scmp.ge.s32.totalorder %s11, 4
    %s21 = sphi 0, %s23
    %s24 = sphi 0, %s21
    %s25 = sphi 0, %s24
    %s41 = sphi 0, %s25
    %s45 = sphi 0, %s45
    %s47 = sphi 0, %s45
    %s48 = sphi 0, %s47
    %s62 = sphi 0, %s48
    %s66 = sphi 0, %s66
    %s68 = sphi 0, %s66
    %s69 = sphi 0, %s68
    %s83 = sphi 0, %s69
    %s87 = sphi 0, %s87
    %s89 = sphi 0, %s87
    %s90 = sphi 0, %s89
    %s104 = sphi 0, %s90
    %s108 = sphi 0, %s108
    %s110 = sphi 0, %s108
    %s111 = sphi 0, %s110
    %s125 = sphi 0, %s111
    %s131 = sphi 0, %s133
    %s134 = sphi 0, %s131
    %s135 = sphi 0, %s134
    %s151 = sphi 0, %s135
  $region4: #{conv_block.1} parent=0 // loop_header_branch
    %14 = sbr.rel (%p12) target = $region8
  $region5: #{conv_block.1} parent=0 // loop_body
    %s16 = ssub.s32 %s11, 1
    %s17 = ssub.s32 %s11, 2
    %s18 = sadd.s32 %s11, 1
    %s19 = ssub.s32 %s11, %s18
    %p20 = scmp.eq.s32.totalorder %s19, 0
    %s22 = sadd.s32 %s21, 1
    %s23 = scalar_select %p20, %s21, %s22
    %p26 = pneg %p20
    %p27 = scmp.eq.s32.totalorder %s11, 1
    %p28 = por %p26, %p27
    %p29 = scmp.ne.s32.totalorder %s21, %s24
    %p30 = scmp.eq.s32.totalorder %s11, 0
    %p31 = por %p29, %p30
    %p32 = scmp.ne.s32.totalorder %s21, %s24
    %p33 = scmp.eq.s32.totalorder %s16, 1
    %p34 = por %p32, %p33
    %p35 = scmp.ne.s32.totalorder %s24, %s25
    %p36 = scmp.eq.s32.totalorder %s16, 0
    %p37 = por %p35, %p36
    %p38 = scmp.ne.s32.totalorder %s24, %s25
    %p39 = scmp.eq.s32.totalorder %s17, 1
    %p40 = por %p38, %p39
    %p42 = scmp.ne.s32.totalorder %s25, %s41
    %p43 = scmp.eq.s32.totalorder %s17, 0
    %p44 = por %p42, %p43
    %s46 = sadd.s32 %s45, 1
    %p49 = scmp.eq.s32.totalorder %s11, 1
    %p50 = scmp.ne.s32.totalorder %s45, %s47
    %p51 = scmp.eq.s32.totalorder %s11, 0
    %p52 = por %p50, %p51
    %p53 = scmp.ne.s32.totalorder %s45, %s47
    %p54 = scmp.eq.s32.totalorder %s16, 1
    %p55 = por %p53, %p54
    %p56 = scmp.ne.s32.totalorder %s47, %s48
    %p57 = scmp.eq.s32.totalorder %s16, 0
    %p58 = por %p56, %p57
    %p59 = scmp.ne.s32.totalorder %s47, %s48
    %p60 = scmp.eq.s32.totalorder %s17, 1
    %p61 = por %p59, %p60
    %p63 = scmp.ne.s32.totalorder %s48, %s62
    %p64 = scmp.eq.s32.totalorder %s17, 0
    %p65 = por %p63, %p64
    %s67 = sadd.s32 %s66, 1
    %p70 = scmp.eq.s32.totalorder %s11, 1
    %p71 = scmp.ne.s32.totalorder %s66, %s68
    %p72 = scmp.eq.s32.totalorder %s11, 0
    %p73 = por %p71, %p72
    %p74 = scmp.ne.s32.totalorder %s66, %s68
    %p75 = scmp.eq.s32.totalorder %s16, 1
    %p76 = por %p74, %p75
    %p77 = scmp.ne.s32.totalorder %s68, %s69
    %p78 = scmp.eq.s32.totalorder %s16, 0
    %p79 = por %p77, %p78
    %p80 = scmp.ne.s32.totalorder %s68, %s69
    %p81 = scmp.eq.s32.totalorder %s17, 1
    %p82 = por %p80, %p81
    %p84 = scmp.ne.s32.totalorder %s69, %s83
    %p85 = scmp.eq.s32.totalorder %s17, 0
    %p86 = por %p84, %p85
    %s88 = sadd.s32 %s87, 1
    %p91 = scmp.eq.s32.totalorder %s11, 1
    %p92 = scmp.ne.s32.totalorder %s87, %s89
    %p93 = scmp.eq.s32.totalorder %s11, 0
    %p94 = por %p92, %p93
    %p95 = scmp.ne.s32.totalorder %s87, %s89
    %p96 = scmp.eq.s32.totalorder %s16, 1
    %p97 = por %p95, %p96
    %p98 = scmp.ne.s32.totalorder %s89, %s90
    %p99 = scmp.eq.s32.totalorder %s16, 0
    %p100 = por %p98, %p99
    %p101 = scmp.ne.s32.totalorder %s89, %s90
    %p102 = scmp.eq.s32.totalorder %s17, 1
    %p103 = por %p101, %p102
    %p105 = scmp.ne.s32.totalorder %s90, %s104
    %p106 = scmp.eq.s32.totalorder %s17, 0
    %p107 = por %p105, %p106
    %s109 = sadd.s32 %s108, 1
    %p112 = scmp.eq.s32.totalorder %s11, 1
    %p113 = scmp.ne.s32.totalorder %s108, %s110
    %p114 = scmp.eq.s32.totalorder %s11, 0
    %p115 = por %p113, %p114
    %p116 = scmp.ne.s32.totalorder %s108, %s110
    %p117 = scmp.eq.s32.totalorder %s16, 1
    %p118 = por %p116, %p117
    %p119 = scmp.ne.s32.totalorder %s110, %s111
    %p120 = scmp.eq.s32.totalorder %s16, 0
    %p121 = por %p119, %p120
    %p122 = scmp.ne.s32.totalorder %s110, %s111
    %p123 = scmp.eq.s32.totalorder %s17, 1
    %p124 = por %p122, %p123
    %p126 = scmp.ne.s32.totalorder %s111, %s125
    %p127 = scmp.eq.s32.totalorder %s17, 0
    %p128 = por %p126, %p127
    %s129 = ssub.s32 %s11, %s18
    %p130 = scmp.eq.s32.totalorder %s129, 0
    %s132 = sadd.s32 %s131, 1
    %s133 = scalar_select %p130, %s131, %s132
    %p136 = pneg %p130
    %p137 = scmp.eq.s32.totalorder %s11, 1
    %p138 = por %p136, %p137
    %p139 = scmp.ne.s32.totalorder %s131, %s134
    %p140 = scmp.eq.s32.totalorder %s11, 0
    %p141 = por %p139, %p140
    %p142 = scmp.ne.s32.totalorder %s131, %s134
    %p143 = scmp.eq.s32.totalorder %s16, 1
    %p144 = por %p142, %p143
    %p145 = scmp.ne.s32.totalorder %s134, %s135
    %p146 = scmp.eq.s32.totalorder %s16, 0
    %p147 = por %p145, %p146
    %p148 = scmp.ne.s32.totalorder %s134, %s135
    %p149 = scmp.eq.s32.totalorder %s17, 1
    %p150 = por %p148, %p149
    %p152 = scmp.ne.s32.totalorder %s135, %s151
    %p153 = scmp.eq.s32.totalorder %s17, 0
    %p154 = por %p152, %p153
    %p155 = scmp.le.s32.totalorder 1, %s11
    %p156 = scmp.lt.s32.totalorder %s11, 3
    %p157 = pnand %p155, %p156
    %p158 = pneg %p157
    // Predicated region
    $region9: #{conv_block.1} parent=5 // pred_check
      _
    $region10: #{conv_block.1} parent=5 // pred_check_branch
      %160 = sbr.rel (%p157) target = $region12
    $region11: #{conv_block.1} parent=5 // pred_region
      %s161 = ssub.s32 %s11, 1
      // Predicated region
      $region13: #{conv_block.1} parent=11 // pred_check
        %p162 = pneg %p58
      $region14: #{conv_block.1} parent=11 // pred_check_branch
        %164 = sbr.rel (%p162) target = $region16
      $region15: #{conv_block.1} parent=11 // pred_region
        _
      $region16: #{conv_block.1} parent=11 // pred_fallthru
        _
      // Predicated region
      $region17: #{conv_block.1} parent=11 // pred_check
        %p165 = pneg %p79
      $region18: #{conv_block.1} parent=11 // pred_check_branch
        %167 = sbr.rel (%p165) target = $region20
      $region19: #{conv_block.1} parent=11 // pred_region
        _
      $region20: #{conv_block.1} parent=11 // pred_fallthru
        _
      // Predicated region
      $region21: #{conv_block.1} parent=11 // pred_check
        %p168 = pneg %p100
      $region22: #{conv_block.1} parent=11 // pred_check_branch
        %170 = sbr.rel (%p168) target = $region24
      $region23: #{conv_block.1} parent=11 // pred_region
        _
      $region24: #{conv_block.1} parent=11 // pred_fallthru
        _
      // Predicated region
      $region25: #{conv_block.1} parent=11 // pred_check
        %p171 = pneg %p121
      $region26: #{conv_block.1} parent=11 // pred_check_branch
        %173 = sbr.rel (%p171) target = $region28
      $region27: #{conv_block.1} parent=11 // pred_region
        _
      $region28: #{conv_block.1} parent=11 // pred_fallthru
        _
    $region12: #{conv_block.1} parent=5 // pred_fallthru
      _
    %p174 = scmp.lt.s32.totalorder %s11, 2
    // Predicated region
    $region29: #{conv_block.1} parent=5 // pred_check
      %p175 = pneg %p174
    $region30: #{conv_block.1} parent=5 // pred_check_branch
      %177 = sbr.rel (%p175) target = $region32
    $region31: #{conv_block.1} parent=5 // pred_region
      // Predicated region
      $region33: #{conv_block.1} parent=31 // pred_check
        %p178 = pneg %p31
      $region34: #{conv_block.1} parent=31 // pred_check_branch
        %180 = sbr.rel (%p178) target = $region36
      $region35: #{conv_block.1} parent=31 // pred_region
        %p181 = scmp.lt.s32.totalorder %s11, 1
        %s182 = scalar_select %p181, %s11, 1
        %s183 = smul.addr %s182, 32
        %s184 = smul.addr %s183, 4
        %s185 = scalar_lea.vmem %s0, %s184
      $region36: #{conv_block.1} parent=31 // pred_fallthru
        _
    $region32: #{conv_block.1} parent=5 // pred_fallthru
      _
    %p186 = scmp.le.s32.totalorder 1, %s11
    %p187 = scmp.lt.s32.totalorder %s11, 3
    %p188 = pnand %p186, %p187
    %p189 = pneg %p188
    // Predicated region
    $region37: #{conv_block.1} parent=5 // pred_check
      _
    $region38: #{conv_block.1} parent=5 // pred_check_branch
      %191 = sbr.rel (%p188) target = $region40
    $region39: #{conv_block.1} parent=5 // pred_region
      %s192 = ssub.s32 %s11, 1
      %p193 = scmp.lt.s32.totalorder %s16, 1
      %s194 = scalar_select %p193, %s16, 1
      %s195 = smul.addr %s194, 32
      %s196 = smul.addr %s195, 4
      %s197 = scalar_lea.vmem %s0, %s196
      %p198 = pneg %p37
      %p199 = pneg %p34
      %p200 = pneg %p58
      %p201 = pneg %p55
      %p202 = pneg %p79
      %p203 = pneg %p76
      %p204 = pneg %p100
      %p205 = pneg %p97
      %p206 = pneg %p121
      %p207 = pneg %p118
      %p208 = pneg %p147
      %p209 = pneg %p144
      %p210 = scmp.lt.s32.totalorder %s16, 1
      %s211 = scalar_select %p210, %s16, 1
      %s212 = smul.addr %s211, 2
      %s213 = scalar_lea.vmem %s5, %s212
      %p214 = scmp.lt.s32.totalorder %s16, 1
      %s215 = scalar_select %p214, %s16, 1
      %s216 = smul.addr %s215, 32
      %s217 = smul.addr %s216, 4
      %s218 = scalar_lea.vmem %s0, %s217
      %p219 = scmp.lt.s32.totalorder %s16, 1
      %s220 = scalar_select %p219, %s16, 1
      %s221 = smul.addr %s220, 2
      %s222 = scalar_lea.vmem %s5, %s221
      %vm224 = vcmask 27651
      %vm225 = vsmask.f32 7950
      %vm226 = vmand %vm224, %vm225
      %v227 = vld [vmem:[#allocation2 + $0x4] sm:$0x8]
      %v228 = vsel %vm226, 0, %v227
      %229 = vst [vmem:[#allocation2 + $0x4] sm:$0x8] %v228
      %vm230 = vcmask 27648
      %231 = vst.msk [vmem:[#allocation2 + $0x8] sm:$0xf] %vm230, 0
      %232 = vst.msk [vmem:[#allocation2 + $0xc] sm:$0xf] %vm230, 0
      %vm233 = vcmask 24576
      %vm234 = vsmask.f32 256
      %vm235 = vmand %vm233, %vm234
      %v236 = vld [vmem:[#allocation2 + $0x10] sm:$0x1]
      %v237 = vsel %vm235, 0, %v236
      %238 = vst [vmem:[#allocation2 + $0x10] sm:$0x1] %v237
      %s239 = scalar_lea.vmem [#allocation2], 340
      %v240 = vld [vmem:[%s239 + $0x4] sm:$0x8]
      %v241 = vsel %vm226, 0, %v240
      %242 = vst [vmem:[%s239 + $0x4] sm:$0x8] %v241
      %243 = vst.msk [vmem:[%s239 + $0x8] sm:$0xf] %vm230, 0
      %244 = vst.msk [vmem:[%s239 + $0xc] sm:$0xf] %vm230, 0
      %v245 = vld [vmem:[%s239 + $0x10] sm:$0x1]
      %v246 = vsel %vm235, 0, %v245
      %247 = vst [vmem:[%s239 + $0x10] sm:$0x1] %v246
      %s248 = scalar_lea.vmem [#allocation2], 20
      %v249 = vld [vmem:[%s248 + $0x4] sm:$0x8]
      %v250 = vsel %vm226, 0, %v249
      %251 = vst [vmem:[%s248 + $0x4] sm:$0x8] %v250
      %v252 = vld [vmem:[%s248 + $0x18] sm:$0x8]
      %v253 = vsel %vm226, 0, %v252
      %254 = vst [vmem:[%s248 + $0x18] sm:$0x8] %v253
      %v255 = vld [vmem:[%s248 + $0x2c] sm:$0x8]
      %v256 = vsel %vm226, 0, %v255
      %257 = vst [vmem:[%s248 + $0x2c] sm:$0x8] %v256
      %v258 = vld [vmem:[%s248 + $0x40] sm:$0x8]
      %v259 = vsel %vm226, 0, %v258
      %260 = vst [vmem:[%s248 + $0x40] sm:$0x8] %v259
      %v261 = vld [vmem:[%s248 + $0x54] sm:$0x8]
      %v262 = vsel %vm226, 0, %v261
      %263 = vst [vmem:[%s248 + $0x54] sm:$0x8] %v262
      %v264 = vld [vmem:[%s248 + $0x68] sm:$0x8]
      %v265 = vsel %vm226, 0, %v264
      %266 = vst [vmem:[%s248 + $0x68] sm:$0x8] %v265
      %v267 = vld [vmem:[%s248 + $0x7c] sm:$0x8]
      %v268 = vsel %vm226, 0, %v267
      %269 = vst [vmem:[%s248 + $0x7c] sm:$0x8] %v268
      %v270 = vld [vmem:[%s248 + $0x90] sm:$0x8]
      %v271 = vsel %vm226, 0, %v270
      %272 = vst [vmem:[%s248 + $0x90] sm:$0x8] %v271
      %v273 = vld [vmem:[%s248 + $0xa4] sm:$0x8]
      %v274 = vsel %vm226, 0, %v273
      %275 = vst [vmem:[%s248 + $0xa4] sm:$0x8] %v274
      %v276 = vld [vmem:[%s248 + $0xb8] sm:$0x8]
      %v277 = vsel %vm226, 0, %v276
      %278 = vst [vmem:[%s248 + $0xb8] sm:$0x8] %v277
      %v279 = vld [vmem:[%s248 + $0xcc] sm:$0x8]
      %v280 = vsel %vm226, 0, %v279
      %281 = vst [vmem:[%s248 + $0xcc] sm:$0x8] %v280
      %v282 = vld [vmem:[%s248 + $0xe0] sm:$0x8]
      %v283 = vsel %vm226, 0, %v282
      %284 = vst [vmem:[%s248 + $0xe0] sm:$0x8] %v283
      %v285 = vld [vmem:[%s248 + $0xf4] sm:$0x8]
      %v286 = vsel %vm226, 0, %v285
      %287 = vst [vmem:[%s248 + $0xf4] sm:$0x8] %v286
      %v288 = vld [vmem:[%s248 + $0x108] sm:$0x8]
      %v289 = vsel %vm226, 0, %v288
      %290 = vst [vmem:[%s248 + $0x108] sm:$0x8] %v289
      %v291 = vld [vmem:[%s248 + $0x11c] sm:$0x8]
      %v292 = vsel %vm226, 0, %v291
      %293 = vst [vmem:[%s248 + $0x11c] sm:$0x8] %v292
      %v294 = vld [vmem:[%s248 + $0x130] sm:$0x8]
      %v295 = vsel %vm226, 0, %v294
      %296 = vst [vmem:[%s248 + $0x130] sm:$0x8] %v295
      %v297 = vld [vmem:[%s248 + $0x10] sm:$0x1]
      %v298 = vsel %vm235, 0, %v297
      %299 = vst [vmem:[%s248 + $0x10] sm:$0x1] %v298
      %v300 = vld [vmem:[%s248 + $0x24] sm:$0x1]
      %v301 = vsel %vm235, 0, %v300
      %302 = vst [vmem:[%s248 + $0x24] sm:$0x1] %v301
      %v303 = vld [vmem:[%s248 + $0x38] sm:$0x1]
      %v304 = vsel %vm235, 0, %v303
      %305 = vst [vmem:[%s248 + $0x38] sm:$0x1] %v304
      %v306 = vld [vmem:[%s248 + $0x4c] sm:$0x1]
      %v307 = vsel %vm235, 0, %v306
      %308 = vst [vmem:[%s248 + $0x4c] sm:$0x1] %v307
      %v309 = vld [vmem:[%s248 + $0x60] sm:$0x1]
      %v310 = vsel %vm235, 0, %v309
      %311 = vst [vmem:[%s248 + $0x60] sm:$0x1] %v310
      %v312 = vld [vmem:[%s248 + $0x74] sm:$0x1]
      %v313 = vsel %vm235, 0, %v312
      %314 = vst [vmem:[%s248 + $0x74] sm:$0x1] %v313
      %v315 = vld [vmem:[%s248 + $0x88] sm:$0x1]
      %v316 = vsel %vm235, 0, %v315
      %317 = vst [vmem:[%s248 + $0x88] sm:$0x1] %v316
      %v318 = vld [vmem:[%s248 + $0x9c] sm:$0x1]
      %v319 = vsel %vm235, 0, %v318
      %320 = vst [vmem:[%s248 + $0x9c] sm:$0x1] %v319
      %v321 = vld [vmem:[%s248 + $0xb0] sm:$0x1]
      %v322 = vsel %vm235, 0, %v321
      %323 = vst [vmem:[%s248 + $0xb0] sm:$0x1] %v322
      %v324 = vld [vmem:[%s248 + $0xc4] sm:$0x1]
      %v325 = vsel %vm235, 0, %v324
      %326 = vst [vmem:[%s248 + $0xc4] sm:$0x1] %v325
      %v327 = vld [vmem:[%s248 + $0xd8] sm:$0x1]
      %v328 = vsel %vm235, 0, %v327
      %329 = vst [vmem:[%s248 + $0xd8] sm:$0x1] %v328
      %v330 = vld [vmem:[%s248 + $0xec] sm:$0x1]
      %v331 = vsel %vm235, 0, %v330
      %332 = vst [vmem:[%s248 + $0xec] sm:$0x1] %v331
      %v333 = vld [vmem:[%s248 + $0x100] sm:$0x1]
      %v334 = vsel %vm235, 0, %v333
      %335 = vst [vmem:[%s248 + $0x100] sm:$0x1] %v334
      %v336 = vld [vmem:[%s248 + $0x114] sm:$0x1]
      %v337 = vsel %vm235, 0, %v336
      %338 = vst [vmem:[%s248 + $0x114] sm:$0x1] %v337
      %v339 = vld [vmem:[%s248 + $0x128] sm:$0x1]
      %v340 = vsel %vm235, 0, %v339
      %341 = vst [vmem:[%s248 + $0x128] sm:$0x1] %v340
      %v342 = vld [vmem:[%s248 + $0x13c] sm:$0x1]
      %v343 = vsel %vm235, 0, %v342
      %344 = vst [vmem:[%s248 + $0x13c] sm:$0x1] %v343
      %vm345 = vcmask 31744
      %346 = vst.msk [vmem:[#allocation3 + $0xf] sm:$0xff] %vm345, 0.0
      %347 = vst.msk [vmem:[#allocation3 + $0x17] sm:$0xff] %vm345, 0.0
      %vm348 = vcmask 25600
      %349 = vst.msk [vmem:[#allocation3 + $0x1f] sm:$0x3] %vm348, 0.0
      %s350 = scalar_lea.vmem [#allocation3], 680
      %351 = vst.msk [vmem:[%s350 + $0xf] sm:$0xff] %vm345, 0.0
      %352 = vst.msk [vmem:[%s350 + $0x17] sm:$0xff] %vm345, 0.0
      %353 = vst.msk [vmem:[%s350 + $0x1f] sm:$0x3] %vm348, 0.0
      %s354 = scalar_lea.vmem [#allocation3], 40
      %vm355 = vcmask 24576
      %356 = vst.msk [vmem:[%s354 + $0xf] sm:$0x1] %vm355, 0.0
      %357 = vst.msk [vmem:[%s354 + $0x37] sm:$0x1] %vm355, 0.0
      %358 = vst.msk [vmem:[%s354 + $0x5f] sm:$0x1] %vm355, 0.0
      %359 = vst.msk [vmem:[%s354 + $0x87] sm:$0x1] %vm355, 0.0
      %360 = vst.msk [vmem:[%s354 + $0xaf] sm:$0x1] %vm355, 0.0
      %361 = vst.msk [vmem:[%s354 + $0xd7] sm:$0x1] %vm355, 0.0
      %362 = vst.msk [vmem:[%s354 + $0xff] sm:$0x1] %vm355, 0.0
      %363 = vst.msk [vmem:[%s354 + $0x127] sm:$0x1] %vm355, 0.0
      %364 = vst.msk [vmem:[%s354 + $0x14f] sm:$0x1] %vm355, 0.0
      %365 = vst.msk [vmem:[%s354 + $0x177] sm:$0x1] %vm355, 0.0
      %366 = vst.msk [vmem:[%s354 + $0x19f] sm:$0x1] %vm355, 0.0
      %367 = vst.msk [vmem:[%s354 + $0x1c7] sm:$0x1] %vm355, 0.0
      %368 = vst.msk [vmem:[%s354 + $0x1ef] sm:$0x1] %vm355, 0.0
      %369 = vst.msk [vmem:[%s354 + $0x217] sm:$0x1] %vm355, 0.0
      %370 = vst.msk [vmem:[%s354 + $0x23f] sm:$0x1] %vm355, 0.0
      %371 = vst.msk [vmem:[%s354 + $0x267] sm:$0x1] %vm355, 0.0
      %372 = vst.msk [vmem:[%s354 + $0x20] sm:$0x1] %vm355, 0.0
      %373 = vst.msk [vmem:[%s354 + $0x48] sm:$0x1] %vm355, 0.0
      %374 = vst.msk [vmem:[%s354 + $0x70] sm:$0x1] %vm355, 0.0
      %375 = vst.msk [vmem:[%s354 + $0x98] sm:$0x1] %vm355, 0.0
      %376 = vst.msk [vmem:[%s354 + $0xc0] sm:$0x1] %vm355, 0.0
      %377 = vst.msk [vmem:[%s354 + $0xe8] sm:$0x1] %vm355, 0.0
      %378 = vst.msk [vmem:[%s354 + $0x110] sm:$0x1] %vm355, 0.0
      %379 = vst.msk [vmem:[%s354 + $0x138] sm:$0x1] %vm355, 0.0
      %380 = vst.msk [vmem:[%s354 + $0x160] sm:$0x1] %vm355, 0.0
      %381 = vst.msk [vmem:[%s354 + $0x188] sm:$0x1] %vm355, 0.0
      %382 = vst.msk [vmem:[%s354 + $0x1b0] sm:$0x1] %vm355, 0.0
      %383 = vst.msk [vmem:[%s354 + $0x1d8] sm:$0x1] %vm355, 0.0
      %384 = vst.msk [vmem:[%s354 + $0x200] sm:$0x1] %vm355, 0.0
      %385 = vst.msk [vmem:[%s354 + $0x228] sm:$0x1] %vm355, 0.0
      %386 = vst.msk [vmem:[%s354 + $0x250] sm:$0x1] %vm355, 0.0
      %387 = vst.msk [vmem:[%s354 + $0x278] sm:$0x1] %vm355, 0.0
      %v388 = vld [vmem:[%s218] sm:$0xf]
      %v389 = vld [vmem:[%s218 + $0x4] sm:$0xf]
      %v390 = vld [vmem:[%s218 + $0x8] sm:$0xf]
      %v391 = vld [vmem:[%s218 + $0xc] sm:$0xf]
      %v392 = vld [vmem:[%s218 + $0x10] sm:$0xf]
      %v393 = vld [vmem:[%s218 + $0x14] sm:$0xf]
      %v394 = vld [vmem:[%s218 + $0x18] sm:$0xf]
      %v395 = vld [vmem:[%s218 + $0x1c] sm:$0xf]
      %v396 = vld [vmem:[%s218 + $0x20] sm:$0xf]
      %v397 = vld [vmem:[%s218 + $0x24] sm:$0xf]
      %v398 = vld [vmem:[%s218 + $0x28] sm:$0xf]
      %v399 = vld [vmem:[%s218 + $0x2c] sm:$0xf]
      %v400 = vld [vmem:[%s218 + $0x30] sm:$0xf]
      %v401 = vld [vmem:[%s218 + $0x34] sm:$0xf]
      %v402 = vld [vmem:[%s218 + $0x38] sm:$0xf]
      %v403 = vld [vmem:[%s218 + $0x3c] sm:$0xf]
      %v404 = vld [vmem:[%s218 + $0x40] sm:$0xf]
      %v405 = vld [vmem:[%s218 + $0x44] sm:$0xf]
      %v406 = vld [vmem:[%s218 + $0x48] sm:$0xf]
      %v407 = vld [vmem:[%s218 + $0x4c] sm:$0xf]
      %v408 = vld [vmem:[%s218 + $0x50] sm:$0xf]
      %v409 = vld [vmem:[%s218 + $0x54] sm:$0xf]
      %v410 = vld [vmem:[%s218 + $0x58] sm:$0xf]
      %v411 = vld [vmem:[%s218 + $0x5c] sm:$0xf]
      %v412 = vld [vmem:[%s218 + $0x60] sm:$0xf]
      %v413 = vld [vmem:[%s218 + $0x64] sm:$0xf]
      %v414 = vld [vmem:[%s218 + $0x68] sm:$0xf]
      %v415 = vld [vmem:[%s218 + $0x6c] sm:$0xf]
      %v416 = vld [vmem:[%s218 + $0x70] sm:$0xf]
      %v417 = vld [vmem:[%s218 + $0x74] sm:$0xf]
      %v418 = vld [vmem:[%s218 + $0x78] sm:$0xf]
      %v419 = vld [vmem:[%s218 + $0x7c] sm:$0xf]
      %420 = vst.msk [vmem:[%s248 + $0x8] sm:$0xf] %vm230, %v388
      %421 = vst.msk [vmem:[%s248 + $0xc] sm:$0xf] %vm230, %v389
      %422 = vst.msk [vmem:[%s248 + $0x1c] sm:$0xf] %vm230, %v390
      %423 = vst.msk [vmem:[%s248 + $0x20] sm:$0xf] %vm230, %v391
      %424 = vst.msk [vmem:[%s248 + $0x30] sm:$0xf] %vm230, %v392
      %425 = vst.msk [vmem:[%s248 + $0x34] sm:$0xf] %vm230, %v393
      %426 = vst.msk [vmem:[%s248 + $0x44] sm:$0xf] %vm230, %v394
      %427 = vst.msk [vmem:[%s248 + $0x48] sm:$0xf] %vm230, %v395
      %428 = vst.msk [vmem:[%s248 + $0x58] sm:$0xf] %vm230, %v396
      %429 = vst.msk [vmem:[%s248 + $0x5c] sm:$0xf] %vm230, %v397
      %430 = vst.msk [vmem:[%s248 + $0x6c] sm:$0xf] %vm230, %v398
      %431 = vst.msk [vmem:[%s248 + $0x70] sm:$0xf] %vm230, %v399
      %432 = vst.msk [vmem:[%s248 + $0x80] sm:$0xf] %vm230, %v400
      %433 = vst.msk [vmem:[%s248 + $0x84] sm:$0xf] %vm230, %v401
      %434 = vst.msk [vmem:[%s248 + $0x94] sm:$0xf] %vm230, %v402
      %435 = vst.msk [vmem:[%s248 + $0x98] sm:$0xf] %vm230, %v403
      %436 = vst.msk [vmem:[%s248 + $0xa8] sm:$0xf] %vm230, %v404
      %437 = vst.msk [vmem:[%s248 + $0xac] sm:$0xf] %vm230, %v405
      %438 = vst.msk [vmem:[%s248 + $0xbc] sm:$0xf] %vm230, %v406
      %439 = vst.msk [vmem:[%s248 + $0xc0] sm:$0xf] %vm230, %v407
      %440 = vst.msk [vmem:[%s248 + $0xd0] sm:$0xf] %vm230, %v408
      %441 = vst.msk [vmem:[%s248 + $0xd4] sm:$0xf] %vm230, %v409
      %442 = vst.msk [vmem:[%s248 + $0xe4] sm:$0xf] %vm230, %v410
      %443 = vst.msk [vmem:[%s248 + $0xe8] sm:$0xf] %vm230, %v411
      %444 = vst.msk [vmem:[%s248 + $0xf8] sm:$0xf] %vm230, %v412
      %445 = vst.msk [vmem:[%s248 + $0xfc] sm:$0xf] %vm230, %v413
      %446 = vst.msk [vmem:[%s248 + $0x10c] sm:$0xf] %vm230, %v414
      %447 = vst.msk [vmem:[%s248 + $0x110] sm:$0xf] %vm230, %v415
      %448 = vst.msk [vmem:[%s248 + $0x120] sm:$0xf] %vm230, %v416
      %449 = vst.msk [vmem:[%s248 + $0x124] sm:$0xf] %vm230, %v417
      %450 = vst.msk [vmem:[%s248 + $0x134] sm:$0xf] %vm230, %v418
      %451 = vst.msk [vmem:[%s248 + $0x138] sm:$0xf] %vm230, %v419
      %v452 = vld [vmem:[%s1] sm:$0xf]
      %v453 = vld [vmem:[%s1 + $0x4] sm:$0xf]
      %v454 = vld [vmem:[%s1 + $0x8] sm:$0xf]
      %v455 = vld [vmem:[%s1 + $0xc] sm:$0xf]
      %v456 = vld [vmem:[%s1 + $0x10] sm:$0x3]
      %v457 = vld [vmem:[%s2] sm:$0x1]
      %v459 = vperm.slane %v457, 0
      %s461 = smul.u32 0, 5
      %s462 = smul.addr %s461, 4
      %s463 = scalar_lea.vmem [#allocation2], %s462
      %v464 = vld [vmem:[%s463 + $0x4] sm:$0x8]
      %v465 = vld [vmem:[%s463 + $0x8] sm:$0xf]
      %v466 = vld [vmem:[%s463 + $0xc] sm:$0xf]
      %v467 = vld [vmem:[%s463 + $0x18] sm:$0x8]
      %v468 = vld [vmem:[%s463 + $0x1c] sm:$0xf]
      %v469 = vld [vmem:[%s463 + $0x20] sm:$0xf]
      %v470 = vld [vmem:[%s463 + $0x2c] sm:$0x8]
      %v471 = vld [vmem:[%s463 + $0x30] sm:$0xf]
      %v472 = vld [vmem:[%s463 + $0x34] sm:$0xf]
      %v473 = vld [vmem:[%s463 + $0x40] sm:$0x8]
      %v474 = vld [vmem:[%s463 + $0x44] sm:$0xf]
      %v475 = vld [vmem:[%s463 + $0x48] sm:$0xf]
      %v476 = vld [vmem:[%s463 + $0x54] sm:$0x8]
      %v477 = vld [vmem:[%s463 + $0x58] sm:$0xf]
      %v478 = vld [vmem:[%s463 + $0x5c] sm:$0xf]
      %v479 = vld [vmem:[%s463 + $0x68] sm:$0x8]
      %v480 = vld [vmem:[%s463 + $0x6c] sm:$0xf]
      %v481 = vld [vmem:[%s463 + $0x70] sm:$0xf]
      %v482 = vld [vmem:[%s463 + $0x7c] sm:$0x8]
      %v483 = vld [vmem:[%s463 + $0x80] sm:$0xf]
      %v484 = vld [vmem:[%s463 + $0x84] sm:$0xf]
      %v485 = vld [vmem:[%s463 + $0x90] sm:$0x8]
      %v486 = vld [vmem:[%s463 + $0x94] sm:$0xf]
      %v487 = vld [vmem:[%s463 + $0x98] sm:$0xf]
      %v488 = vld [vmem:[%s463 + $0x10] sm:$0x1]
      %v489 = vld [vmem:[%s463 + $0x24] sm:$0x1]
      %v490 = vld [vmem:[%s463 + $0x38] sm:$0x1]
      %v491 = vld [vmem:[%s463 + $0x4c] sm:$0x1]
      %v492 = vld [vmem:[%s463 + $0x60] sm:$0x1]
      %v493 = vld [vmem:[%s463 + $0x74] sm:$0x1]
      %v494 = vld [vmem:[%s463 + $0x88] sm:$0x1]
      %v495 = vld [vmem:[%s463 + $0x9c] sm:$0x1]
      %s496 = sadd.s32 0, 1
      %s497 = smul.u32 %s496, 5
      %s498 = smul.addr %s497, 4
      %s499 = scalar_lea.vmem [#allocation2], %s498
      %v500 = vld [vmem:[%s499 + $0x4] sm:$0x8]
      %v501 = vld [vmem:[%s499 + $0x8] sm:$0xf]
      %v502 = vld [vmem:[%s499 + $0xc] sm:$0xf]
      %v503 = vld [vmem:[%s499 + $0x18] sm:$0x8]
      %v504 = vld [vmem:[%s499 + $0x1c] sm:$0xf]
      %v505 = vld [vmem:[%s499 + $0x20] sm:$0xf]
      %v506 = vld [vmem:[%s499 + $0x2c] sm:$0x8]
      %v507 = vld [vmem:[%s499 + $0x30] sm:$0xf]
      %v508 = vld [vmem:[%s499 + $0x34] sm:$0xf]
      %v509 = vld [vmem:[%s499 + $0x40] sm:$0x8]
      %v510 = vld [vmem:[%s499 + $0x44] sm:$0xf]
      %v511 = vld [vmem:[%s499 + $0x48] sm:$0xf]
      %v512 = vld [vmem:[%s499 + $0x54] sm:$0x8]
      %v513 = vld [vmem:[%s499 + $0x58] sm:$0xf]
      %v514 = vld [vmem:[%s499 + $0x5c] sm:$0xf]
      %v515 = vld [vmem:[%s499 + $0x68] sm:$0x8]
      %v516 = vld [vmem:[%s499 + $0x6c] sm:$0xf]
      %v517 = vld [vmem:[%s499 + $0x70] sm:$0xf]
      %v518 = vld [vmem:[%s499 + $0x7c] sm:$0x8]
      %v519 = vld [vmem:[%s499 + $0x80] sm:$0xf]
      %v520 = vld [vmem:[%s499 + $0x84] sm:$0xf]
      %v521 = vld [vmem:[%s499 + $0x90] sm:$0x8]
      %v522 = vld [vmem:[%s499 + $0x94] sm:$0xf]
      %v523 = vld [vmem:[%s499 + $0x98] sm:$0xf]
      %v524 = vld [vmem:[%s499 + $0x10] sm:$0x1]
      %v525 = vld [vmem:[%s499 + $0x24] sm:$0x1]
      %v526 = vld [vmem:[%s499 + $0x38] sm:$0x1]
      %v527 = vld [vmem:[%s499 + $0x4c] sm:$0x1]
      %v528 = vld [vmem:[%s499 + $0x60] sm:$0x1]
      %v529 = vld [vmem:[%s499 + $0x74] sm:$0x1]
      %v530 = vld [vmem:[%s499 + $0x88] sm:$0x1]
      %v531 = vld [vmem:[%s499 + $0x9c] sm:$0x1]
      %s532 = sadd.s32 0, 2
      %s533 = smul.u32 %s532, 5
      %s534 = smul.addr %s533, 4
      %s535 = scalar_lea.vmem [#allocation2], %s534
      %v536 = vld [vmem:[%s535 + $0x4] sm:$0x8]
      %v537 = vld [vmem:[%s535 + $0x8] sm:$0xf]
      %v538 = vld [vmem:[%s535 + $0xc] sm:$0xf]
      %v539 = vld [vmem:[%s535 + $0x18] sm:$0x8]
      %v540 = vld [vmem:[%s535 + $0x1c] sm:$0xf]
      %v541 = vld [vmem:[%s535 + $0x20] sm:$0xf]
      %v542 = vld [vmem:[%s535 + $0x2c] sm:$0x8]
      %v543 = vld [vmem:[%s535 + $0x30] sm:$0xf]
      %v544 = vld [vmem:[%s535 + $0x34] sm:$0xf]
      %v545 = vld [vmem:[%s535 + $0x40] sm:$0x8]
      %v546 = vld [vmem:[%s535 + $0x44] sm:$0xf]
      %v547 = vld [vmem:[%s535 + $0x48] sm:$0xf]
      %v548 = vld [vmem:[%s535 + $0x54] sm:$0x8]
      %v549 = vld [vmem:[%s535 + $0x58] sm:$0xf]
      %v550 = vld [vmem:[%s535 + $0x5c] sm:$0xf]
      %v551 = vld [vmem:[%s535 + $0x68] sm:$0x8]
      %v552 = vld [vmem:[%s535 + $0x6c] sm:$0xf]
      %v553 = vld [vmem:[%s535 + $0x70] sm:$0xf]
      %v554 = vld [vmem:[%s535 + $0x7c] sm:$0x8]
      %v555 = vld [vmem:[%s535 + $0x80] sm:$0xf]
      %v556 = vld [vmem:[%s535 + $0x84] sm:$0xf]
      %v557 = vld [vmem:[%s535 + $0x90] sm:$0x8]
      %v558 = vld [vmem:[%s535 + $0x94] sm:$0xf]
      %v559 = vld [vmem:[%s535 + $0x98] sm:$0xf]
      %v560 = vld [vmem:[%s535 + $0x10] sm:$0x1]
      %v561 = vld [vmem:[%s535 + $0x24] sm:$0x1]
      %v562 = vld [vmem:[%s535 + $0x38] sm:$0x1]
      %v563 = vld [vmem:[%s535 + $0x4c] sm:$0x1]
      %v564 = vld [vmem:[%s535 + $0x60] sm:$0x1]
      %v565 = vld [vmem:[%s535 + $0x74] sm:$0x1]
      %v566 = vld [vmem:[%s535 + $0x88] sm:$0x1]
      %v567 = vld [vmem:[%s535 + $0x9c] sm:$0x1]
      %v592 = vunpack.c.l.b16 %v464
      %v593 = vunpack.c.l.b16 %v465
      %v594 = vunpack.c.l.b16 %v466
      %v595 = vunpack.c.l.b16 %v467
      %v596 = vunpack.c.l.b16 %v468
      %v597 = vunpack.c.l.b16 %v469
      %v598 = vunpack.c.l.b16 %v470
      %v599 = vunpack.c.l.b16 %v471
      %v600 = vunpack.c.l.b16 %v472
      %v601 = vunpack.c.l.b16 %v473
      %v602 = vunpack.c.l.b16 %v474
      %v603 = vunpack.c.l.b16 %v475
      %v604 = vunpack.c.l.b16 %v476
      %v605 = vunpack.c.l.b16 %v477
      %v606 = vunpack.c.l.b16 %v478
      %v607 = vunpack.c.l.b16 %v479
      %v608 = vunpack.c.l.b16 %v480
      %v609 = vunpack.c.l.b16 %v481
      %v610 = vunpack.c.l.b16 %v482
      %v611 = vunpack.c.l.b16 %v483
      %v612 = vunpack.c.l.b16 %v484
      %v613 = vunpack.c.l.b16 %v485
      %v614 = vunpack.c.l.b16 %v486
      %v615 = vunpack.c.l.b16 %v487
      %v616 = vpack.c.b16 %v593, %v592
      %v617 = vpack.c.b16 %v594, %v594
      %v618 = vpack.c.b16 %v596, %v595
      %v619 = vpack.c.b16 %v597, %v597
      %v620 = vpack.c.b16 %v599, %v598
      %v621 = vpack.c.b16 %v600, %v600
      %v622 = vpack.c.b16 %v602, %v601
      %v623 = vpack.c.b16 %v603, %v603
      %v624 = vpack.c.b16 %v605, %v604
      %v625 = vpack.c.b16 %v606, %v606
      %v626 = vpack.c.b16 %v608, %v607
      %v627 = vpack.c.b16 %v609, %v609
      %v628 = vpack.c.b16 %v611, %v610
      %v629 = vpack.c.b16 %v612, %v612
      %v630 = vpack.c.b16 %v614, %v613
      %v631 = vpack.c.b16 %v615, %v615
      %v632 = vpack.c.b16 %v594, %v593
      %v633 = vpack.c.b16 %v597, %v596
      %v634 = vpack.c.b16 %v600, %v599
      %v635 = vpack.c.b16 %v603, %v602
      %v636 = vpack.c.b16 %v606, %v605
      %v637 = vpack.c.b16 %v609, %v608
      %v638 = vpack.c.b16 %v612, %v611
      %v639 = vpack.c.b16 %v615, %v614
      %v641 = vshrl.u32 %v632, 16
      %v643 = vrot.slane %v641, 4
      %v644 = vshll.u32 %v632, 16
      %v646 = vrot.slane %v644, 5
      %v647 = vor.u32 %v643, %v646
      %v649 = vshrl.u32 %v633, 16
      %v651 = vrot.slane %v649, 4
      %v652 = vshll.u32 %v633, 16
      %v654 = vrot.slane %v652, 5
      %v655 = vor.u32 %v651, %v654
      %v657 = vshrl.u32 %v634, 16
      %v659 = vrot.slane %v657, 4
      %v660 = vshll.u32 %v634, 16
      %v662 = vrot.slane %v660, 5
      %v663 = vor.u32 %v659, %v662
      %v665 = vshrl.u32 %v635, 16
      %v667 = vrot.slane %v665, 4
      %v668 = vshll.u32 %v635, 16
      %v670 = vrot.slane %v668, 5
      %v671 = vor.u32 %v667, %v670
      %v673 = vshrl.u32 %v636, 16
      %v675 = vrot.slane %v673, 4
      %v676 = vshll.u32 %v636, 16
      %v678 = vrot.slane %v676, 5
      %v679 = vor.u32 %v675, %v678
      %v681 = vshrl.u32 %v637, 16
      %v683 = vrot.slane %v681, 4
      %v684 = vshll.u32 %v637, 16
      %v686 = vrot.slane %v684, 5
      %v687 = vor.u32 %v683, %v686
      %v689 = vshrl.u32 %v638, 16
      %v691 = vrot.slane %v689, 4
      %v692 = vshll.u32 %v638, 16
      %v694 = vrot.slane %v692, 5
      %v695 = vor.u32 %v691, %v694
      %v697 = vshrl.u32 %v639, 16
      %v699 = vrot.slane %v697, 4
      %v700 = vshll.u32 %v639, 16
      %v702 = vrot.slane %v700, 5
      %v703 = vor.u32 %v699, %v702
      %704 = vrot.lane.b32.xlu0 %v647, 4
      %v705 = vpop.permute.xlu0 %704
      %706 = vrot.lane.b32.xlu0 %v655, 4
      %v707 = vpop.permute.xlu0 %706
      %708 = vrot.lane.b32.xlu0 %v663, 4
      %v709 = vpop.permute.xlu0 %708
      %710 = vrot.lane.b32.xlu0 %v671, 4
      %v711 = vpop.permute.xlu0 %710
      %712 = vrot.lane.b32.xlu0 %v679, 4
      %v713 = vpop.permute.xlu0 %712
      %714 = vrot.lane.b32.xlu0 %v687, 4
      %v715 = vpop.permute.xlu0 %714
      %716 = vrot.lane.b32.xlu0 %v695, 4
      %v717 = vpop.permute.xlu0 %716
      %718 = vrot.lane.b32.xlu0 %v703, 4
      %v719 = vpop.permute.xlu0 %718
      %v728 = vunpack.c.l.b16 %v488
      %v729 = vunpack.c.l.b16 %v489
      %v730 = vunpack.c.l.b16 %v490
      %v731 = vunpack.c.l.b16 %v491
      %v732 = vunpack.c.l.b16 %v492
      %v733 = vunpack.c.l.b16 %v493
      %v734 = vunpack.c.l.b16 %v494
      %v735 = vunpack.c.l.b16 %v495
      %v736 = vpack.c.b16 %v728, %v728
      %v737 = vpack.c.b16 %v729, %v729
      %v738 = vpack.c.b16 %v730, %v730
      %v739 = vpack.c.b16 %v731, %v731
      %v740 = vpack.c.b16 %v732, %v732
      %v741 = vpack.c.b16 %v733, %v733
      %v742 = vpack.c.b16 %v734, %v734
      %v743 = vpack.c.b16 %v735, %v735
      %vm744 = vcmask 1042432
      %v745 = vrot.slane %v632, 5
      %v746 = vrot.slane %v736, 5
      %v747 = vsel %vm744, %v745, %v746
      %v748 = vrot.slane %v633, 5
      %v749 = vrot.slane %v737, 5
      %v750 = vsel %vm744, %v748, %v749
      %v751 = vrot.slane %v634, 5
      %v752 = vrot.slane %v738, 5
      %v753 = vsel %vm744, %v751, %v752
      %v754 = vrot.slane %v635, 5
      %v755 = vrot.slane %v739, 5
      %v756 = vsel %vm744, %v754, %v755
      %v757 = vrot.slane %v636, 5
      %v758 = vrot.slane %v740, 5
      %v759 = vsel %vm744, %v757, %v758
      %v760 = vrot.slane %v637, 5
      %v761 = vrot.slane %v741, 5
      %v762 = vsel %vm744, %v760, %v761
      %v763 = vrot.slane %v638, 5
      %v764 = vrot.slane %v742, 5
      %v765 = vsel %vm744, %v763, %v764
      %v766 = vrot.slane %v639, 5
      %v767 = vrot.slane %v743, 5
      %v768 = vsel %vm744, %v766, %v767
      %769 = vrot.lane.b32.xlu0 %v745, 8
      %v770 = vpop.permute.xlu0 %769
      %771 = vrot.lane.b32.xlu0 %v747, 8
      %v772 = vpop.permute.xlu0 %771
      %773 = vrot.lane.b32.xlu0 %v748, 8
      %v774 = vpop.permute.xlu0 %773
      %775 = vrot.lane.b32.xlu0 %v750, 8
      %v776 = vpop.permute.xlu0 %775
      %777 = vrot.lane.b32.xlu0 %v751, 8
      %v778 = vpop.permute.xlu0 %777
      %779 = vrot.lane.b32.xlu0 %v753, 8
      %v780 = vpop.permute.xlu0 %779
      %781 = vrot.lane.b32.xlu0 %v754, 8
      %v782 = vpop.permute.xlu0 %781
      %783 = vrot.lane.b32.xlu0 %v756, 8
      %v784 = vpop.permute.xlu0 %783
      %785 = vrot.lane.b32.xlu0 %v757, 8
      %v786 = vpop.permute.xlu0 %785
      %787 = vrot.lane.b32.xlu0 %v759, 8
      %v788 = vpop.permute.xlu0 %787
      %789 = vrot.lane.b32.xlu0 %v760, 8
      %v790 = vpop.permute.xlu0 %789
      %791 = vrot.lane.b32.xlu0 %v762, 8
      %v792 = vpop.permute.xlu0 %791
      %793 = vrot.lane.b32.xlu0 %v763, 8
      %v794 = vpop.permute.xlu0 %793
      %795 = vrot.lane.b32.xlu0 %v765, 8
      %v796 = vpop.permute.xlu0 %795
      %797 = vrot.lane.b32.xlu0 %v766, 8
      %v798 = vpop.permute.xlu0 %797
      %799 = vrot.lane.b32.xlu0 %v768, 8
      %v800 = vpop.permute.xlu0 %799
      %v825 = vunpack.c.l.b16 %v500
      %v826 = vunpack.c.l.b16 %v501
      %v827 = vunpack.c.l.b16 %v502
      %v828 = vunpack.c.l.b16 %v503
      %v829 = vunpack.c.l.b16 %v504
      %v830 = vunpack.c.l.b16 %v505
      %v831 = vunpack.c.l.b16 %v506
      %v832 = vunpack.c.l.b16 %v507
      %v833 = vunpack.c.l.b16 %v508
      %v834 = vunpack.c.l.b16 %v509
      %v835 = vunpack.c.l.b16 %v510
      %v836 = vunpack.c.l.b16 %v511
      %v837 = vunpack.c.l.b16 %v512
      %v838 = vunpack.c.l.b16 %v513
      %v839 = vunpack.c.l.b16 %v514
      %v840 = vunpack.c.l.b16 %v515
      %v841 = vunpack.c.l.b16 %v516
      %v842 = vunpack.c.l.b16 %v517
      %v843 = vunpack.c.l.b16 %v518
      %v844 = vunpack.c.l.b16 %v519
      %v845 = vunpack.c.l.b16 %v520
      %v846 = vunpack.c.l.b16 %v521
      %v847 = vunpack.c.l.b16 %v522
      %v848 = vunpack.c.l.b16 %v523
      %v849 = vpack.c.b16 %v826, %v825
      %v850 = vpack.c.b16 %v827, %v827
      %v851 = vpack.c.b16 %v829, %v828
      %v852 = vpack.c.b16 %v830, %v830
      %v853 = vpack.c.b16 %v832, %v831
      %v854 = vpack.c.b16 %v833, %v833
      %v855 = vpack.c.b16 %v835, %v834
      %v856 = vpack.c.b16 %v836, %v836
      %v857 = vpack.c.b16 %v838, %v837
      %v858 = vpack.c.b16 %v839, %v839
      %v859 = vpack.c.b16 %v841, %v840
      %v860 = vpack.c.b16 %v842, %v842
      %v861 = vpack.c.b16 %v844, %v843
      %v862 = vpack.c.b16 %v845, %v845
      %v863 = vpack.c.b16 %v847, %v846
      %v864 = vpack.c.b16 %v848, %v848
      %865 = vrot.lane.b32.xlu0 %v849, 12
      %v866 = vpop.permute.xlu0 %865
      %867 = vrot.lane.b32.xlu0 %v850, 12
      %v868 = vpop.permute.xlu0 %867
      %869 = vrot.lane.b32.xlu0 %v851, 12
      %v870 = vpop.permute.xlu0 %869
      %871 = vrot.lane.b32.xlu0 %v852, 12
      %v872 = vpop.permute.xlu0 %871
      %873 = vrot.lane.b32.xlu0 %v853, 12
      %v874 = vpop.permute.xlu0 %873
      %875 = vrot.lane.b32.xlu0 %v854, 12
      %v876 = vpop.permute.xlu0 %875
      %877 = vrot.lane.b32.xlu0 %v855, 12
      %v878 = vpop.permute.xlu0 %877
      %879 = vrot.lane.b32.xlu0 %v856, 12
      %v880 = vpop.permute.xlu0 %879
      %881 = vrot.lane.b32.xlu0 %v857, 12
      %v882 = vpop.permute.xlu0 %881
      %883 = vrot.lane.b32.xlu0 %v858, 12
      %v884 = vpop.permute.xlu0 %883
      %885 = vrot.lane.b32.xlu0 %v859, 12
      %v886 = vpop.permute.xlu0 %885
      %887 = vrot.lane.b32.xlu0 %v860, 12
      %v888 = vpop.permute.xlu0 %887
      %889 = vrot.lane.b32.xlu0 %v861, 12
      %v890 = vpop.permute.xlu0 %889
      %891 = vrot.lane.b32.xlu0 %v862, 12
      %v892 = vpop.permute.xlu0 %891
      %893 = vrot.lane.b32.xlu0 %v863, 12
      %v894 = vpop.permute.xlu0 %893
      %895 = vrot.lane.b32.xlu0 %v864, 12
      %v896 = vpop.permute.xlu0 %895
      %v897 = vpack.c.b16 %v827, %v826
      %v898 = vpack.c.b16 %v830, %v829
      %v899 = vpack.c.b16 %v833, %v832
      %v900 = vpack.c.b16 %v836, %v835
      %v901 = vpack.c.b16 %v839, %v838
      %v902 = vpack.c.b16 %v842, %v841
      %v903 = vpack.c.b16 %v845, %v844
      %v904 = vpack.c.b16 %v848, %v847
      %v906 = vshrl.u32 %v897, 16
      %v908 = vrot.slane %v906, 4
      %v909 = vshll.u32 %v897, 16
      %v911 = vrot.slane %v909, 5
      %v912 = vor.u32 %v908, %v911
      %v914 = vshrl.u32 %v898, 16
      %v916 = vrot.slane %v914, 4
      %v917 = vshll.u32 %v898, 16
      %v919 = vrot.slane %v917, 5
      %v920 = vor.u32 %v916, %v919
      %v922 = vshrl.u32 %v899, 16
      %v924 = vrot.slane %v922, 4
      %v925 = vshll.u32 %v899, 16
      %v927 = vrot.slane %v925, 5
      %v928 = vor.u32 %v924, %v927
      %v930 = vshrl.u32 %v900, 16
      %v932 = vrot.slane %v930, 4
      %v933 = vshll.u32 %v900, 16
      %v935 = vrot.slane %v933, 5
      %v936 = vor.u32 %v932, %v935
      %v938 = vshrl.u32 %v901, 16
      %v940 = vrot.slane %v938, 4
      %v941 = vshll.u32 %v901, 16
      %v943 = vrot.slane %v941, 5
      %v944 = vor.u32 %v940, %v943
      %v946 = vshrl.u32 %v902, 16
      %v948 = vrot.slane %v946, 4
      %v949 = vshll.u32 %v902, 16
      %v951 = vrot.slane %v949, 5
      %v952 = vor.u32 %v948, %v951
      %v954 = vshrl.u32 %v903, 16
      %v956 = vrot.slane %v954, 4
      %v957 = vshll.u32 %v903, 16
      %v959 = vrot.slane %v957, 5
      %v960 = vor.u32 %v956, %v959
      %v962 = vshrl.u32 %v904, 16
      %v964 = vrot.slane %v962, 4
      %v965 = vshll.u32 %v904, 16
      %v967 = vrot.slane %v965, 5
      %v968 = vor.u32 %v964, %v967
      %969 = vrot.lane.b32.xlu0 %v912, 16
      %v970 = vpop.permute.xlu0 %969
      %971 = vrot.lane.b32.xlu0 %v920, 16
      %v972 = vpop.permute.xlu0 %971
      %973 = vrot.lane.b32.xlu0 %v928, 16
      %v974 = vpop.permute.xlu0 %973
      %975 = vrot.lane.b32.xlu0 %v936, 16
      %v976 = vpop.permute.xlu0 %975
      %977 = vrot.lane.b32.xlu0 %v944, 16
      %v978 = vpop.permute.xlu0 %977
      %979 = vrot.lane.b32.xlu0 %v952, 16
      %v980 = vpop.permute.xlu0 %979
      %981 = vrot.lane.b32.xlu0 %v960, 16
      %v982 = vpop.permute.xlu0 %981
      %983 = vrot.lane.b32.xlu0 %v968, 16
      %v984 = vpop.permute.xlu0 %983
      %v993 = vunpack.c.l.b16 %v524
      %v994 = vunpack.c.l.b16 %v525
      %v995 = vunpack.c.l.b16 %v526
      %v996 = vunpack.c.l.b16 %v527
      %v997 = vunpack.c.l.b16 %v528
      %v998 = vunpack.c.l.b16 %v529
      %v999 = vunpack.c.l.b16 %v530
      %v1000 = vunpack.c.l.b16 %v531
      %v1001 = vpack.c.b16 %v993, %v993
      %v1002 = vpack.c.b16 %v994, %v994
      %v1003 = vpack.c.b16 %v995, %v995
      %v1004 = vpack.c.b16 %v996, %v996
      %v1005 = vpack.c.b16 %v997, %v997
      %v1006 = vpack.c.b16 %v998, %v998
      %v1007 = vpack.c.b16 %v999, %v999
      %v1008 = vpack.c.b16 %v1000, %v1000
      %v1009 = vrot.slane %v897, 5
      %v1010 = vrot.slane %v1001, 5
      %v1011 = vsel %vm744, %v1009, %v1010
      %v1012 = vrot.slane %v898, 5
      %v1013 = vrot.slane %v1002, 5
      %v1014 = vsel %vm744, %v1012, %v1013
      %v1015 = vrot.slane %v899, 5
      %v1016 = vrot.slane %v1003, 5
      %v1017 = vsel %vm744, %v1015, %v1016
      %v1018 = vrot.slane %v900, 5
      %v1019 = vrot.slane %v1004, 5
      %v1020 = vsel %vm744, %v1018, %v1019
      %v1021 = vrot.slane %v901, 5
      %v1022 = vrot.slane %v1005, 5
      %v1023 = vsel %vm744, %v1021, %v1022
      %v1024 = vrot.slane %v902, 5
      %v1025 = vrot.slane %v1006, 5
      %v1026 = vsel %vm744, %v1024, %v1025
      %v1027 = vrot.slane %v903, 5
      %v1028 = vrot.slane %v1007, 5
      %v1029 = vsel %vm744, %v1027, %v1028
      %v1030 = vrot.slane %v904, 5
      %v1031 = vrot.slane %v1008, 5
      %v1032 = vsel %vm744, %v1030, %v1031
      %1033 = vrot.lane.b32.xlu0 %v1009, 20
      %v1034 = vpop.permute.xlu0 %1033
      %1035 = vrot.lane.b32.xlu0 %v1011, 20
      %v1036 = vpop.permute.xlu0 %1035
      %1037 = vrot.lane.b32.xlu0 %v1012, 20
      %v1038 = vpop.permute.xlu0 %1037
      %1039 = vrot.lane.b32.xlu0 %v1014, 20
      %v1040 = vpop.permute.xlu0 %1039
      %1041 = vrot.lane.b32.xlu0 %v1015, 20
      %v1042 = vpop.permute.xlu0 %1041
      %1043 = vrot.lane.b32.xlu0 %v1017, 20
      %v1044 = vpop.permute.xlu0 %1043
      %1045 = vrot.lane.b32.xlu0 %v1018, 20
      %v1046 = vpop.permute.xlu0 %1045
      %1047 = vrot.lane.b32.xlu0 %v1020, 20
      %v1048 = vpop.permute.xlu0 %1047
      %1049 = vrot.lane.b32.xlu0 %v1021, 20
      %v1050 = vpop.permute.xlu0 %1049
      %1051 = vrot.lane.b32.xlu0 %v1023, 20
      %v1052 = vpop.permute.xlu0 %1051
      %1053 = vrot.lane.b32.xlu0 %v1024, 20
      %v1054 = vpop.permute.xlu0 %1053
      %1055 = vrot.lane.b32.xlu0 %v1026, 20
      %v1056 = vpop.permute.xlu0 %1055
      %1057 = vrot.lane.b32.xlu0 %v1027, 20
      %v1058 = vpop.permute.xlu0 %1057
      %1059 = vrot.lane.b32.xlu0 %v1029, 20
      %v1060 = vpop.permute.xlu0 %1059
      %1061 = vrot.lane.b32.xlu0 %v1030, 20
      %v1062 = vpop.permute.xlu0 %1061
      %1063 = vrot.lane.b32.xlu0 %v1032, 20
      %v1064 = vpop.permute.xlu0 %1063
      %v1089 = vunpack.c.l.b16 %v536
      %v1090 = vunpack.c.l.b16 %v537
      %v1091 = vunpack.c.l.b16 %v538
      %v1092 = vunpack.c.l.b16 %v539
      %v1093 = vunpack.c.l.b16 %v540
      %v1094 = vunpack.c.l.b16 %v541
      %v1095 = vunpack.c.l.b16 %v542
      %v1096 = vunpack.c.l.b16 %v543
      %v1097 = vunpack.c.l.b16 %v544
      %v1098 = vunpack.c.l.b16 %v545
      %v1099 = vunpack.c.l.b16 %v546
      %v1100 = vunpack.c.l.b16 %v547
      %v1101 = vunpack.c.l.b16 %v548
      %v1102 = vunpack.c.l.b16 %v549
      %v1103 = vunpack.c.l.b16 %v550
      %v1104 = vunpack.c.l.b16 %v551
      %v1105 = vunpack.c.l.b16 %v552
      %v1106 = vunpack.c.l.b16 %v553
      %v1107 = vunpack.c.l.b16 %v554
      %v1108 = vunpack.c.l.b16 %v555
      %v1109 = vunpack.c.l.b16 %v556
      %v1110 = vunpack.c.l.b16 %v557
      %v1111 = vunpack.c.l.b16 %v558
      %v1112 = vunpack.c.l.b16 %v559
      %v1113 = vpack.c.b16 %v1090, %v1089
      %v1114 = vpack.c.b16 %v1091, %v1091
      %v1115 = vpack.c.b16 %v1093, %v1092
      %v1116 = vpack.c.b16 %v1094, %v1094
      %v1117 = vpack.c.b16 %v1096, %v1095
      %v1118 = vpack.c.b16 %v1097, %v1097
      %v1119 = vpack.c.b16 %v1099, %v1098
      %v1120 = vpack.c.b16 %v1100, %v1100
      %v1121 = vpack.c.b16 %v1102, %v1101
      %v1122 = vpack.c.b16 %v1103, %v1103
      %v1123 = vpack.c.b16 %v1105, %v1104
      %v1124 = vpack.c.b16 %v1106, %v1106
      %v1125 = vpack.c.b16 %v1108, %v1107
      %v1126 = vpack.c.b16 %v1109, %v1109
      %v1127 = vpack.c.b16 %v1111, %v1110
      %v1128 = vpack.c.b16 %v1112, %v1112
      %1129 = vrot.lane.b32.xlu0 %v1113, 24
      %v1130 = vpop.permute.xlu0 %1129
      %1131 = vrot.lane.b32.xlu0 %v1114, 24
      %v1132 = vpop.permute.xlu0 %1131
      %1133 = vrot.lane.b32.xlu0 %v1115, 24
      %v1134 = vpop.permute.xlu0 %1133
      %1135 = vrot.lane.b32.xlu0 %v1116, 24
      %v1136 = vpop.permute.xlu0 %1135
      %1137 = vrot.lane.b32.xlu0 %v1117, 24
      %v1138 = vpop.permute.xlu0 %1137
      %1139 = vrot.lane.b32.xlu0 %v1118, 24
      %v1140 = vpop.permute.xlu0 %1139
      %1141 = vrot.lane.b32.xlu0 %v1119, 24
      %v1142 = vpop.permute.xlu0 %1141
      %1143 = vrot.lane.b32.xlu0 %v1120, 24
      %v1144 = vpop.permute.xlu0 %1143
      %1145 = vrot.lane.b32.xlu0 %v1121, 24
      %v1146 = vpop.permute.xlu0 %1145
      %1147 = vrot.lane.b32.xlu0 %v1122, 24
      %v1148 = vpop.permute.xlu0 %1147
      %1149 = vrot.lane.b32.xlu0 %v1123, 24
      %v1150 = vpop.permute.xlu0 %1149
      %1151 = vrot.lane.b32.xlu0 %v1124, 24
      %v1152 = vpop.permute.xlu0 %1151
      %1153 = vrot.lane.b32.xlu0 %v1125, 24
      %v1154 = vpop.permute.xlu0 %1153
      %1155 = vrot.lane.b32.xlu0 %v1126, 24
      %v1156 = vpop.permute.xlu0 %1155
      %1157 = vrot.lane.b32.xlu0 %v1127, 24
      %v1158 = vpop.permute.xlu0 %1157
      %1159 = vrot.lane.b32.xlu0 %v1128, 24
      %v1160 = vpop.permute.xlu0 %1159
      %v1161 = vpack.c.b16 %v1091, %v1090
      %v1162 = vpack.c.b16 %v1094, %v1093
      %v1163 = vpack.c.b16 %v1097, %v1096
      %v1164 = vpack.c.b16 %v1100, %v1099
      %v1165 = vpack.c.b16 %v1103, %v1102
      %v1166 = vpack.c.b16 %v1106, %v1105
      %v1167 = vpack.c.b16 %v1109, %v1108
      %v1168 = vpack.c.b16 %v1112, %v1111
      %v1170 = vshrl.u32 %v1161, 16
      %v1172 = vrot.slane %v1170, 4
      %v1173 = vshll.u32 %v1161, 16
      %v1175 = vrot.slane %v1173, 5
      %v1176 = vor.u32 %v1172, %v1175
      %v1178 = vshrl.u32 %v1162, 16
      %v1180 = vrot.slane %v1178, 4
      %v1181 = vshll.u32 %v1162, 16
      %v1183 = vrot.slane %v1181, 5
      %v1184 = vor.u32 %v1180, %v1183
      %v1186 = vshrl.u32 %v1163, 16
      %v1188 = vrot.slane %v1186, 4
      %v1189 = vshll.u32 %v1163, 16
      %v1191 = vrot.slane %v1189, 5
      %v1192 = vor.u32 %v1188, %v1191
      %v1194 = vshrl.u32 %v1164, 16
      %v1196 = vrot.slane %v1194, 4
      %v1197 = vshll.u32 %v1164, 16
      %v1199 = vrot.slane %v1197, 5
      %v1200 = vor.u32 %v1196, %v1199
      %v1202 = vshrl.u32 %v1165, 16
      %v1204 = vrot.slane %v1202, 4
      %v1205 = vshll.u32 %v1165, 16
      %v1207 = vrot.slane %v1205, 5
      %v1208 = vor.u32 %v1204, %v1207
      %v1210 = vshrl.u32 %v1166, 16
      %v1212 = vrot.slane %v1210, 4
      %v1213 = vshll.u32 %v1166, 16
      %v1215 = vrot.slane %v1213, 5
      %v1216 = vor.u32 %v1212, %v1215
      %v1218 = vshrl.u32 %v1167, 16
      %v1220 = vrot.slane %v1218, 4
      %v1221 = vshll.u32 %v1167, 16
      %v1223 = vrot.slane %v1221, 5
      %v1224 = vor.u32 %v1220, %v1223
      %v1226 = vshrl.u32 %v1168, 16
      %v1228 = vrot.slane %v1226, 4
      %v1229 = vshll.u32 %v1168, 16
      %v1231 = vrot.slane %v1229, 5
      %v1232 = vor.u32 %v1228, %v1231
      %1233 = vrot.lane.b32.xlu0 %v1176, 28
      %v1234 = vpop.permute.xlu0 %1233
      %1235 = vrot.lane.b32.xlu0 %v1184, 28
      %v1236 = vpop.permute.xlu0 %1235
      %1237 = vrot.lane.b32.xlu0 %v1192, 28
      %v1238 = vpop.permute.xlu0 %1237
      %1239 = vrot.lane.b32.xlu0 %v1200, 28
      %v1240 = vpop.permute.xlu0 %1239
      %1241 = vrot.lane.b32.xlu0 %v1208, 28
      %v1242 = vpop.permute.xlu0 %1241
      %1243 = vrot.lane.b32.xlu0 %v1216, 28
      %v1244 = vpop.permute.xlu0 %1243
      %1245 = vrot.lane.b32.xlu0 %v1224, 28
      %v1246 = vpop.permute.xlu0 %1245
      %1247 = vrot.lane.b32.xlu0 %v1232, 28
      %v1248 = vpop.permute.xlu0 %1247
      %v1257 = vunpack.c.l.b16 %v560
      %v1258 = vunpack.c.l.b16 %v561
      %v1259 = vunpack.c.l.b16 %v562
      %v1260 = vunpack.c.l.b16 %v563
      %v1261 = vunpack.c.l.b16 %v564
      %v1262 = vunpack.c.l.b16 %v565
      %v1263 = vunpack.c.l.b16 %v566
      %v1264 = vunpack.c.l.b16 %v567
      %v1265 = vpack.c.b16 %v1257, %v1257
      %v1266 = vpack.c.b16 %v1258, %v1258
      %v1267 = vpack.c.b16 %v1259, %v1259
      %v1268 = vpack.c.b16 %v1260, %v1260
      %v1269 = vpack.c.b16 %v1261, %v1261
      %v1270 = vpack.c.b16 %v1262, %v1262
      %v1271 = vpack.c.b16 %v1263, %v1263
      %v1272 = vpack.c.b16 %v1264, %v1264
      %v1273 = vrot.slane %v1161, 5
      %v1274 = vrot.slane %v1265, 5
      %v1275 = vsel %vm744, %v1273, %v1274
      %v1276 = vrot.slane %v1162, 5
      %v1277 = vrot.slane %v1266, 5
      %v1278 = vsel %vm744, %v1276, %v1277
      %v1279 = vrot.slane %v1163, 5
      %v1280 = vrot.slane %v1267, 5
      %v1281 = vsel %vm744, %v1279, %v1280
      %v1282 = vrot.slane %v1164, 5
      %v1283 = vrot.slane %v1268, 5
      %v1284 = vsel %vm744, %v1282, %v1283
      %v1285 = vrot.slane %v1165, 5
      %v1286 = vrot.slane %v1269, 5
      %v1287 = vsel %vm744, %v1285, %v1286
      %v1288 = vrot.slane %v1166, 5
      %v1289 = vrot.slane %v1270, 5
      %v1290 = vsel %vm744, %v1288, %v1289
      %v1291 = vrot.slane %v1167, 5
      %v1292 = vrot.slane %v1271, 5
      %v1293 = vsel %vm744, %v1291, %v1292
      %v1294 = vrot.slane %v1168, 5
      %v1295 = vrot.slane %v1272, 5
      %v1296 = vsel %vm744, %v1294, %v1295
      %1297 = vrot.lane.b32.xlu0 %v1273, 32
      %v1298 = vpop.permute.xlu0 %1297
      %1299 = vrot.lane.b32.xlu0 %v1275, 32
      %v1300 = vpop.permute.xlu0 %1299
      %1301 = vrot.lane.b32.xlu0 %v1276, 32
      %v1302 = vpop.permute.xlu0 %1301
      %1303 = vrot.lane.b32.xlu0 %v1278, 32
      %v1304 = vpop.permute.xlu0 %1303
      %1305 = vrot.lane.b32.xlu0 %v1279, 32
      %v1306 = vpop.permute.xlu0 %1305
      %1307 = vrot.lane.b32.xlu0 %v1281, 32
      %v1308 = vpop.permute.xlu0 %1307
      %1309 = vrot.lane.b32.xlu0 %v1282, 32
      %v1310 = vpop.permute.xlu0 %1309
      %1311 = vrot.lane.b32.xlu0 %v1284, 32
      %v1312 = vpop.permute.xlu0 %1311
      %1313 = vrot.lane.b32.xlu0 %v1285, 32
      %v1314 = vpop.permute.xlu0 %1313
      %1315 = vrot.lane.b32.xlu0 %v1287, 32
      %v1316 = vpop.permute.xlu0 %1315
      %1317 = vrot.lane.b32.xlu0 %v1288, 32
      %v1318 = vpop.permute.xlu0 %1317
      %1319 = vrot.lane.b32.xlu0 %v1290, 32
      %v1320 = vpop.permute.xlu0 %1319
      %1321 = vrot.lane.b32.xlu0 %v1291, 32
      %v1322 = vpop.permute.xlu0 %1321
      %1323 = vrot.lane.b32.xlu0 %v1293, 32
      %v1324 = vpop.permute.xlu0 %1323
      %1325 = vrot.lane.b32.xlu0 %v1294, 32
      %v1326 = vpop.permute.xlu0 %1325
      %1327 = vrot.lane.b32.xlu0 %v1296, 32
      %v1328 = vpop.permute.xlu0 %1327
      %v1331 = vsel %vm345, %v616, %v705
      %v1333 = vsel %vm345, %v617, %v705
      %v1336 = vsel %vm345, %v618, %v707
      %v1338 = vsel %vm345, %v619, %v707
      %v1341 = vsel %vm345, %v620, %v709
      %v1343 = vsel %vm345, %v621, %v709
      %v1346 = vsel %vm345, %v622, %v711
      %v1348 = vsel %vm345, %v623, %v711
      %v1351 = vsel %vm345, %v624, %v713
      %v1353 = vsel %vm345, %v625, %v713
      %v1356 = vsel %vm345, %v626, %v715
      %v1358 = vsel %vm345, %v627, %v715
      %v1361 = vsel %vm345, %v628, %v717
      %v1363 = vsel %vm345, %v629, %v717
      %v1366 = vsel %vm345, %v630, %v719
      %v1368 = vsel %vm345, %v631, %v719
      %vm1369 = vcmask 64512
      %v1371 = vsel %vm1369, %v1331, %v770
      %v1373 = vsel %vm1369, %v1333, %v772
      %v1375 = vsel %vm1369, %v1336, %v774
      %v1377 = vsel %vm1369, %v1338, %v776
      %v1379 = vsel %vm1369, %v1341, %v778
      %v1381 = vsel %vm1369, %v1343, %v780
      %v1383 = vsel %vm1369, %v1346, %v782
      %v1385 = vsel %vm1369, %v1348, %v784
      %v1387 = vsel %vm1369, %v1351, %v786
      %v1389 = vsel %vm1369, %v1353, %v788
      %v1391 = vsel %vm1369, %v1356, %v790
      %v1393 = vsel %vm1369, %v1358, %v792
      %v1395 = vsel %vm1369, %v1361, %v794
      %v1397 = vsel %vm1369, %v1363, %v796
      %v1399 = vsel %vm1369, %v1366, %v798
      %v1401 = vsel %vm1369, %v1368, %v800
      %vm1402 = vcmask 97280
      %v1404 = vsel %vm1402, %v1371, %v866
      %v1406 = vsel %vm1402, %v1373, %v868
      %v1408 = vsel %vm1402, %v1375, %v870
      %v1410 = vsel %vm1402, %v1377, %v872
      %v1412 = vsel %vm1402, %v1379, %v874
      %v1414 = vsel %vm1402, %v1381, %v876
      %v1416 = vsel %vm1402, %v1383, %v878
      %v1418 = vsel %vm1402, %v1385, %v880
      %v1420 = vsel %vm1402, %v1387, %v882
      %v1422 = vsel %vm1402, %v1389, %v884
      %v1424 = vsel %vm1402, %v1391, %v886
      %v1426 = vsel %vm1402, %v1393, %v888
      %v1428 = vsel %vm1402, %v1395, %v890
      %v1430 = vsel %vm1402, %v1397, %v892
      %v1432 = vsel %vm1402, %v1399, %v894
      %v1434 = vsel %vm1402, %v1401, %v896
      %vm1435 = vcmask 130048
      %v1437 = vsel %vm1435, %v1404, %v970
      %v1438 = vsel %vm1435, %v1406, %v970
      %v1440 = vsel %vm1435, %v1408, %v972
      %v1441 = vsel %vm1435, %v1410, %v972
      %v1443 = vsel %vm1435, %v1412, %v974
      %v1444 = vsel %vm1435, %v1414, %v974
      %v1446 = vsel %vm1435, %v1416, %v976
      %v1447 = vsel %vm1435, %v1418, %v976
      %v1449 = vsel %vm1435, %v1420, %v978
      %v1450 = vsel %vm1435, %v1422, %v978
      %v1452 = vsel %vm1435, %v1424, %v980
      %v1453 = vsel %vm1435, %v1426, %v980
      %v1455 = vsel %vm1435, %v1428, %v982
      %v1456 = vsel %vm1435, %v1430, %v982
      %v1458 = vsel %vm1435, %v1432, %v984
      %v1459 = vsel %vm1435, %v1434, %v984
      %vm1460 = vcmask 162816
      %v1462 = vsel %vm1460, %v1437, %v1034
      %v1464 = vsel %vm1460, %v1438, %v1036
      %v1466 = vsel %vm1460, %v1440, %v1038
      %v1468 = vsel %vm1460, %v1441, %v1040
      %v1470 = vsel %vm1460, %v1443, %v1042
      %v1472 = vsel %vm1460, %v1444, %v1044
      %v1474 = vsel %vm1460, %v1446, %v1046
      %v1476 = vsel %vm1460, %v1447, %v1048
      %v1478 = vsel %vm1460, %v1449, %v1050
      %v1480 = vsel %vm1460, %v1450, %v1052
      %v1482 = vsel %vm1460, %v1452, %v1054
      %v1484 = vsel %vm1460, %v1453, %v1056
      %v1486 = vsel %vm1460, %v1455, %v1058
      %v1488 = vsel %vm1460, %v1456, %v1060
      %v1490 = vsel %vm1460, %v1458, %v1062
      %v1492 = vsel %vm1460, %v1459, %v1064
      %vm1493 = vcmask 195584
      %v1495 = vsel %vm1493, %v1462, %v1130
      %v1497 = vsel %vm1493, %v1464, %v1132
      %v1499 = vsel %vm1493, %v1466, %v1134
      %v1501 = vsel %vm1493, %v1468, %v1136
      %v1503 = vsel %vm1493, %v1470, %v1138
      %v1505 = vsel %vm1493, %v1472, %v1140
      %v1507 = vsel %vm1493, %v1474, %v1142
      %v1509 = vsel %vm1493, %v1476, %v1144
      %v1511 = vsel %vm1493, %v1478, %v1146
      %v1513 = vsel %vm1493, %v1480, %v1148
      %v1515 = vsel %vm1493, %v1482, %v1150
      %v1517 = vsel %vm1493, %v1484, %v1152
      %v1519 = vsel %vm1493, %v1486, %v1154
      %v1521 = vsel %vm1493, %v1488, %v1156
      %v1523 = vsel %vm1493, %v1490, %v1158
      %v1525 = vsel %vm1493, %v1492, %v1160
      %vm1526 = vcmask 228352
      %v1528 = vsel %vm1526, %v1495, %v1234
      %v1529 = vsel %vm1526, %v1497, %v1234
      %v1531 = vsel %vm1526, %v1499, %v1236
      %v1532 = vsel %vm1526, %v1501, %v1236
      %v1534 = vsel %vm1526, %v1503, %v1238
      %v1535 = vsel %vm1526, %v1505, %v1238
      %v1537 = vsel %vm1526, %v1507, %v1240
      %v1538 = vsel %vm1526, %v1509, %v1240
      %v1540 = vsel %vm1526, %v1511, %v1242
      %v1541 = vsel %vm1526, %v1513, %v1242
      %v1543 = vsel %vm1526, %v1515, %v1244
      %v1544 = vsel %vm1526, %v1517, %v1244
      %v1546 = vsel %vm1526, %v1519, %v1246
      %v1547 = vsel %vm1526, %v1521, %v1246
      %v1549 = vsel %vm1526, %v1523, %v1248
      %v1550 = vsel %vm1526, %v1525, %v1248
      %vm1551 = vcmask 261120
      %v1553 = vsel %vm1551, %v1528, %v1298
      %v1555 = vsel %vm1551, %v1529, %v1300
      %v1557 = vsel %vm1551, %v1531, %v1302
      %v1559 = vsel %vm1551, %v1532, %v1304
      %v1561 = vsel %vm1551, %v1534, %v1306
      %v1563 = vsel %vm1551, %v1535, %v1308
      %v1565 = vsel %vm1551, %v1537, %v1310
      %v1567 = vsel %vm1551, %v1538, %v1312
      %v1569 = vsel %vm1551, %v1540, %v1314
      %v1571 = vsel %vm1551, %v1541, %v1316
      %v1573 = vsel %vm1551, %v1543, %v1318
      %v1575 = vsel %vm1551, %v1544, %v1320
      %v1577 = vsel %vm1551, %v1546, %v1322
      %v1579 = vsel %vm1551, %v1547, %v1324
      %v1581 = vsel %vm1551, %v1549, %v1326
      %v1583 = vsel %vm1551, %v1550, %v1328
      %vm1584 = vsmask.f32 4352
      %v1585 = vshrl.u32 %v1553, 16
      %v1587 = vrot.slane %v1585, 3
      %v1588 = vshll.u32 %v1553, 16
      %v1590 = vrot.slane %v1588, 4
      %v1591 = vor.u32 %v1587, %v1590
      %v1592 = vshrl.u32 %v1555, 16
      %v1594 = vrot.slane %v1592, 3
      %v1595 = vshll.u32 %v1555, 16
      %v1597 = vrot.slane %v1595, 4
      %v1598 = vor.u32 %v1594, %v1597
      %v1599 = vsel %vm1584, %v1591, %v1598
      %v1600 = vshrl.u32 %v1557, 16
      %v1602 = vrot.slane %v1600, 3
      %v1603 = vshll.u32 %v1557, 16
      %v1605 = vrot.slane %v1603, 4
      %v1606 = vor.u32 %v1602, %v1605
      %v1607 = vshrl.u32 %v1559, 16
      %v1609 = vrot.slane %v1607, 3
      %v1610 = vshll.u32 %v1559, 16
      %v1612 = vrot.slane %v1610, 4
      %v1613 = vor.u32 %v1609, %v1612
      %v1614 = vsel %vm1584, %v1606, %v1613
      %v1615 = vshrl.u32 %v1561, 16
      %v1617 = vrot.slane %v1615, 3
      %v1618 = vshll.u32 %v1561, 16
      %v1620 = vrot.slane %v1618, 4
      %v1621 = vor.u32 %v1617, %v1620
      %v1622 = vshrl.u32 %v1563, 16
      %v1624 = vrot.slane %v1622, 3
      %v1625 = vshll.u32 %v1563, 16
      %v1627 = vrot.slane %v1625, 4
      %v1628 = vor.u32 %v1624, %v1627
      %v1629 = vsel %vm1584, %v1621, %v1628
      %v1630 = vshrl.u32 %v1565, 16
      %v1632 = vrot.slane %v1630, 3
      %v1633 = vshll.u32 %v1565, 16
      %v1635 = vrot.slane %v1633, 4
      %v1636 = vor.u32 %v1632, %v1635
      %v1637 = vshrl.u32 %v1567, 16
      %v1639 = vrot.slane %v1637, 3
      %v1640 = vshll.u32 %v1567, 16
      %v1642 = vrot.slane %v1640, 4
      %v1643 = vor.u32 %v1639, %v1642
      %v1644 = vsel %vm1584, %v1636, %v1643
      %v1645 = vshrl.u32 %v1569, 16
      %v1647 = vrot.slane %v1645, 3
      %v1648 = vshll.u32 %v1569, 16
      %v1650 = vrot.slane %v1648, 4
      %v1651 = vor.u32 %v1647, %v1650
      %v1652 = vshrl.u32 %v1571, 16
      %v1654 = vrot.slane %v1652, 3
      %v1655 = vshll.u32 %v1571, 16
      %v1657 = vrot.slane %v1655, 4
      %v1658 = vor.u32 %v1654, %v1657
      %v1659 = vsel %vm1584, %v1651, %v1658
      %v1660 = vshrl.u32 %v1573, 16
      %v1662 = vrot.slane %v1660, 3
      %v1663 = vshll.u32 %v1573, 16
      %v1665 = vrot.slane %v1663, 4
      %v1666 = vor.u32 %v1662, %v1665
      %v1667 = vshrl.u32 %v1575, 16
      %v1669 = vrot.slane %v1667, 3
      %v1670 = vshll.u32 %v1575, 16
      %v1672 = vrot.slane %v1670, 4
      %v1673 = vor.u32 %v1669, %v1672
      %v1674 = vsel %vm1584, %v1666, %v1673
      %v1675 = vshrl.u32 %v1577, 16
      %v1677 = vrot.slane %v1675, 3
      %v1678 = vshll.u32 %v1577, 16
      %v1680 = vrot.slane %v1678, 4
      %v1681 = vor.u32 %v1677, %v1680
      %v1682 = vshrl.u32 %v1579, 16
      %v1684 = vrot.slane %v1682, 3
      %v1685 = vshll.u32 %v1579, 16
      %v1687 = vrot.slane %v1685, 4
      %v1688 = vor.u32 %v1684, %v1687
      %v1689 = vsel %vm1584, %v1681, %v1688
      %v1690 = vshrl.u32 %v1581, 16
      %v1692 = vrot.slane %v1690, 3
      %v1693 = vshll.u32 %v1581, 16
      %v1695 = vrot.slane %v1693, 4
      %v1696 = vor.u32 %v1692, %v1695
      %v1697 = vshrl.u32 %v1583, 16
      %v1699 = vrot.slane %v1697, 3
      %v1700 = vshll.u32 %v1583, 16
      %v1702 = vrot.slane %v1700, 4
      %v1703 = vor.u32 %v1699, %v1702
      %v1704 = vsel %vm1584, %v1696, %v1703
      %v1710 = vunpack.c.l.b16 %v452
      %v1711 = vunpack.c.l.b16 %v453
      %v1712 = vunpack.c.l.b16 %v454
      %v1713 = vunpack.c.l.b16 %v455
      %v1714 = vunpack.c.l.b16 %v456
      %v1715 = vpack.c.b16 %v1711, %v1710
      %v1716 = vpack.c.b16 %v1713, %v1712
      %v1717 = vpack.c.b16 %v1714, %v1714
      %vm1720 = vcmask 293888
      %v1722 = vsel %vm1720, %v1599, 0
      %v1725 = vsel %vm1720, %v1614, 0
      %v1728 = vsel %vm1720, %v1629, 0
      %v1731 = vsel %vm1720, %v1644, 0
      %v1734 = vsel %vm1720, %v1659, 0
      %v1737 = vsel %vm1720, %v1674, 0
      %v1740 = vsel %vm1720, %v1689, 0
      %v1743 = vsel %vm1720, %v1704, 0
      %vm1745 = vcmask 1041408
      %v1747 = vsel %vm1745, %v1717, 0
      %1749 = vmatpush.bf16.msra.mxu0 0
      %1750 = vmatpush.bf16.msra.mxu0 0
      %1751 = vmatpush.bf16.msra.mxu0 0
      %1752 = vmatpush.bf16.msra.mxu0 0
      %1753 = vmatpush.bf16.msra.mxu0 0
      %1754 = vmatpush.bf16.msra.mxu0 %v1747
      %1755 = vmatpush.bf16.msra.mxu0 %v1716
      %1756 = vmatpush.bf16.msra.mxu0 %v1715
      %1757 = vmatmul.bf16.gmra.mxu0 %v1722
      %v1758 = vpop.f32.mrf.mxu0
      %v1759 = vadd.f32 %v459, %v1758
      %v1760 = vpop.f32.mrf.mxu0
      %v1761 = vadd.f32 %v459, %v1760
      %1762 = vmatmul.bf16.gmra.mxu0 %v1725
      %v1763 = vpop.f32.mrf.mxu0
      %v1764 = vadd.f32 %v459, %v1763
      %v1765 = vpop.f32.mrf.mxu0
      %v1766 = vadd.f32 %v459, %v1765
      %1767 = vmatmul.bf16.gmra.mxu0 %v1728
      %v1768 = vpop.f32.mrf.mxu0
      %v1769 = vadd.f32 %v459, %v1768
      %v1770 = vpop.f32.mrf.mxu0
      %v1771 = vadd.f32 %v459, %v1770
      %1772 = vmatmul.bf16.gmra.mxu0 %v1731
      %v1773 = vpop.f32.mrf.mxu0
      %v1774 = vadd.f32 %v459, %v1773
      %v1775 = vpop.f32.mrf.mxu0
      %v1776 = vadd.f32 %v459, %v1775
      %1777 = vmatmul.bf16.gmra.mxu0 %v1734
      %v1778 = vpop.f32.mrf.mxu0
      %v1779 = vadd.f32 %v459, %v1778
      %v1780 = vpop.f32.mrf.mxu0
      %v1781 = vadd.f32 %v459, %v1780
      %1782 = vmatmul.bf16.gmra.mxu0 %v1737
      %v1783 = vpop.f32.mrf.mxu0
      %v1784 = vadd.f32 %v459, %v1783
      %v1785 = vpop.f32.mrf.mxu0
      %v1786 = vadd.f32 %v459, %v1785
      %1787 = vmatmul.bf16.gmra.mxu0 %v1740
      %v1788 = vpop.f32.mrf.mxu0
      %v1789 = vadd.f32 %v459, %v1788
      %v1790 = vpop.f32.mrf.mxu0
      %v1791 = vadd.f32 %v459, %v1790
      %1792 = vmatmul.bf16.gmra.mxu0 %v1743
      %v1793 = vpop.f32.mrf.mxu0
      %v1794 = vadd.f32 %v459, %v1793
      %v1795 = vpop.f32.mrf.mxu0
      %v1796 = vadd.f32 %v459, %v1795
      %1797 = vdwg.mxu0
      %vm1798 = vcmp.ge.f32.partialorder %v1759, 0.0
      %vm1799 = vcmp.ge.f32.partialorder %v1761, 0.0
      %vm1800 = vcmp.ge.f32.partialorder %v1764, 0.0
      %vm1801 = vcmp.ge.f32.partialorder %v1766, 0.0
      %vm1802 = vcmp.ge.f32.partialorder %v1769, 0.0
      %vm1803 = vcmp.ge.f32.partialorder %v1771, 0.0
      %vm1804 = vcmp.ge.f32.partialorder %v1774, 0.0
      %vm1805 = vcmp.ge.f32.partialorder %v1776, 0.0
      %vm1806 = vcmp.ge.f32.partialorder %v1779, 0.0
      %vm1807 = vcmp.ge.f32.partialorder %v1781, 0.0
      %vm1808 = vcmp.ge.f32.partialorder %v1784, 0.0
      %vm1809 = vcmp.ge.f32.partialorder %v1786, 0.0
      %vm1810 = vcmp.ge.f32.partialorder %v1789, 0.0
      %vm1811 = vcmp.ge.f32.partialorder %v1791, 0.0
      %vm1812 = vcmp.ge.f32.partialorder %v1794, 0.0
      %vm1813 = vcmp.ge.f32.partialorder %v1796, 0.0
      %v1814 = vmul.f32 %v1759, 0.01
      %v1815 = vmul.f32 %v1761, 0.01
      %v1816 = vmul.f32 %v1764, 0.01
      %v1817 = vmul.f32 %v1766, 0.01
      %v1818 = vmul.f32 %v1769, 0.01
      %v1819 = vmul.f32 %v1771, 0.01
      %v1820 = vmul.f32 %v1774, 0.01
      %v1821 = vmul.f32 %v1776, 0.01
      %v1822 = vmul.f32 %v1779, 0.01
      %v1823 = vmul.f32 %v1781, 0.01
      %v1824 = vmul.f32 %v1784, 0.01
      %v1825 = vmul.f32 %v1786, 0.01
      %v1826 = vmul.f32 %v1789, 0.01
      %v1827 = vmul.f32 %v1791, 0.01
      %v1828 = vmul.f32 %v1794, 0.01
      %v1829 = vmul.f32 %v1796, 0.01
      %v1830 = vsel %vm1798, %v1759, %v1814
      %v1831 = vsel %vm1799, %v1761, %v1815
      %v1832 = vsel %vm1800, %v1764, %v1816
      %v1833 = vsel %vm1801, %v1766, %v1817
      %v1834 = vsel %vm1802, %v1769, %v1818
      %v1835 = vsel %vm1803, %v1771, %v1819
      %v1836 = vsel %vm1804, %v1774, %v1820
      %v1837 = vsel %vm1805, %v1776, %v1821
      %v1838 = vsel %vm1806, %v1779, %v1822
      %v1839 = vsel %vm1807, %v1781, %v1823
      %v1840 = vsel %vm1808, %v1784, %v1824
      %v1841 = vsel %vm1809, %v1786, %v1825
      %v1842 = vsel %vm1810, %v1789, %v1826
      %v1843 = vsel %vm1811, %v1791, %v1827
      %v1844 = vsel %vm1812, %v1794, %v1828
      %v1845 = vsel %vm1813, %v1796, %v1829
      %s1846 = smul.u32 %s496, 40
      %s1847 = scalar_lea.vmem [#allocation3], %s1846
      %1848 = vst.msk [vmem:[%s1847 + $0x10] sm:$0xff] %vm345, %v1830
      %1849 = vst.msk [vmem:[%s1847 + $0x18] sm:$0xff] %vm345, %v1831
      %1850 = vst.msk [vmem:[%s1847 + $0x38] sm:$0xff] %vm345, %v1832
      %1851 = vst.msk [vmem:[%s1847 + $0x40] sm:$0xff] %vm345, %v1833
      %1852 = vst.msk [vmem:[%s1847 + $0x60] sm:$0xff] %vm345, %v1834
      %1853 = vst.msk [vmem:[%s1847 + $0x68] sm:$0xff] %vm345, %v1835
      %1854 = vst.msk [vmem:[%s1847 + $0x88] sm:$0xff] %vm345, %v1836
      %1855 = vst.msk [vmem:[%s1847 + $0x90] sm:$0xff] %vm345, %v1837
      %1856 = vst.msk [vmem:[%s1847 + $0xb0] sm:$0xff] %vm345, %v1838
      %1857 = vst.msk [vmem:[%s1847 + $0xb8] sm:$0xff] %vm345, %v1839
      %1858 = vst.msk [vmem:[%s1847 + $0xd8] sm:$0xff] %vm345, %v1840
      %1859 = vst.msk [vmem:[%s1847 + $0xe0] sm:$0xff] %vm345, %v1841
      %1860 = vst.msk [vmem:[%s1847 + $0x100] sm:$0xff] %vm345, %v1842
      %1861 = vst.msk [vmem:[%s1847 + $0x108] sm:$0xff] %vm345, %v1843
      %1862 = vst.msk [vmem:[%s1847 + $0x128] sm:$0xff] %vm345, %v1844
      %1863 = vst.msk [vmem:[%s1847 + $0x130] sm:$0xff] %vm345, %v1845
      %s1864 = smul.u32 8, 5
      %s1865 = smul.addr %s1864, 4
      %s1866 = scalar_lea.vmem [#allocation2], %s1865
      %v1867 = vld [vmem:[%s1866 + $0x4] sm:$0x8]
      %v1868 = vld [vmem:[%s1866 + $0x8] sm:$0xf]
      %v1869 = vld [vmem:[%s1866 + $0xc] sm:$0xf]
      %v1870 = vld [vmem:[%s1866 + $0x18] sm:$0x8]
      %v1871 = vld [vmem:[%s1866 + $0x1c] sm:$0xf]
      %v1872 = vld [vmem:[%s1866 + $0x20] sm:$0xf]
      %v1873 = vld [vmem:[%s1866 + $0x2c] sm:$0x8]
      %v1874 = vld [vmem:[%s1866 + $0x30] sm:$0xf]
      %v1875 = vld [vmem:[%s1866 + $0x34] sm:$0xf]
      %v1876 = vld [vmem:[%s1866 + $0x40] sm:$0x8]
      %v1877 = vld [vmem:[%s1866 + $0x44] sm:$0xf]
      %v1878 = vld [vmem:[%s1866 + $0x48] sm:$0xf]
      %v1879 = vld [vmem:[%s1866 + $0x54] sm:$0x8]
      %v1880 = vld [vmem:[%s1866 + $0x58] sm:$0xf]
      %v1881 = vld [vmem:[%s1866 + $0x5c] sm:$0xf]
      %v1882 = vld [vmem:[%s1866 + $0x68] sm:$0x8]
      %v1883 = vld [vmem:[%s1866 + $0x6c] sm:$0xf]
      %v1884 = vld [vmem:[%s1866 + $0x70] sm:$0xf]
      %v1885 = vld [vmem:[%s1866 + $0x7c] sm:$0x8]
      %v1886 = vld [vmem:[%s1866 + $0x80] sm:$0xf]
      %v1887 = vld [vmem:[%s1866 + $0x84] sm:$0xf]
      %v1888 = vld [vmem:[%s1866 + $0x90] sm:$0x8]
      %v1889 = vld [vmem:[%s1866 + $0x94] sm:$0xf]
      %v1890 = vld [vmem:[%s1866 + $0x98] sm:$0xf]
      %v1891 = vld [vmem:[%s1866 + $0x10] sm:$0x1]
      %v1892 = vld [vmem:[%s1866 + $0x24] sm:$0x1]
      %v1893 = vld [vmem:[%s1866 + $0x38] sm:$0x1]
      %v1894 = vld [vmem:[%s1866 + $0x4c] sm:$0x1]
      %v1895 = vld [vmem:[%s1866 + $0x60] sm:$0x1]
      %v1896 = vld [vmem:[%s1866 + $0x74] sm:$0x1]
      %v1897 = vld [vmem:[%s1866 + $0x88] sm:$0x1]
      %v1898 = vld [vmem:[%s1866 + $0x9c] sm:$0x1]
      %s1899 = sadd.s32 8, 1
      %s1900 = smul.u32 %s1899, 5
      %s1901 = smul.addr %s1900, 4
      %s1902 = scalar_lea.vmem [#allocation2], %s1901
      %v1903 = vld [vmem:[%s1902 + $0x4] sm:$0x8]
      %v1904 = vld [vmem:[%s1902 + $0x8] sm:$0xf]
      %v1905 = vld [vmem:[%s1902 + $0xc] sm:$0xf]
      %v1906 = vld [vmem:[%s1902 + $0x18] sm:$0x8]
      %v1907 = vld [vmem:[%s1902 + $0x1c] sm:$0xf]
      %v1908 = vld [vmem:[%s1902 + $0x20] sm:$0xf]
      %v1909 = vld [vmem:[%s1902 + $0x2c] sm:$0x8]
      %v1910 = vld [vmem:[%s1902 + $0x30] sm:$0xf]
      %v1911 = vld [vmem:[%s1902 + $0x34] sm:$0xf]
      %v1912 = vld [vmem:[%s1902 + $0x40] sm:$0x8]
      %v1913 = vld [vmem:[%s1902 + $0x44] sm:$0xf]
      %v1914 = vld [vmem:[%s1902 + $0x48] sm:$0xf]
      %v1915 = vld [vmem:[%s1902 + $0x54] sm:$0x8]
      %v1916 = vld [vmem:[%s1902 + $0x58] sm:$0xf]
      %v1917 = vld [vmem:[%s1902 + $0x5c] sm:$0xf]
      %v1918 = vld [vmem:[%s1902 + $0x68] sm:$0x8]
      %v1919 = vld [vmem:[%s1902 + $0x6c] sm:$0xf]
      %v1920 = vld [vmem:[%s1902 + $0x70] sm:$0xf]
      %v1921 = vld [vmem:[%s1902 + $0x7c] sm:$0x8]
      %v1922 = vld [vmem:[%s1902 + $0x80] sm:$0xf]
      %v1923 = vld [vmem:[%s1902 + $0x84] sm:$0xf]
      %v1924 = vld [vmem:[%s1902 + $0x90] sm:$0x8]
      %v1925 = vld [vmem:[%s1902 + $0x94] sm:$0xf]
      %v1926 = vld [vmem:[%s1902 + $0x98] sm:$0xf]
      %v1927 = vld [vmem:[%s1902 + $0x10] sm:$0x1]
      %v1928 = vld [vmem:[%s1902 + $0x24] sm:$0x1]
      %v1929 = vld [vmem:[%s1902 + $0x38] sm:$0x1]
      %v1930 = vld [vmem:[%s1902 + $0x4c] sm:$0x1]
      %v1931 = vld [vmem:[%s1902 + $0x60] sm:$0x1]
      %v1932 = vld [vmem:[%s1902 + $0x74] sm:$0x1]
      %v1933 = vld [vmem:[%s1902 + $0x88] sm:$0x1]
      %v1934 = vld [vmem:[%s1902 + $0x9c] sm:$0x1]
      %s1935 = sadd.s32 8, 2
      %s1936 = smul.u32 %s1935, 5
      %s1937 = smul.addr %s1936, 4
      %s1938 = scalar_lea.vmem [#allocation2], %s1937
      %v1939 = vld [vmem:[%s1938 + $0x4] sm:$0x8]
      %v1940 = vld [vmem:[%s1938 + $0x8] sm:$0xf]
      %v1941 = vld [vmem:[%s1938 + $0xc] sm:$0xf]
      %v1942 = vld [vmem:[%s1938 + $0x18] sm:$0x8]
      %v1943 = vld [vmem:[%s1938 + $0x1c] sm:$0xf]
      %v1944 = vld [vmem:[%s1938 + $0x20] sm:$0xf]
      %v1945 = vld [vmem:[%s1938 + $0x2c] sm:$0x8]
      %v1946 = vld [vmem:[%s1938 + $0x30] sm:$0xf]
      %v1947 = vld [vmem:[%s1938 + $0x34] sm:$0xf]
      %v1948 = vld [vmem:[%s1938 + $0x40] sm:$0x8]
      %v1949 = vld [vmem:[%s1938 + $0x44] sm:$0xf]
      %v1950 = vld [vmem:[%s1938 + $0x48] sm:$0xf]
      %v1951 = vld [vmem:[%s1938 + $0x54] sm:$0x8]
      %v1952 = vld [vmem:[%s1938 + $0x58] sm:$0xf]
      %v1953 = vld [vmem:[%s1938 + $0x5c] sm:$0xf]
      %v1954 = vld [vmem:[%s1938 + $0x68] sm:$0x8]
      %v1955 = vld [vmem:[%s1938 + $0x6c] sm:$0xf]
      %v1956 = vld [vmem:[%s1938 + $0x70] sm:$0xf]
      %v1957 = vld [vmem:[%s1938 + $0x7c] sm:$0x8]
      %v1958 = vld [vmem:[%s1938 + $0x80] sm:$0xf]
      %v1959 = vld [vmem:[%s1938 + $0x84] sm:$0xf]
      %v1960 = vld [vmem:[%s1938 + $0x90] sm:$0x8]
      %v1961 = vld [vmem:[%s1938 + $0x94] sm:$0xf]
      %v1962 = vld [vmem:[%s1938 + $0x98] sm:$0xf]
      %v1963 = vld [vmem:[%s1938 + $0x10] sm:$0x1]
      %v1964 = vld [vmem:[%s1938 + $0x24] sm:$0x1]
      %v1965 = vld [vmem:[%s1938 + $0x38] sm:$0x1]
      %v1966 = vld [vmem:[%s1938 + $0x4c] sm:$0x1]
      %v1967 = vld [vmem:[%s1938 + $0x60] sm:$0x1]
      %v1968 = vld [vmem:[%s1938 + $0x74] sm:$0x1]
      %v1969 = vld [vmem:[%s1938 + $0x88] sm:$0x1]
      %v1970 = vld [vmem:[%s1938 + $0x9c] sm:$0x1]
      %v1995 = vunpack.c.l.b16 %v1867
      %v1996 = vunpack.c.l.b16 %v1868
      %v1997 = vunpack.c.l.b16 %v1869
      %v1998 = vunpack.c.l.b16 %v1870
      %v1999 = vunpack.c.l.b16 %v1871
      %v2000 = vunpack.c.l.b16 %v1872
      %v2001 = vunpack.c.l.b16 %v1873
      %v2002 = vunpack.c.l.b16 %v1874
      %v2003 = vunpack.c.l.b16 %v1875
      %v2004 = vunpack.c.l.b16 %v1876
      %v2005 = vunpack.c.l.b16 %v1877
      %v2006 = vunpack.c.l.b16 %v1878
      %v2007 = vunpack.c.l.b16 %v1879
      %v2008 = vunpack.c.l.b16 %v1880
      %v2009 = vunpack.c.l.b16 %v1881
      %v2010 = vunpack.c.l.b16 %v1882
      %v2011 = vunpack.c.l.b16 %v1883
      %v2012 = vunpack.c.l.b16 %v1884
      %v2013 = vunpack.c.l.b16 %v1885
      %v2014 = vunpack.c.l.b16 %v1886
      %v2015 = vunpack.c.l.b16 %v1887
      %v2016 = vunpack.c.l.b16 %v1888
      %v2017 = vunpack.c.l.b16 %v1889
      %v2018 = vunpack.c.l.b16 %v1890
      %v2019 = vpack.c.b16 %v1996, %v1995
      %v2020 = vpack.c.b16 %v1997, %v1997
      %v2021 = vpack.c.b16 %v1999, %v1998
      %v2022 = vpack.c.b16 %v2000, %v2000
      %v2023 = vpack.c.b16 %v2002, %v2001
      %v2024 = vpack.c.b16 %v2003, %v2003
      %v2025 = vpack.c.b16 %v2005, %v2004
      %v2026 = vpack.c.b16 %v2006, %v2006
      %v2027 = vpack.c.b16 %v2008, %v2007
      %v2028 = vpack.c.b16 %v2009, %v2009
      %v2029 = vpack.c.b16 %v2011, %v2010
      %v2030 = vpack.c.b16 %v2012, %v2012
      %v2031 = vpack.c.b16 %v2014, %v2013
      %v2032 = vpack.c.b16 %v2015, %v2015
      %v2033 = vpack.c.b16 %v2017, %v2016
      %v2034 = vpack.c.b16 %v2018, %v2018
      %v2035 = vpack.c.b16 %v1997, %v1996
      %v2036 = vpack.c.b16 %v2000, %v1999
      %v2037 = vpack.c.b16 %v2003, %v2002
      %v2038 = vpack.c.b16 %v2006, %v2005
      %v2039 = vpack.c.b16 %v2009, %v2008
      %v2040 = vpack.c.b16 %v2012, %v2011
      %v2041 = vpack.c.b16 %v2015, %v2014
      %v2042 = vpack.c.b16 %v2018, %v2017
      %v2044 = vshrl.u32 %v2035, 16
      %v2046 = vrot.slane %v2044, 4
      %v2047 = vshll.u32 %v2035, 16
      %v2049 = vrot.slane %v2047, 5
      %v2050 = vor.u32 %v2046, %v2049
      %v2052 = vshrl.u32 %v2036, 16
      %v2054 = vrot.slane %v2052, 4
      %v2055 = vshll.u32 %v2036, 16
      %v2057 = vrot.slane %v2055, 5
      %v2058 = vor.u32 %v2054, %v2057
      %v2060 = vshrl.u32 %v2037, 16
      %v2062 = vrot.slane %v2060, 4
      %v2063 = vshll.u32 %v2037, 16
      %v2065 = vrot.slane %v2063, 5
      %v2066 = vor.u32 %v2062, %v2065
      %v2068 = vshrl.u32 %v2038, 16
      %v2070 = vrot.slane %v2068, 4
      %v2071 = vshll.u32 %v2038, 16
      %v2073 = vrot.slane %v2071, 5
      %v2074 = vor.u32 %v2070, %v2073
      %v2076 = vshrl.u32 %v2039, 16
      %v2078 = vrot.slane %v2076, 4
      %v2079 = vshll.u32 %v2039, 16
      %v2081 = vrot.slane %v2079, 5
      %v2082 = vor.u32 %v2078, %v2081
      %v2084 = vshrl.u32 %v2040, 16
      %v2086 = vrot.slane %v2084, 4
      %v2087 = vshll.u32 %v2040, 16
      %v2089 = vrot.slane %v2087, 5
      %v2090 = vor.u32 %v2086, %v2089
      %v2092 = vshrl.u32 %v2041, 16
      %v2094 = vrot.slane %v2092, 4
      %v2095 = vshll.u32 %v2041, 16
      %v2097 = vrot.slane %v2095, 5
      %v2098 = vor.u32 %v2094, %v2097
      %v2100 = vshrl.u32 %v2042, 16
      %v2102 = vrot.slane %v2100, 4
      %v2103 = vshll.u32 %v2042, 16
      %v2105 = vrot.slane %v2103, 5
      %v2106 = vor.u32 %v2102, %v2105
      %2107 = vrot.lane.b32.xlu0 %v2050, 4
      %v2108 = vpop.permute.xlu0 %2107
      %2109 = vrot.lane.b32.xlu0 %v2058, 4
      %v2110 = vpop.permute.xlu0 %2109
      %2111 = vrot.lane.b32.xlu0 %v2066, 4
      %v2112 = vpop.permute.xlu0 %2111
      %2113 = vrot.lane.b32.xlu0 %v2074, 4
      %v2114 = vpop.permute.xlu0 %2113
      %2115 = vrot.lane.b32.xlu0 %v2082, 4
      %v2116 = vpop.permute.xlu0 %2115
      %2117 = vrot.lane.b32.xlu0 %v2090, 4
      %v2118 = vpop.permute.xlu0 %2117
      %2119 = vrot.lane.b32.xlu0 %v2098, 4
      %v2120 = vpop.permute.xlu0 %2119
      %2121 = vrot.lane.b32.xlu0 %v2106, 4
      %v2122 = vpop.permute.xlu0 %2121
      %v2131 = vunpack.c.l.b16 %v1891
      %v2132 = vunpack.c.l.b16 %v1892
      %v2133 = vunpack.c.l.b16 %v1893
      %v2134 = vunpack.c.l.b16 %v1894
      %v2135 = vunpack.c.l.b16 %v1895
      %v2136 = vunpack.c.l.b16 %v1896
      %v2137 = vunpack.c.l.b16 %v1897
      %v2138 = vunpack.c.l.b16 %v1898
      %v2139 = vpack.c.b16 %v2131, %v2131
      %v2140 = vpack.c.b16 %v2132, %v2132
      %v2141 = vpack.c.b16 %v2133, %v2133
      %v2142 = vpack.c.b16 %v2134, %v2134
      %v2143 = vpack.c.b16 %v2135, %v2135
      %v2144 = vpack.c.b16 %v2136, %v2136
      %v2145 = vpack.c.b16 %v2137, %v2137
      %v2146 = vpack.c.b16 %v2138, %v2138
      %v2147 = vrot.slane %v2035, 5
      %v2148 = vrot.slane %v2139, 5
      %v2149 = vsel %vm744, %v2147, %v2148
      %v2150 = vrot.slane %v2036, 5
      %v2151 = vrot.slane %v2140, 5
      %v2152 = vsel %vm744, %v2150, %v2151
      %v2153 = vrot.slane %v2037, 5
      %v2154 = vrot.slane %v2141, 5
      %v2155 = vsel %vm744, %v2153, %v2154
      %v2156 = vrot.slane %v2038, 5
      %v2157 = vrot.slane %v2142, 5
      %v2158 = vsel %vm744, %v2156, %v2157
      %v2159 = vrot.slane %v2039, 5
      %v2160 = vrot.slane %v2143, 5
      %v2161 = vsel %vm744, %v2159, %v2160
      %v2162 = vrot.slane %v2040, 5
      %v2163 = vrot.slane %v2144, 5
      %v2164 = vsel %vm744, %v2162, %v2163
      %v2165 = vrot.slane %v2041, 5
      %v2166 = vrot.slane %v2145, 5
      %v2167 = vsel %vm744, %v2165, %v2166
      %v2168 = vrot.slane %v2042, 5
      %v2169 = vrot.slane %v2146, 5
      %v2170 = vsel %vm744, %v2168, %v2169
      %2171 = vrot.lane.b32.xlu0 %v2147, 8
      %v2172 = vpop.permute.xlu0 %2171
      %2173 = vrot.lane.b32.xlu0 %v2149, 8
      %v2174 = vpop.permute.xlu0 %2173
      %2175 = vrot.lane.b32.xlu0 %v2150, 8
      %v2176 = vpop.permute.xlu0 %2175
      %2177 = vrot.lane.b32.xlu0 %v2152, 8
      %v2178 = vpop.permute.xlu0 %2177
      %2179 = vrot.lane.b32.xlu0 %v2153, 8
      %v2180 = vpop.permute.xlu0 %2179
      %2181 = vrot.lane.b32.xlu0 %v2155, 8
      %v2182 = vpop.permute.xlu0 %2181
      %2183 = vrot.lane.b32.xlu0 %v2156, 8
      %v2184 = vpop.permute.xlu0 %2183
      %2185 = vrot.lane.b32.xlu0 %v2158, 8
      %v2186 = vpop.permute.xlu0 %2185
      %2187 = vrot.lane.b32.xlu0 %v2159, 8
      %v2188 = vpop.permute.xlu0 %2187
      %2189 = vrot.lane.b32.xlu0 %v2161, 8
      %v2190 = vpop.permute.xlu0 %2189
      %2191 = vrot.lane.b32.xlu0 %v2162, 8
      %v2192 = vpop.permute.xlu0 %2191
      %2193 = vrot.lane.b32.xlu0 %v2164, 8
      %v2194 = vpop.permute.xlu0 %2193
      %2195 = vrot.lane.b32.xlu0 %v2165, 8
      %v2196 = vpop.permute.xlu0 %2195
      %2197 = vrot.lane.b32.xlu0 %v2167, 8
      %v2198 = vpop.permute.xlu0 %2197
      %2199 = vrot.lane.b32.xlu0 %v2168, 8
      %v2200 = vpop.permute.xlu0 %2199
      %2201 = vrot.lane.b32.xlu0 %v2170, 8
      %v2202 = vpop.permute.xlu0 %2201
      %v2227 = vunpack.c.l.b16 %v1903
      %v2228 = vunpack.c.l.b16 %v1904
      %v2229 = vunpack.c.l.b16 %v1905
      %v2230 = vunpack.c.l.b16 %v1906
      %v2231 = vunpack.c.l.b16 %v1907
      %v2232 = vunpack.c.l.b16 %v1908
      %v2233 = vunpack.c.l.b16 %v1909
      %v2234 = vunpack.c.l.b16 %v1910
      %v2235 = vunpack.c.l.b16 %v1911
      %v2236 = vunpack.c.l.b16 %v1912
      %v2237 = vunpack.c.l.b16 %v1913
      %v2238 = vunpack.c.l.b16 %v1914
      %v2239 = vunpack.c.l.b16 %v1915
      %v2240 = vunpack.c.l.b16 %v1916
      %v2241 = vunpack.c.l.b16 %v1917
      %v2242 = vunpack.c.l.b16 %v1918
      %v2243 = vunpack.c.l.b16 %v1919
      %v2244 = vunpack.c.l.b16 %v1920
      %v2245 = vunpack.c.l.b16 %v1921
      %v2246 = vunpack.c.l.b16 %v1922
      %v2247 = vunpack.c.l.b16 %v1923
      %v2248 = vunpack.c.l.b16 %v1924
      %v2249 = vunpack.c.l.b16 %v1925
      %v2250 = vunpack.c.l.b16 %v1926
      %v2251 = vpack.c.b16 %v2228, %v2227
      %v2252 = vpack.c.b16 %v2229, %v2229
      %v2253 = vpack.c.b16 %v2231, %v2230
      %v2254 = vpack.c.b16 %v2232, %v2232
      %v2255 = vpack.c.b16 %v2234, %v2233
      %v2256 = vpack.c.b16 %v2235, %v2235
      %v2257 = vpack.c.b16 %v2237, %v2236
      %v2258 = vpack.c.b16 %v2238, %v2238
      %v2259 = vpack.c.b16 %v2240, %v2239
      %v2260 = vpack.c.b16 %v2241, %v2241
      %v2261 = vpack.c.b16 %v2243, %v2242
      %v2262 = vpack.c.b16 %v2244, %v2244
      %v2263 = vpack.c.b16 %v2246, %v2245
      %v2264 = vpack.c.b16 %v2247, %v2247
      %v2265 = vpack.c.b16 %v2249, %v2248
      %v2266 = vpack.c.b16 %v2250, %v2250
      %2267 = vrot.lane.b32.xlu0 %v2251, 12
      %v2268 = vpop.permute.xlu0 %2267
      %2269 = vrot.lane.b32.xlu0 %v2252, 12
      %v2270 = vpop.permute.xlu0 %2269
      %2271 = vrot.lane.b32.xlu0 %v2253, 12
      %v2272 = vpop.permute.xlu0 %2271
      %2273 = vrot.lane.b32.xlu0 %v2254, 12
      %v2274 = vpop.permute.xlu0 %2273
      %2275 = vrot.lane.b32.xlu0 %v2255, 12
      %v2276 = vpop.permute.xlu0 %2275
      %2277 = vrot.lane.b32.xlu0 %v2256, 12
      %v2278 = vpop.permute.xlu0 %2277
      %2279 = vrot.lane.b32.xlu0 %v2257, 12
      %v2280 = vpop.permute.xlu0 %2279
      %2281 = vrot.lane.b32.xlu0 %v2258, 12
      %v2282 = vpop.permute.xlu0 %2281
      %2283 = vrot.lane.b32.xlu0 %v2259, 12
      %v2284 = vpop.permute.xlu0 %2283
      %2285 = vrot.lane.b32.xlu0 %v2260, 12
      %v2286 = vpop.permute.xlu0 %2285
      %2287 = vrot.lane.b32.xlu0 %v2261, 12
      %v2288 = vpop.permute.xlu0 %2287
      %2289 = vrot.lane.b32.xlu0 %v2262, 12
      %v2290 = vpop.permute.xlu0 %2289
      %2291 = vrot.lane.b32.xlu0 %v2263, 12
      %v2292 = vpop.permute.xlu0 %2291
      %2293 = vrot.lane.b32.xlu0 %v2264, 12
      %v2294 = vpop.permute.xlu0 %2293
      %2295 = vrot.lane.b32.xlu0 %v2265, 12
      %v2296 = vpop.permute.xlu0 %2295
      %2297 = vrot.lane.b32.xlu0 %v2266, 12
      %v2298 = vpop.permute.xlu0 %2297
      %v2299 = vpack.c.b16 %v2229, %v2228
      %v2300 = vpack.c.b16 %v2232, %v2231
      %v2301 = vpack.c.b16 %v2235, %v2234
      %v2302 = vpack.c.b16 %v2238, %v2237
      %v2303 = vpack.c.b16 %v2241, %v2240
      %v2304 = vpack.c.b16 %v2244, %v2243
      %v2305 = vpack.c.b16 %v2247, %v2246
      %v2306 = vpack.c.b16 %v2250, %v2249
      %v2308 = vshrl.u32 %v2299, 16
      %v2310 = vrot.slane %v2308, 4
      %v2311 = vshll.u32 %v2299, 16
      %v2313 = vrot.slane %v2311, 5
      %v2314 = vor.u32 %v2310, %v2313
      %v2316 = vshrl.u32 %v2300, 16
      %v2318 = vrot.slane %v2316, 4
      %v2319 = vshll.u32 %v2300, 16
      %v2321 = vrot.slane %v2319, 5
      %v2322 = vor.u32 %v2318, %v2321
      %v2324 = vshrl.u32 %v2301, 16
      %v2326 = vrot.slane %v2324, 4
      %v2327 = vshll.u32 %v2301, 16
      %v2329 = vrot.slane %v2327, 5
      %v2330 = vor.u32 %v2326, %v2329
      %v2332 = vshrl.u32 %v2302, 16
      %v2334 = vrot.slane %v2332, 4
      %v2335 = vshll.u32 %v2302, 16
      %v2337 = vrot.slane %v2335, 5
      %v2338 = vor.u32 %v2334, %v2337
      %v2340 = vshrl.u32 %v2303, 16
      %v2342 = vrot.slane %v2340, 4
      %v2343 = vshll.u32 %v2303, 16
      %v2345 = vrot.slane %v2343, 5
      %v2346 = vor.u32 %v2342, %v2345
      %v2348 = vshrl.u32 %v2304, 16
      %v2350 = vrot.slane %v2348, 4
      %v2351 = vshll.u32 %v2304, 16
      %v2353 = vrot.slane %v2351, 5
      %v2354 = vor.u32 %v2350, %v2353
      %v2356 = vshrl.u32 %v2305, 16
      %v2358 = vrot.slane %v2356, 4
      %v2359 = vshll.u32 %v2305, 16
      %v2361 = vrot.slane %v2359, 5
      %v2362 = vor.u32 %v2358, %v2361
      %v2364 = vshrl.u32 %v2306, 16
      %v2366 = vrot.slane %v2364, 4
      %v2367 = vshll.u32 %v2306, 16
      %v2369 = vrot.slane %v2367, 5
      %v2370 = vor.u32 %v2366, %v2369
      %2371 = vrot.lane.b32.xlu0 %v2314, 16
      %v2372 = vpop.permute.xlu0 %2371
      %2373 = vrot.lane.b32.xlu0 %v2322, 16
      %v2374 = vpop.permute.xlu0 %2373
      %2375 = vrot.lane.b32.xlu0 %v2330, 16
      %v2376 = vpop.permute.xlu0 %2375
      %2377 = vrot.lane.b32.xlu0 %v2338, 16
      %v2378 = vpop.permute.xlu0 %2377
      %2379 = vrot.lane.b32.xlu0 %v2346, 16
      %v2380 = vpop.permute.xlu0 %2379
      %2381 = vrot.lane.b32.xlu0 %v2354, 16
      %v2382 = vpop.permute.xlu0 %2381
      %2383 = vrot.lane.b32.xlu0 %v2362, 16
      %v2384 = vpop.permute.xlu0 %2383
      %2385 = vrot.lane.b32.xlu0 %v2370, 16
      %v2386 = vpop.permute.xlu0 %2385
      %v2395 = vunpack.c.l.b16 %v1927
      %v2396 = vunpack.c.l.b16 %v1928
      %v2397 = vunpack.c.l.b16 %v1929
      %v2398 = vunpack.c.l.b16 %v1930
      %v2399 = vunpack.c.l.b16 %v1931
      %v2400 = vunpack.c.l.b16 %v1932
      %v2401 = vunpack.c.l.b16 %v1933
      %v2402 = vunpack.c.l.b16 %v1934
      %v2403 = vpack.c.b16 %v2395, %v2395
      %v2404 = vpack.c.b16 %v2396, %v2396
      %v2405 = vpack.c.b16 %v2397, %v2397
      %v2406 = vpack.c.b16 %v2398, %v2398
      %v2407 = vpack.c.b16 %v2399, %v2399
      %v2408 = vpack.c.b16 %v2400, %v2400
      %v2409 = vpack.c.b16 %v2401, %v2401
      %v2410 = vpack.c.b16 %v2402, %v2402
      %v2411 = vrot.slane %v2299, 5
      %v2412 = vrot.slane %v2403, 5
      %v2413 = vsel %vm744, %v2411, %v2412
      %v2414 = vrot.slane %v2300, 5
      %v2415 = vrot.slane %v2404, 5
      %v2416 = vsel %vm744, %v2414, %v2415
      %v2417 = vrot.slane %v2301, 5
      %v2418 = vrot.slane %v2405, 5
      %v2419 = vsel %vm744, %v2417, %v2418
      %v2420 = vrot.slane %v2302, 5
      %v2421 = vrot.slane %v2406, 5
      %v2422 = vsel %vm744, %v2420, %v2421
      %v2423 = vrot.slane %v2303, 5
      %v2424 = vrot.slane %v2407, 5
      %v2425 = vsel %vm744, %v2423, %v2424
      %v2426 = vrot.slane %v2304, 5
      %v2427 = vrot.slane %v2408, 5
      %v2428 = vsel %vm744, %v2426, %v2427
      %v2429 = vrot.slane %v2305, 5
      %v2430 = vrot.slane %v2409, 5
      %v2431 = vsel %vm744, %v2429, %v2430
      %v2432 = vrot.slane %v2306, 5
      %v2433 = vrot.slane %v2410, 5
      %v2434 = vsel %vm744, %v2432, %v2433
      %2435 = vrot.lane.b32.xlu0 %v2411, 20
      %v2436 = vpop.permute.xlu0 %2435
      %2437 = vrot.lane.b32.xlu0 %v2413, 20
      %v2438 = vpop.permute.xlu0 %2437
      %2439 = vrot.lane.b32.xlu0 %v2414, 20
      %v2440 = vpop.permute.xlu0 %2439
      %2441 = vrot.lane.b32.xlu0 %v2416, 20
      %v2442 = vpop.permute.xlu0 %2441
      %2443 = vrot.lane.b32.xlu0 %v2417, 20
      %v2444 = vpop.permute.xlu0 %2443
      %2445 = vrot.lane.b32.xlu0 %v2419, 20
      %v2446 = vpop.permute.xlu0 %2445
      %2447 = vrot.lane.b32.xlu0 %v2420, 20
      %v2448 = vpop.permute.xlu0 %2447
      %2449 = vrot.lane.b32.xlu0 %v2422, 20
      %v2450 = vpop.permute.xlu0 %2449
      %2451 = vrot.lane.b32.xlu0 %v2423, 20
      %v2452 = vpop.permute.xlu0 %2451
      %2453 = vrot.lane.b32.xlu0 %v2425, 20
      %v2454 = vpop.permute.xlu0 %2453
      %2455 = vrot.lane.b32.xlu0 %v2426, 20
      %v2456 = vpop.permute.xlu0 %2455
      %2457 = vrot.lane.b32.xlu0 %v2428, 20
      %v2458 = vpop.permute.xlu0 %2457
      %2459 = vrot.lane.b32.xlu0 %v2429, 20
      %v2460 = vpop.permute.xlu0 %2459
      %2461 = vrot.lane.b32.xlu0 %v2431, 20
      %v2462 = vpop.permute.xlu0 %2461
      %2463 = vrot.lane.b32.xlu0 %v2432, 20
      %v2464 = vpop.permute.xlu0 %2463
      %2465 = vrot.lane.b32.xlu0 %v2434, 20
      %v2466 = vpop.permute.xlu0 %2465
      %v2491 = vunpack.c.l.b16 %v1939
      %v2492 = vunpack.c.l.b16 %v1940
      %v2493 = vunpack.c.l.b16 %v1941
      %v2494 = vunpack.c.l.b16 %v1942
      %v2495 = vunpack.c.l.b16 %v1943
      %v2496 = vunpack.c.l.b16 %v1944
      %v2497 = vunpack.c.l.b16 %v1945
      %v2498 = vunpack.c.l.b16 %v1946
      %v2499 = vunpack.c.l.b16 %v1947
      %v2500 = vunpack.c.l.b16 %v1948
      %v2501 = vunpack.c.l.b16 %v1949
      %v2502 = vunpack.c.l.b16 %v1950
      %v2503 = vunpack.c.l.b16 %v1951
      %v2504 = vunpack.c.l.b16 %v1952
      %v2505 = vunpack.c.l.b16 %v1953
      %v2506 = vunpack.c.l.b16 %v1954
      %v2507 = vunpack.c.l.b16 %v1955
      %v2508 = vunpack.c.l.b16 %v1956
      %v2509 = vunpack.c.l.b16 %v1957
      %v2510 = vunpack.c.l.b16 %v1958
      %v2511 = vunpack.c.l.b16 %v1959
      %v2512 = vunpack.c.l.b16 %v1960
      %v2513 = vunpack.c.l.b16 %v1961
      %v2514 = vunpack.c.l.b16 %v1962
      %v2515 = vpack.c.b16 %v2492, %v2491
      %v2516 = vpack.c.b16 %v2493, %v2493
      %v2517 = vpack.c.b16 %v2495, %v2494
      %v2518 = vpack.c.b16 %v2496, %v2496
      %v2519 = vpack.c.b16 %v2498, %v2497
      %v2520 = vpack.c.b16 %v2499, %v2499
      %v2521 = vpack.c.b16 %v2501, %v2500
      %v2522 = vpack.c.b16 %v2502, %v2502
      %v2523 = vpack.c.b16 %v2504, %v2503
      %v2524 = vpack.c.b16 %v2505, %v2505
      %v2525 = vpack.c.b16 %v2507, %v2506
      %v2526 = vpack.c.b16 %v2508, %v2508
      %v2527 = vpack.c.b16 %v2510, %v2509
      %v2528 = vpack.c.b16 %v2511, %v2511
      %v2529 = vpack.c.b16 %v2513, %v2512
      %v2530 = vpack.c.b16 %v2514, %v2514
      %2531 = vrot.lane.b32.xlu0 %v2515, 24
      %v2532 = vpop.permute.xlu0 %2531
      %2533 = vrot.lane.b32.xlu0 %v2516, 24
      %v2534 = vpop.permute.xlu0 %2533
      %2535 = vrot.lane.b32.xlu0 %v2517, 24
      %v2536 = vpop.permute.xlu0 %2535
      %2537 = vrot.lane.b32.xlu0 %v2518, 24
      %v2538 = vpop.permute.xlu0 %2537
      %2539 = vrot.lane.b32.xlu0 %v2519, 24
      %v2540 = vpop.permute.xlu0 %2539
      %2541 = vrot.lane.b32.xlu0 %v2520, 24
      %v2542 = vpop.permute.xlu0 %2541
      %2543 = vrot.lane.b32.xlu0 %v2521, 24
      %v2544 = vpop.permute.xlu0 %2543
      %2545 = vrot.lane.b32.xlu0 %v2522, 24
      %v2546 = vpop.permute.xlu0 %2545
      %2547 = vrot.lane.b32.xlu0 %v2523, 24
      %v2548 = vpop.permute.xlu0 %2547
      %2549 = vrot.lane.b32.xlu0 %v2524, 24
      %v2550 = vpop.permute.xlu0 %2549
      %2551 = vrot.lane.b32.xlu0 %v2525, 24
      %v2552 = vpop.permute.xlu0 %2551
      %2553 = vrot.lane.b32.xlu0 %v2526, 24
      %v2554 = vpop.permute.xlu0 %2553
      %2555 = vrot.lane.b32.xlu0 %v2527, 24
      %v2556 = vpop.permute.xlu0 %2555
      %2557 = vrot.lane.b32.xlu0 %v2528, 24
      %v2558 = vpop.permute.xlu0 %2557
      %2559 = vrot.lane.b32.xlu0 %v2529, 24
      %v2560 = vpop.permute.xlu0 %2559
      %2561 = vrot.lane.b32.xlu0 %v2530, 24
      %v2562 = vpop.permute.xlu0 %2561
      %v2563 = vpack.c.b16 %v2493, %v2492
      %v2564 = vpack.c.b16 %v2496, %v2495
      %v2565 = vpack.c.b16 %v2499, %v2498
      %v2566 = vpack.c.b16 %v2502, %v2501
      %v2567 = vpack.c.b16 %v2505, %v2504
      %v2568 = vpack.c.b16 %v2508, %v2507
      %v2569 = vpack.c.b16 %v2511, %v2510
      %v2570 = vpack.c.b16 %v2514, %v2513
      %v2572 = vshrl.u32 %v2563, 16
      %v2574 = vrot.slane %v2572, 4
      %v2575 = vshll.u32 %v2563, 16
      %v2577 = vrot.slane %v2575, 5
      %v2578 = vor.u32 %v2574, %v2577
      %v2580 = vshrl.u32 %v2564, 16
      %v2582 = vrot.slane %v2580, 4
      %v2583 = vshll.u32 %v2564, 16
      %v2585 = vrot.slane %v2583, 5
      %v2586 = vor.u32 %v2582, %v2585
      %v2588 = vshrl.u32 %v2565, 16
      %v2590 = vrot.slane %v2588, 4
      %v2591 = vshll.u32 %v2565, 16
      %v2593 = vrot.slane %v2591, 5
      %v2594 = vor.u32 %v2590, %v2593
      %v2596 = vshrl.u32 %v2566, 16
      %v2598 = vrot.slane %v2596, 4
      %v2599 = vshll.u32 %v2566, 16
      %v2601 = vrot.slane %v2599, 5
      %v2602 = vor.u32 %v2598, %v2601
      %v2604 = vshrl.u32 %v2567, 16
      %v2606 = vrot.slane %v2604, 4
      %v2607 = vshll.u32 %v2567, 16
      %v2609 = vrot.slane %v2607, 5
      %v2610 = vor.u32 %v2606, %v2609
      %v2612 = vshrl.u32 %v2568, 16
      %v2614 = vrot.slane %v2612, 4
      %v2615 = vshll.u32 %v2568, 16
      %v2617 = vrot.slane %v2615, 5
      %v2618 = vor.u32 %v2614, %v2617
      %v2620 = vshrl.u32 %v2569, 16
      %v2622 = vrot.slane %v2620, 4
      %v2623 = vshll.u32 %v2569, 16
      %v2625 = vrot.slane %v2623, 5
      %v2626 = vor.u32 %v2622, %v2625
      %v2628 = vshrl.u32 %v2570, 16
      %v2630 = vrot.slane %v2628, 4
      %v2631 = vshll.u32 %v2570, 16
      %v2633 = vrot.slane %v2631, 5
      %v2634 = vor.u32 %v2630, %v2633
      %2635 = vrot.lane.b32.xlu0 %v2578, 28
      %v2636 = vpop.permute.xlu0 %2635
      %2637 = vrot.lane.b32.xlu0 %v2586, 28
      %v2638 = vpop.permute.xlu0 %2637
      %2639 = vrot.lane.b32.xlu0 %v2594, 28
      %v2640 = vpop.permute.xlu0 %2639
      %2641 = vrot.lane.b32.xlu0 %v2602, 28
      %v2642 = vpop.permute.xlu0 %2641
      %2643 = vrot.lane.b32.xlu0 %v2610, 28
      %v2644 = vpop.permute.xlu0 %2643
      %2645 = vrot.lane.b32.xlu0 %v2618, 28
      %v2646 = vpop.permute.xlu0 %2645
      %2647 = vrot.lane.b32.xlu0 %v2626, 28
      %v2648 = vpop.permute.xlu0 %2647
      %2649 = vrot.lane.b32.xlu0 %v2634, 28
      %v2650 = vpop.permute.xlu0 %2649
      %v2659 = vunpack.c.l.b16 %v1963
      %v2660 = vunpack.c.l.b16 %v1964
      %v2661 = vunpack.c.l.b16 %v1965
      %v2662 = vunpack.c.l.b16 %v1966
      %v2663 = vunpack.c.l.b16 %v1967
      %v2664 = vunpack.c.l.b16 %v1968
      %v2665 = vunpack.c.l.b16 %v1969
      %v2666 = vunpack.c.l.b16 %v1970
      %v2667 = vpack.c.b16 %v2659, %v2659
      %v2668 = vpack.c.b16 %v2660, %v2660
      %v2669 = vpack.c.b16 %v2661, %v2661
      %v2670 = vpack.c.b16 %v2662, %v2662
      %v2671 = vpack.c.b16 %v2663, %v2663
      %v2672 = vpack.c.b16 %v2664, %v2664
      %v2673 = vpack.c.b16 %v2665, %v2665
      %v2674 = vpack.c.b16 %v2666, %v2666
      %v2675 = vrot.slane %v2563, 5
      %v2676 = vrot.slane %v2667, 5
      %v2677 = vsel %vm744, %v2675, %v2676
      %v2678 = vrot.slane %v2564, 5
      %v2679 = vrot.slane %v2668, 5
      %v2680 = vsel %vm744, %v2678, %v2679
      %v2681 = vrot.slane %v2565, 5
      %v2682 = vrot.slane %v2669, 5
      %v2683 = vsel %vm744, %v2681, %v2682
      %v2684 = vrot.slane %v2566, 5
      %v2685 = vrot.slane %v2670, 5
      %v2686 = vsel %vm744, %v2684, %v2685
      %v2687 = vrot.slane %v2567, 5
      %v2688 = vrot.slane %v2671, 5
      %v2689 = vsel %vm744, %v2687, %v2688
      %v2690 = vrot.slane %v2568, 5
      %v2691 = vrot.slane %v2672, 5
      %v2692 = vsel %vm744, %v2690, %v2691
      %v2693 = vrot.slane %v2569, 5
      %v2694 = vrot.slane %v2673, 5
      %v2695 = vsel %vm744, %v2693, %v2694
      %v2696 = vrot.slane %v2570, 5
      %v2697 = vrot.slane %v2674, 5
      %v2698 = vsel %vm744, %v2696, %v2697
      %2699 = vrot.lane.b32.xlu0 %v2675, 32
      %v2700 = vpop.permute.xlu0 %2699
      %2701 = vrot.lane.b32.xlu0 %v2677, 32
      %v2702 = vpop.permute.xlu0 %2701
      %2703 = vrot.lane.b32.xlu0 %v2678, 32
      %v2704 = vpop.permute.xlu0 %2703
      %2705 = vrot.lane.b32.xlu0 %v2680, 32
      %v2706 = vpop.permute.xlu0 %2705
      %2707 = vrot.lane.b32.xlu0 %v2681, 32
      %v2708 = vpop.permute.xlu0 %2707
      %2709 = vrot.lane.b32.xlu0 %v2683, 32
      %v2710 = vpop.permute.xlu0 %2709
      %2711 = vrot.lane.b32.xlu0 %v2684, 32
      %v2712 = vpop.permute.xlu0 %2711
      %2713 = vrot.lane.b32.xlu0 %v2686, 32
      %v2714 = vpop.permute.xlu0 %2713
      %2715 = vrot.lane.b32.xlu0 %v2687, 32
      %v2716 = vpop.permute.xlu0 %2715
      %2717 = vrot.lane.b32.xlu0 %v2689, 32
      %v2718 = vpop.permute.xlu0 %2717
      %2719 = vrot.lane.b32.xlu0 %v2690, 32
      %v2720 = vpop.permute.xlu0 %2719
      %2721 = vrot.lane.b32.xlu0 %v2692, 32
      %v2722 = vpop.permute.xlu0 %2721
      %2723 = vrot.lane.b32.xlu0 %v2693, 32
      %v2724 = vpop.permute.xlu0 %2723
      %2725 = vrot.lane.b32.xlu0 %v2695, 32
      %v2726 = vpop.permute.xlu0 %2725
      %2727 = vrot.lane.b32.xlu0 %v2696, 32
      %v2728 = vpop.permute.xlu0 %2727
      %2729 = vrot.lane.b32.xlu0 %v2698, 32
      %v2730 = vpop.permute.xlu0 %2729
      %v2733 = vsel %vm345, %v2019, %v2108
      %v2735 = vsel %vm345, %v2020, %v2108
      %v2738 = vsel %vm345, %v2021, %v2110
      %v2740 = vsel %vm345, %v2022, %v2110
      %v2743 = vsel %vm345, %v2023, %v2112
      %v2745 = vsel %vm345, %v2024, %v2112
      %v2748 = vsel %vm345, %v2025, %v2114
      %v2750 = vsel %vm345, %v2026, %v2114
      %v2753 = vsel %vm345, %v2027, %v2116
      %v2755 = vsel %vm345, %v2028, %v2116
      %v2758 = vsel %vm345, %v2029, %v2118
      %v2760 = vsel %vm345, %v2030, %v2118
      %v2763 = vsel %vm345, %v2031, %v2120
      %v2765 = vsel %vm345, %v2032, %v2120
      %v2768 = vsel %vm345, %v2033, %v2122
      %v2770 = vsel %vm345, %v2034, %v2122
      %v2772 = vsel %vm1369, %v2733, %v2172
      %v2774 = vsel %vm1369, %v2735, %v2174
      %v2776 = vsel %vm1369, %v2738, %v2176
      %v2778 = vsel %vm1369, %v2740, %v2178
      %v2780 = vsel %vm1369, %v2743, %v2180
      %v2782 = vsel %vm1369, %v2745, %v2182
      %v2784 = vsel %vm1369, %v2748, %v2184
      %v2786 = vsel %vm1369, %v2750, %v2186
      %v2788 = vsel %vm1369, %v2753, %v2188
      %v2790 = vsel %vm1369, %v2755, %v2190
      %v2792 = vsel %vm1369, %v2758, %v2192
      %v2794 = vsel %vm1369, %v2760, %v2194
      %v2796 = vsel %vm1369, %v2763, %v2196
      %v2798 = vsel %vm1369, %v2765, %v2198
      %v2800 = vsel %vm1369, %v2768, %v2200
      %v2802 = vsel %vm1369, %v2770, %v2202
      %v2804 = vsel %vm1402, %v2772, %v2268
      %v2806 = vsel %vm1402, %v2774, %v2270
      %v2808 = vsel %vm1402, %v2776, %v2272
      %v2810 = vsel %vm1402, %v2778, %v2274
      %v2812 = vsel %vm1402, %v2780, %v2276
      %v2814 = vsel %vm1402, %v2782, %v2278
      %v2816 = vsel %vm1402, %v2784, %v2280
      %v2818 = vsel %vm1402, %v2786, %v2282
      %v2820 = vsel %vm1402, %v2788, %v2284
      %v2822 = vsel %vm1402, %v2790, %v2286
      %v2824 = vsel %vm1402, %v2792, %v2288
      %v2826 = vsel %vm1402, %v2794, %v2290
      %v2828 = vsel %vm1402, %v2796, %v2292
      %v2830 = vsel %vm1402, %v2798, %v2294
      %v2832 = vsel %vm1402, %v2800, %v2296
      %v2834 = vsel %vm1402, %v2802, %v2298
      %v2836 = vsel %vm1435, %v2804, %v2372
      %v2837 = vsel %vm1435, %v2806, %v2372
      %v2839 = vsel %vm1435, %v2808, %v2374
      %v2840 = vsel %vm1435, %v2810, %v2374
      %v2842 = vsel %vm1435, %v2812, %v2376
      %v2843 = vsel %vm1435, %v2814, %v2376
      %v2845 = vsel %vm1435, %v2816, %v2378
      %v2846 = vsel %vm1435, %v2818, %v2378
      %v2848 = vsel %vm1435, %v2820, %v2380
      %v2849 = vsel %vm1435, %v2822, %v2380
      %v2851 = vsel %vm1435, %v2824, %v2382
      %v2852 = vsel %vm1435, %v2826, %v2382
      %v2854 = vsel %vm1435, %v2828, %v2384
      %v2855 = vsel %vm1435, %v2830, %v2384
      %v2857 = vsel %vm1435, %v2832, %v2386
      %v2858 = vsel %vm1435, %v2834, %v2386
      %v2860 = vsel %vm1460, %v2836, %v2436
      %v2862 = vsel %vm1460, %v2837, %v2438
      %v2864 = vsel %vm1460, %v2839, %v2440
      %v2866 = vsel %vm1460, %v2840, %v2442
      %v2868 = vsel %vm1460, %v2842, %v2444
      %v2870 = vsel %vm1460, %v2843, %v2446
      %v2872 = vsel %vm1460, %v2845, %v2448
      %v2874 = vsel %vm1460, %v2846, %v2450
      %v2876 = vsel %vm1460, %v2848, %v2452
      %v2878 = vsel %vm1460, %v2849, %v2454
      %v2880 = vsel %vm1460, %v2851, %v2456
      %v2882 = vsel %vm1460, %v2852, %v2458
      %v2884 = vsel %vm1460, %v2854, %v2460
      %v2886 = vsel %vm1460, %v2855, %v2462
      %v2888 = vsel %vm1460, %v2857, %v2464
      %v2890 = vsel %vm1460, %v2858, %v2466
      %v2892 = vsel %vm1493, %v2860, %v2532
      %v2894 = vsel %vm1493, %v2862, %v2534
      %v2896 = vsel %vm1493, %v2864, %v2536
      %v2898 = vsel %vm1493, %v2866, %v2538
      %v2900 = vsel %vm1493, %v2868, %v2540
      %v2902 = vsel %vm1493, %v2870, %v2542
      %v2904 = vsel %vm1493, %v2872, %v2544
      %v2906 = vsel %vm1493, %v2874, %v2546
      %v2908 = vsel %vm1493, %v2876, %v2548
      %v2910 = vsel %vm1493, %v2878, %v2550
      %v2912 = vsel %vm1493, %v2880, %v2552
      %v2914 = vsel %vm1493, %v2882, %v2554
      %v2916 = vsel %vm1493, %v2884, %v2556
      %v2918 = vsel %vm1493, %v2886, %v2558
      %v2920 = vsel %vm1493, %v2888, %v2560
      %v2922 = vsel %vm1493, %v2890, %v2562
      %v2924 = vsel %vm1526, %v2892, %v2636
      %v2925 = vsel %vm1526, %v2894, %v2636
      %v2927 = vsel %vm1526, %v2896, %v2638
      %v2928 = vsel %vm1526, %v2898, %v2638
      %v2930 = vsel %vm1526, %v2900, %v2640
      %v2931 = vsel %vm1526, %v2902, %v2640
      %v2933 = vsel %vm1526, %v2904, %v2642
      %v2934 = vsel %vm1526, %v2906, %v2642
      %v2936 = vsel %vm1526, %v2908, %v2644
      %v2937 = vsel %vm1526, %v2910, %v2644
      %v2939 = vsel %vm1526, %v2912, %v2646
      %v2940 = vsel %vm1526, %v2914, %v2646
      %v2942 = vsel %vm1526, %v2916, %v2648
      %v2943 = vsel %vm1526, %v2918, %v2648
      %v2945 = vsel %vm1526, %v2920, %v2650
      %v2946 = vsel %vm1526, %v2922, %v2650
      %v2948 = vsel %vm1551, %v2924, %v2700
      %v2950 = vsel %vm1551, %v2925, %v2702
      %v2952 = vsel %vm1551, %v2927, %v2704
      %v2954 = vsel %vm1551, %v2928, %v2706
      %v2956 = vsel %vm1551, %v2930, %v2708
      %v2958 = vsel %vm1551, %v2931, %v2710
      %v2960 = vsel %vm1551, %v2933, %v2712
      %v2962 = vsel %vm1551, %v2934, %v2714
      %v2964 = vsel %vm1551, %v2936, %v2716
      %v2966 = vsel %vm1551, %v2937, %v2718
      %v2968 = vsel %vm1551, %v2939, %v2720
      %v2970 = vsel %vm1551, %v2940, %v2722
      %v2972 = vsel %vm1551, %v2942, %v2724
      %v2974 = vsel %vm1551, %v2943, %v2726
      %v2976 = vsel %vm1551, %v2945, %v2728
      %v2978 = vsel %vm1551, %v2946, %v2730
      %v2979 = vshrl.u32 %v2948, 16
      %v2981 = vrot.slane %v2979, 3
      %v2982 = vshll.u32 %v2948, 16
      %v2984 = vrot.slane %v2982, 4
      %v2985 = vor.u32 %v2981, %v2984
      %v2986 = vshrl.u32 %v2950, 16
      %v2988 = vrot.slane %v2986, 3
      %v2989 = vshll.u32 %v2950, 16
      %v2991 = vrot.slane %v2989, 4
      %v2992 = vor.u32 %v2988, %v2991
      %v2993 = vsel %vm1584, %v2985, %v2992
      %v2994 = vshrl.u32 %v2952, 16
      %v2996 = vrot.slane %v2994, 3
      %v2997 = vshll.u32 %v2952, 16
      %v2999 = vrot.slane %v2997, 4
      %v3000 = vor.u32 %v2996, %v2999
      %v3001 = vshrl.u32 %v2954, 16
      %v3003 = vrot.slane %v3001, 3
      %v3004 = vshll.u32 %v2954, 16
      %v3006 = vrot.slane %v3004, 4
      %v3007 = vor.u32 %v3003, %v3006
      %v3008 = vsel %vm1584, %v3000, %v3007
      %v3009 = vshrl.u32 %v2956, 16
      %v3011 = vrot.slane %v3009, 3
      %v3012 = vshll.u32 %v2956, 16
      %v3014 = vrot.slane %v3012, 4
      %v3015 = vor.u32 %v3011, %v3014
      %v3016 = vshrl.u32 %v2958, 16
      %v3018 = vrot.slane %v3016, 3
      %v3019 = vshll.u32 %v2958, 16
      %v3021 = vrot.slane %v3019, 4
      %v3022 = vor.u32 %v3018, %v3021
      %v3023 = vsel %vm1584, %v3015, %v3022
      %v3024 = vshrl.u32 %v2960, 16
      %v3026 = vrot.slane %v3024, 3
      %v3027 = vshll.u32 %v2960, 16
      %v3029 = vrot.slane %v3027, 4
      %v3030 = vor.u32 %v3026, %v3029
      %v3031 = vshrl.u32 %v2962, 16
      %v3033 = vrot.slane %v3031, 3
      %v3034 = vshll.u32 %v2962, 16
      %v3036 = vrot.slane %v3034, 4
      %v3037 = vor.u32 %v3033, %v3036
      %v3038 = vsel %vm1584, %v3030, %v3037
      %v3039 = vshrl.u32 %v2964, 16
      %v3041 = vrot.slane %v3039, 3
      %v3042 = vshll.u32 %v2964, 16
      %v3044 = vrot.slane %v3042, 4
      %v3045 = vor.u32 %v3041, %v3044
      %v3046 = vshrl.u32 %v2966, 16
      %v3048 = vrot.slane %v3046, 3
      %v3049 = vshll.u32 %v2966, 16
      %v3051 = vrot.slane %v3049, 4
      %v3052 = vor.u32 %v3048, %v3051
      %v3053 = vsel %vm1584, %v3045, %v3052
      %v3054 = vshrl.u32 %v2968, 16
      %v3056 = vrot.slane %v3054, 3
      %v3057 = vshll.u32 %v2968, 16
      %v3059 = vrot.slane %v3057, 4
      %v3060 = vor.u32 %v3056, %v3059
      %v3061 = vshrl.u32 %v2970, 16
      %v3063 = vrot.slane %v3061, 3
      %v3064 = vshll.u32 %v2970, 16
      %v3066 = vrot.slane %v3064, 4
      %v3067 = vor.u32 %v3063, %v3066
      %v3068 = vsel %vm1584, %v3060, %v3067
      %v3069 = vshrl.u32 %v2972, 16
      %v3071 = vrot.slane %v3069, 3
      %v3072 = vshll.u32 %v2972, 16
      %v3074 = vrot.slane %v3072, 4
      %v3075 = vor.u32 %v3071, %v3074
      %v3076 = vshrl.u32 %v2974, 16
      %v3078 = vrot.slane %v3076, 3
      %v3079 = vshll.u32 %v2974, 16
      %v3081 = vrot.slane %v3079, 4
      %v3082 = vor.u32 %v3078, %v3081
      %v3083 = vsel %vm1584, %v3075, %v3082
      %v3084 = vshrl.u32 %v2976, 16
      %v3086 = vrot.slane %v3084, 3
      %v3087 = vshll.u32 %v2976, 16
      %v3089 = vrot.slane %v3087, 4
      %v3090 = vor.u32 %v3086, %v3089
      %v3091 = vshrl.u32 %v2978, 16
      %v3093 = vrot.slane %v3091, 3
      %v3094 = vshll.u32 %v2978, 16
      %v3096 = vrot.slane %v3094, 4
      %v3097 = vor.u32 %v3093, %v3096
      %v3098 = vsel %vm1584, %v3090, %v3097
      %v3100 = vsel %vm1720, %v2993, 0
      %v3103 = vsel %vm1720, %v3008, 0
      %v3106 = vsel %vm1720, %v3023, 0
      %v3109 = vsel %vm1720, %v3038, 0
      %v3112 = vsel %vm1720, %v3053, 0
      %v3115 = vsel %vm1720, %v3068, 0
      %v3118 = vsel %vm1720, %v3083, 0
      %v3121 = vsel %vm1720, %v3098, 0
      %3123 = vmatpush.bf16.msra.mxu0 0
      %3124 = vmatpush.bf16.msra.mxu0 0
      %3125 = vmatpush.bf16.msra.mxu0 0
      %3126 = vmatpush.bf16.msra.mxu0 0
      %3127 = vmatpush.bf16.msra.mxu0 0
      %3128 = vmatpush.bf16.msra.mxu0 %v1747
      %3129 = vmatpush.bf16.msra.mxu0 %v1716
      %3130 = vmatpush.bf16.msra.mxu0 %v1715
      %3131 = vmatmul.bf16.gmra.mxu0 %v3100
      %v3132 = vpop.f32.mrf.mxu0
      %v3133 = vadd.f32 %v459, %v3132
      %v3134 = vpop.f32.mrf.mxu0
      %v3135 = vadd.f32 %v459, %v3134
      %3136 = vmatmul.bf16.gmra.mxu0 %v3103
      %v3137 = vpop.f32.mrf.mxu0
      %v3138 = vadd.f32 %v459, %v3137
      %v3139 = vpop.f32.mrf.mxu0
      %v3140 = vadd.f32 %v459, %v3139
      %3141 = vmatmul.bf16.gmra.mxu0 %v3106
      %v3142 = vpop.f32.mrf.mxu0
      %v3143 = vadd.f32 %v459, %v3142
      %v3144 = vpop.f32.mrf.mxu0
      %v3145 = vadd.f32 %v459, %v3144
      %3146 = vmatmul.bf16.gmra.mxu0 %v3109
      %v3147 = vpop.f32.mrf.mxu0
      %v3148 = vadd.f32 %v459, %v3147
      %v3149 = vpop.f32.mrf.mxu0
      %v3150 = vadd.f32 %v459, %v3149
      %3151 = vmatmul.bf16.gmra.mxu0 %v3112
      %v3152 = vpop.f32.mrf.mxu0
      %v3153 = vadd.f32 %v459, %v3152
      %v3154 = vpop.f32.mrf.mxu0
      %v3155 = vadd.f32 %v459, %v3154
      %3156 = vmatmul.bf16.gmra.mxu0 %v3115
      %v3157 = vpop.f32.mrf.mxu0
      %v3158 = vadd.f32 %v459, %v3157
      %v3159 = vpop.f32.mrf.mxu0
      %v3160 = vadd.f32 %v459, %v3159
      %3161 = vmatmul.bf16.gmra.mxu0 %v3118
      %v3162 = vpop.f32.mrf.mxu0
      %v3163 = vadd.f32 %v459, %v3162
      %v3164 = vpop.f32.mrf.mxu0
      %v3165 = vadd.f32 %v459, %v3164
      %3166 = vmatmul.bf16.gmra.mxu0 %v3121
      %v3167 = vpop.f32.mrf.mxu0
      %v3168 = vadd.f32 %v459, %v3167
      %v3169 = vpop.f32.mrf.mxu0
      %v3170 = vadd.f32 %v459, %v3169
      %3171 = vdwg.mxu0
      %vm3172 = vcmp.ge.f32.partialorder %v3133, 0.0
      %vm3173 = vcmp.ge.f32.partialorder %v3135, 0.0
      %vm3174 = vcmp.ge.f32.partialorder %v3138, 0.0
      %vm3175 = vcmp.ge.f32.partialorder %v3140, 0.0
      %vm3176 = vcmp.ge.f32.partialorder %v3143, 0.0
      %vm3177 = vcmp.ge.f32.partialorder %v3145, 0.0
      %vm3178 = vcmp.ge.f32.partialorder %v3148, 0.0
      %vm3179 = vcmp.ge.f32.partialorder %v3150, 0.0
      %vm3180 = vcmp.ge.f32.partialorder %v3153, 0.0
      %vm3181 = vcmp.ge.f32.partialorder %v3155, 0.0
      %vm3182 = vcmp.ge.f32.partialorder %v3158, 0.0
      %vm3183 = vcmp.ge.f32.partialorder %v3160, 0.0
      %vm3184 = vcmp.ge.f32.partialorder %v3163, 0.0
      %vm3185 = vcmp.ge.f32.partialorder %v3165, 0.0
      %vm3186 = vcmp.ge.f32.partialorder %v3168, 0.0
      %vm3187 = vcmp.ge.f32.partialorder %v3170, 0.0
      %v3188 = vmul.f32 %v3133, 0.01
      %v3189 = vmul.f32 %v3135, 0.01
      %v3190 = vmul.f32 %v3138, 0.01
      %v3191 = vmul.f32 %v3140, 0.01
      %v3192 = vmul.f32 %v3143, 0.01
      %v3193 = vmul.f32 %v3145, 0.01
      %v3194 = vmul.f32 %v3148, 0.01
      %v3195 = vmul.f32 %v3150, 0.01
      %v3196 = vmul.f32 %v3153, 0.01
      %v3197 = vmul.f32 %v3155, 0.01
      %v3198 = vmul.f32 %v3158, 0.01
      %v3199 = vmul.f32 %v3160, 0.01
      %v3200 = vmul.f32 %v3163, 0.01
      %v3201 = vmul.f32 %v3165, 0.01
      %v3202 = vmul.f32 %v3168, 0.01
      %v3203 = vmul.f32 %v3170, 0.01
      %v3204 = vsel %vm3172, %v3133, %v3188
      %v3205 = vsel %vm3173, %v3135, %v3189
      %v3206 = vsel %vm3174, %v3138, %v3190
      %v3207 = vsel %vm3175, %v3140, %v3191
      %v3208 = vsel %vm3176, %v3143, %v3192
      %v3209 = vsel %vm3177, %v3145, %v3193
      %v3210 = vsel %vm3178, %v3148, %v3194
      %v3211 = vsel %vm3179, %v3150, %v3195
      %v3212 = vsel %vm3180, %v3153, %v3196
      %v3213 = vsel %vm3181, %v3155, %v3197
      %v3214 = vsel %vm3182, %v3158, %v3198
      %v3215 = vsel %vm3183, %v3160, %v3199
      %v3216 = vsel %vm3184, %v3163, %v3200
      %v3217 = vsel %vm3185, %v3165, %v3201
      %v3218 = vsel %vm3186, %v3168, %v3202
      %v3219 = vsel %vm3187, %v3170, %v3203
      %s3220 = smul.u32 %s1899, 40
      %s3221 = scalar_lea.vmem [#allocation3], %s3220
      %3222 = vst.msk [vmem:[%s3221 + $0x10] sm:$0xff] %vm345, %v3204
      %3223 = vst.msk [vmem:[%s3221 + $0x18] sm:$0xff] %vm345, %v3205
      %3224 = vst.msk [vmem:[%s3221 + $0x38] sm:$0xff] %vm345, %v3206
      %3225 = vst.msk [vmem:[%s3221 + $0x40] sm:$0xff] %vm345, %v3207
      %3226 = vst.msk [vmem:[%s3221 + $0x60] sm:$0xff] %vm345, %v3208
      %3227 = vst.msk [vmem:[%s3221 + $0x68] sm:$0xff] %vm345, %v3209
      %3228 = vst.msk [vmem:[%s3221 + $0x88] sm:$0xff] %vm345, %v3210
      %3229 = vst.msk [vmem:[%s3221 + $0x90] sm:$0xff] %vm345, %v3211
      %3230 = vst.msk [vmem:[%s3221 + $0xb0] sm:$0xff] %vm345, %v3212
      %3231 = vst.msk [vmem:[%s3221 + $0xb8] sm:$0xff] %vm345, %v3213
      %3232 = vst.msk [vmem:[%s3221 + $0xd8] sm:$0xff] %vm345, %v3214
      %3233 = vst.msk [vmem:[%s3221 + $0xe0] sm:$0xff] %vm345, %v3215
      %3234 = vst.msk [vmem:[%s3221 + $0x100] sm:$0xff] %vm345, %v3216
      %3235 = vst.msk [vmem:[%s3221 + $0x108] sm:$0xff] %vm345, %v3217
      %3236 = vst.msk [vmem:[%s3221 + $0x128] sm:$0xff] %vm345, %v3218
      %3237 = vst.msk [vmem:[%s3221 + $0x130] sm:$0xff] %vm345, %v3219
      %s3238 = scalar_lea.vmem [#allocation3], 15
      %v3239 = vld [vmem:[%s3238] ss:$2 sm:$0xff]
      %s3240 = scalar_lea.vmem [#allocation3], 95
      %v3241 = vld [vmem:[%s3240] ss:$2 sm:$0xff]
      %s3242 = scalar_lea.vmem [#allocation3], 175
      %v3243 = vld [vmem:[%s3242] ss:$2 sm:$0xff]
      %s3244 = scalar_lea.vmem [#allocation3], 255
      %v3245 = vld [vmem:[%s3244] ss:$2 sm:$0xff]
      %s3246 = scalar_lea.vmem [#allocation3], 335
      %v3247 = vld [vmem:[%s3246] ss:$2 sm:$0xff]
      %s3248 = scalar_lea.vmem [#allocation3], 415
      %v3249 = vld [vmem:[%s3248] ss:$2 sm:$0xff]
      %s3250 = scalar_lea.vmem [#allocation3], 495
      %v3251 = vld [vmem:[%s3250] ss:$2 sm:$0xff]
      %s3252 = scalar_lea.vmem [#allocation3], 575
      %v3253 = vld [vmem:[%s3252] ss:$2 sm:$0xff]
      %s3254 = scalar_lea.vmem [#allocation3], 16
      %v3255 = vld [vmem:[%s3254] ss:$2 sm:$0xff]
      %s3256 = scalar_lea.vmem [#allocation3], 96
      %v3257 = vld [vmem:[%s3256] ss:$2 sm:$0xff]
      %s3258 = scalar_lea.vmem [#allocation3], 176
      %v3259 = vld [vmem:[%s3258] ss:$2 sm:$0xff]
      %s3260 = scalar_lea.vmem [#allocation3], 256
      %v3261 = vld [vmem:[%s3260] ss:$2 sm:$0xff]
      %s3262 = scalar_lea.vmem [#allocation3], 336
      %v3263 = vld [vmem:[%s3262] ss:$2 sm:$0xff]
      %s3264 = scalar_lea.vmem [#allocation3], 416
      %v3265 = vld [vmem:[%s3264] ss:$2 sm:$0xff]
      %s3266 = scalar_lea.vmem [#allocation3], 496
      %v3267 = vld [vmem:[%s3266] ss:$2 sm:$0xff]
      %s3268 = scalar_lea.vmem [#allocation3], 576
      %v3269 = vld [vmem:[%s3268] ss:$2 sm:$0xff]
      %s3270 = scalar_lea.vmem [#allocation3], 17
      %v3271 = vld [vmem:[%s3270] ss:$2 sm:$0xff]
      %s3272 = scalar_lea.vmem [#allocation3], 97
      %v3273 = vld [vmem:[%s3272] ss:$2 sm:$0xff]
      %s3274 = scalar_lea.vmem [#allocation3], 177
      %v3275 = vld [vmem:[%s3274] ss:$2 sm:$0xff]
      %s3276 = scalar_lea.vmem [#allocation3], 257
      %v3277 = vld [vmem:[%s3276] ss:$2 sm:$0xff]
      %s3278 = scalar_lea.vmem [#allocation3], 337
      %v3279 = vld [vmem:[%s3278] ss:$2 sm:$0xff]
      %s3280 = scalar_lea.vmem [#allocation3], 417
      %v3281 = vld [vmem:[%s3280] ss:$2 sm:$0xff]
      %s3282 = scalar_lea.vmem [#allocation3], 497
      %v3283 = vld [vmem:[%s3282] ss:$2 sm:$0xff]
      %s3284 = scalar_lea.vmem [#allocation3], 577
      %v3285 = vld [vmem:[%s3284] ss:$2 sm:$0xff]
      %s3286 = scalar_lea.vmem %s354, 15 [#allocation3]
      %v3287 = vld [vmem:[%s3286] ss:$2 sm:$0xff]
      %s3288 = scalar_lea.vmem %s354, 95 [#allocation3]
      %v3289 = vld [vmem:[%s3288] ss:$2 sm:$0xff]
      %s3290 = scalar_lea.vmem %s354, 175 [#allocation3]
      %v3291 = vld [vmem:[%s3290] ss:$2 sm:$0xff]
      %s3292 = scalar_lea.vmem %s354, 255 [#allocation3]
      %v3293 = vld [vmem:[%s3292] ss:$2 sm:$0xff]
      %s3294 = scalar_lea.vmem %s354, 335 [#allocation3]
      %v3295 = vld [vmem:[%s3294] ss:$2 sm:$0xff]
      %s3296 = scalar_lea.vmem %s354, 415 [#allocation3]
      %v3297 = vld [vmem:[%s3296] ss:$2 sm:$0xff]
      %s3298 = scalar_lea.vmem %s354, 495 [#allocation3]
      %v3299 = vld [vmem:[%s3298] ss:$2 sm:$0xff]
      %s3300 = scalar_lea.vmem %s354, 575 [#allocation3]
      %v3301 = vld [vmem:[%s3300] ss:$2 sm:$0xff]
      %s3302 = scalar_lea.vmem %s354, 16 [#allocation3]
      %v3303 = vld [vmem:[%s3302] ss:$2 sm:$0xff]
      %s3304 = scalar_lea.vmem %s354, 96 [#allocation3]
      %v3305 = vld [vmem:[%s3304] ss:$2 sm:$0xff]
      %s3306 = scalar_lea.vmem %s354, 176 [#allocation3]
      %v3307 = vld [vmem:[%s3306] ss:$2 sm:$0xff]
      %s3308 = scalar_lea.vmem %s354, 256 [#allocation3]
      %v3309 = vld [vmem:[%s3308] ss:$2 sm:$0xff]
      %s3310 = scalar_lea.vmem %s354, 336 [#allocation3]
      %v3311 = vld [vmem:[%s3310] ss:$2 sm:$0xff]
      %s3312 = scalar_lea.vmem %s354, 416 [#allocation3]
      %v3313 = vld [vmem:[%s3312] ss:$2 sm:$0xff]
      %s3314 = scalar_lea.vmem %s354, 496 [#allocation3]
      %v3315 = vld [vmem:[%s3314] ss:$2 sm:$0xff]
      %s3316 = scalar_lea.vmem %s354, 576 [#allocation3]
      %v3317 = vld [vmem:[%s3316] ss:$2 sm:$0xff]
      %s3318 = scalar_lea.vmem %s354, 17 [#allocation3]
      %v3319 = vld [vmem:[%s3318] ss:$2 sm:$0xff]
      %s3320 = scalar_lea.vmem %s354, 97 [#allocation3]
      %v3321 = vld [vmem:[%s3320] ss:$2 sm:$0xff]
      %s3322 = scalar_lea.vmem %s354, 177 [#allocation3]
      %v3323 = vld [vmem:[%s3322] ss:$2 sm:$0xff]
      %s3324 = scalar_lea.vmem %s354, 257 [#allocation3]
      %v3325 = vld [vmem:[%s3324] ss:$2 sm:$0xff]
      %s3326 = scalar_lea.vmem %s354, 337 [#allocation3]
      %v3327 = vld [vmem:[%s3326] ss:$2 sm:$0xff]
      %s3328 = scalar_lea.vmem %s354, 417 [#allocation3]
      %v3329 = vld [vmem:[%s3328] ss:$2 sm:$0xff]
      %s3330 = scalar_lea.vmem %s354, 497 [#allocation3]
      %v3331 = vld [vmem:[%s3330] ss:$2 sm:$0xff]
      %s3332 = scalar_lea.vmem %s354, 577 [#allocation3]
      %v3333 = vld [vmem:[%s3332] ss:$2 sm:$0xff]
      %s3334 = scalar_lea.vmem [#allocation3], 80
      %s3335 = scalar_lea.vmem %s3334, 15 [#allocation3]
      %v3336 = vld [vmem:[%s3335] ss:$2 sm:$0xff]
      %s3337 = scalar_lea.vmem %s3334, 95 [#allocation3]
      %v3338 = vld [vmem:[%s3337] ss:$2 sm:$0xff]
      %s3339 = scalar_lea.vmem %s3334, 175 [#allocation3]
      %v3340 = vld [vmem:[%s3339] ss:$2 sm:$0xff]
      %s3341 = scalar_lea.vmem %s3334, 255 [#allocation3]
      %v3342 = vld [vmem:[%s3341] ss:$2 sm:$0xff]
      %s3343 = scalar_lea.vmem %s3334, 335 [#allocation3]
      %v3344 = vld [vmem:[%s3343] ss:$2 sm:$0xff]
      %s3345 = scalar_lea.vmem %s3334, 415 [#allocation3]
      %v3346 = vld [vmem:[%s3345] ss:$2 sm:$0xff]
      %s3347 = scalar_lea.vmem %s3334, 495 [#allocation3]
      %v3348 = vld [vmem:[%s3347] ss:$2 sm:$0xff]
      %s3349 = scalar_lea.vmem %s3334, 575 [#allocation3]
      %v3350 = vld [vmem:[%s3349] ss:$2 sm:$0xff]
      %s3351 = scalar_lea.vmem %s3334, 16 [#allocation3]
      %v3352 = vld [vmem:[%s3351] ss:$2 sm:$0xff]
      %s3353 = scalar_lea.vmem %s3334, 96 [#allocation3]
      %v3354 = vld [vmem:[%s3353] ss:$2 sm:$0xff]
      %s3355 = scalar_lea.vmem %s3334, 176 [#allocation3]
      %v3356 = vld [vmem:[%s3355] ss:$2 sm:$0xff]
      %s3357 = scalar_lea.vmem %s3334, 256 [#allocation3]
      %v3358 = vld [vmem:[%s3357] ss:$2 sm:$0xff]
      %s3359 = scalar_lea.vmem %s3334, 336 [#allocation3]
      %v3360 = vld [vmem:[%s3359] ss:$2 sm:$0xff]
      %s3361 = scalar_lea.vmem %s3334, 416 [#allocation3]
      %v3362 = vld [vmem:[%s3361] ss:$2 sm:$0xff]
      %s3363 = scalar_lea.vmem %s3334, 496 [#allocation3]
      %v3364 = vld [vmem:[%s3363] ss:$2 sm:$0xff]
      %s3365 = scalar_lea.vmem %s3334, 576 [#allocation3]
      %v3366 = vld [vmem:[%s3365] ss:$2 sm:$0xff]
      %s3367 = scalar_lea.vmem %s3334, 17 [#allocation3]
      %v3368 = vld [vmem:[%s3367] ss:$2 sm:$0xff]
      %s3369 = scalar_lea.vmem %s3334, 97 [#allocation3]
      %v3370 = vld [vmem:[%s3369] ss:$2 sm:$0xff]
      %s3371 = scalar_lea.vmem %s3334, 177 [#allocation3]
      %v3372 = vld [vmem:[%s3371] ss:$2 sm:$0xff]
      %s3373 = scalar_lea.vmem %s3334, 257 [#allocation3]
      %v3374 = vld [vmem:[%s3373] ss:$2 sm:$0xff]
      %s3375 = scalar_lea.vmem %s3334, 337 [#allocation3]
      %v3376 = vld [vmem:[%s3375] ss:$2 sm:$0xff]
      %s3377 = scalar_lea.vmem %s3334, 417 [#allocation3]
      %v3378 = vld [vmem:[%s3377] ss:$2 sm:$0xff]
      %s3379 = scalar_lea.vmem %s3334, 497 [#allocation3]
      %v3380 = vld [vmem:[%s3379] ss:$2 sm:$0xff]
      %s3381 = scalar_lea.vmem %s3334, 577 [#allocation3]
      %v3382 = vld [vmem:[%s3381] ss:$2 sm:$0xff]
      %3391 = vrot.lane.b32.xlu0 %v3255, 4
      %v3392 = vpop.permute.xlu0 %3391
      %3393 = vrot.lane.b32.xlu0 %v3257, 4
      %v3394 = vpop.permute.xlu0 %3393
      %3395 = vrot.lane.b32.xlu0 %v3259, 4
      %v3396 = vpop.permute.xlu0 %3395
      %3397 = vrot.lane.b32.xlu0 %v3261, 4
      %v3398 = vpop.permute.xlu0 %3397
      %3399 = vrot.lane.b32.xlu0 %v3263, 4
      %v3400 = vpop.permute.xlu0 %3399
      %3401 = vrot.lane.b32.xlu0 %v3265, 4
      %v3402 = vpop.permute.xlu0 %3401
      %3403 = vrot.lane.b32.xlu0 %v3267, 4
      %v3404 = vpop.permute.xlu0 %3403
      %3405 = vrot.lane.b32.xlu0 %v3269, 4
      %v3406 = vpop.permute.xlu0 %3405
      %3423 = vrot.lane.b32.xlu0 %v3271, 8
      %v3424 = vpop.permute.xlu0 %3423
      %3425 = vrot.lane.b32.xlu0 %v3273, 8
      %v3426 = vpop.permute.xlu0 %3425
      %3427 = vrot.lane.b32.xlu0 %v3275, 8
      %v3428 = vpop.permute.xlu0 %3427
      %3429 = vrot.lane.b32.xlu0 %v3277, 8
      %v3430 = vpop.permute.xlu0 %3429
      %3431 = vrot.lane.b32.xlu0 %v3279, 8
      %v3432 = vpop.permute.xlu0 %3431
      %3433 = vrot.lane.b32.xlu0 %v3281, 8
      %v3434 = vpop.permute.xlu0 %3433
      %3435 = vrot.lane.b32.xlu0 %v3283, 8
      %v3436 = vpop.permute.xlu0 %3435
      %3437 = vrot.lane.b32.xlu0 %v3285, 8
      %v3438 = vpop.permute.xlu0 %3437
      %3455 = vrot.lane.b32.xlu0 %v3287, 12
      %v3456 = vpop.permute.xlu0 %3455
      %3457 = vrot.lane.b32.xlu0 %v3289, 12
      %v3458 = vpop.permute.xlu0 %3457
      %3459 = vrot.lane.b32.xlu0 %v3291, 12
      %v3460 = vpop.permute.xlu0 %3459
      %3461 = vrot.lane.b32.xlu0 %v3293, 12
      %v3462 = vpop.permute.xlu0 %3461
      %3463 = vrot.lane.b32.xlu0 %v3295, 12
      %v3464 = vpop.permute.xlu0 %3463
      %3465 = vrot.lane.b32.xlu0 %v3297, 12
      %v3466 = vpop.permute.xlu0 %3465
      %3467 = vrot.lane.b32.xlu0 %v3299, 12
      %v3468 = vpop.permute.xlu0 %3467
      %3469 = vrot.lane.b32.xlu0 %v3301, 12
      %v3470 = vpop.permute.xlu0 %3469
      %3487 = vrot.lane.b32.xlu0 %v3303, 16
      %v3488 = vpop.permute.xlu0 %3487
      %3489 = vrot.lane.b32.xlu0 %v3305, 16
      %v3490 = vpop.permute.xlu0 %3489
      %3491 = vrot.lane.b32.xlu0 %v3307, 16
      %v3492 = vpop.permute.xlu0 %3491
      %3493 = vrot.lane.b32.xlu0 %v3309, 16
      %v3494 = vpop.permute.xlu0 %3493
      %3495 = vrot.lane.b32.xlu0 %v3311, 16
      %v3496 = vpop.permute.xlu0 %3495
      %3497 = vrot.lane.b32.xlu0 %v3313, 16
      %v3498 = vpop.permute.xlu0 %3497
      %3499 = vrot.lane.b32.xlu0 %v3315, 16
      %v3500 = vpop.permute.xlu0 %3499
      %3501 = vrot.lane.b32.xlu0 %v3317, 16
      %v3502 = vpop.permute.xlu0 %3501
      %3519 = vrot.lane.b32.xlu0 %v3319, 20
      %v3520 = vpop.permute.xlu0 %3519
      %3521 = vrot.lane.b32.xlu0 %v3321, 20
      %v3522 = vpop.permute.xlu0 %3521
      %3523 = vrot.lane.b32.xlu0 %v3323, 20
      %v3524 = vpop.permute.xlu0 %3523
      %3525 = vrot.lane.b32.xlu0 %v3325, 20
      %v3526 = vpop.permute.xlu0 %3525
      %3527 = vrot.lane.b32.xlu0 %v3327, 20
      %v3528 = vpop.permute.xlu0 %3527
      %3529 = vrot.lane.b32.xlu0 %v3329, 20
      %v3530 = vpop.permute.xlu0 %3529
      %3531 = vrot.lane.b32.xlu0 %v3331, 20
      %v3532 = vpop.permute.xlu0 %3531
      %3533 = vrot.lane.b32.xlu0 %v3333, 20
      %v3534 = vpop.permute.xlu0 %3533
      %3551 = vrot.lane.b32.xlu0 %v3336, 24
      %v3552 = vpop.permute.xlu0 %3551
      %3553 = vrot.lane.b32.xlu0 %v3338, 24
      %v3554 = vpop.permute.xlu0 %3553
      %3555 = vrot.lane.b32.xlu0 %v3340, 24
      %v3556 = vpop.permute.xlu0 %3555
      %3557 = vrot.lane.b32.xlu0 %v3342, 24
      %v3558 = vpop.permute.xlu0 %3557
      %3559 = vrot.lane.b32.xlu0 %v3344, 24
      %v3560 = vpop.permute.xlu0 %3559
      %3561 = vrot.lane.b32.xlu0 %v3346, 24
      %v3562 = vpop.permute.xlu0 %3561
      %3563 = vrot.lane.b32.xlu0 %v3348, 24
      %v3564 = vpop.permute.xlu0 %3563
      %3565 = vrot.lane.b32.xlu0 %v3350, 24
      %v3566 = vpop.permute.xlu0 %3565
      %3583 = vrot.lane.b32.xlu0 %v3352, 28
      %v3584 = vpop.permute.xlu0 %3583
      %3585 = vrot.lane.b32.xlu0 %v3354, 28
      %v3586 = vpop.permute.xlu0 %3585
      %3587 = vrot.lane.b32.xlu0 %v3356, 28
      %v3588 = vpop.permute.xlu0 %3587
      %3589 = vrot.lane.b32.xlu0 %v3358, 28
      %v3590 = vpop.permute.xlu0 %3589
      %3591 = vrot.lane.b32.xlu0 %v3360, 28
      %v3592 = vpop.permute.xlu0 %3591
      %3593 = vrot.lane.b32.xlu0 %v3362, 28
      %v3594 = vpop.permute.xlu0 %3593
      %3595 = vrot.lane.b32.xlu0 %v3364, 28
      %v3596 = vpop.permute.xlu0 %3595
      %3597 = vrot.lane.b32.xlu0 %v3366, 28
      %v3598 = vpop.permute.xlu0 %3597
      %3615 = vrot.lane.b32.xlu0 %v3368, 32
      %v3616 = vpop.permute.xlu0 %3615
      %3617 = vrot.lane.b32.xlu0 %v3370, 32
      %v3618 = vpop.permute.xlu0 %3617
      %3619 = vrot.lane.b32.xlu0 %v3372, 32
      %v3620 = vpop.permute.xlu0 %3619
      %3621 = vrot.lane.b32.xlu0 %v3374, 32
      %v3622 = vpop.permute.xlu0 %3621
      %3623 = vrot.lane.b32.xlu0 %v3376, 32
      %v3624 = vpop.permute.xlu0 %3623
      %3625 = vrot.lane.b32.xlu0 %v3378, 32
      %v3626 = vpop.permute.xlu0 %3625
      %3627 = vrot.lane.b32.xlu0 %v3380, 32
      %v3628 = vpop.permute.xlu0 %3627
      %3629 = vrot.lane.b32.xlu0 %v3382, 32
      %v3630 = vpop.permute.xlu0 %3629
      %v3639 = vsel %vm345, %v3239, %v3392
      %v3640 = vsel %vm345, %v3241, %v3394
      %v3641 = vsel %vm345, %v3243, %v3396
      %v3642 = vsel %vm345, %v3245, %v3398
      %v3643 = vsel %vm345, %v3247, %v3400
      %v3644 = vsel %vm345, %v3249, %v3402
      %v3645 = vsel %vm345, %v3251, %v3404
      %v3646 = vsel %vm345, %v3253, %v3406
      %v3647 = vsel %vm1369, %v3639, %v3424
      %v3648 = vsel %vm1369, %v3640, %v3426
      %v3649 = vsel %vm1369, %v3641, %v3428
      %v3650 = vsel %vm1369, %v3642, %v3430
      %v3651 = vsel %vm1369, %v3643, %v3432
      %v3652 = vsel %vm1369, %v3644, %v3434
      %v3653 = vsel %vm1369, %v3645, %v3436
      %v3654 = vsel %vm1369, %v3646, %v3438
      %v3655 = vsel %vm1402, %v3647, %v3456
      %v3656 = vsel %vm1402, %v3648, %v3458
      %v3657 = vsel %vm1402, %v3649, %v3460
      %v3658 = vsel %vm1402, %v3650, %v3462
      %v3659 = vsel %vm1402, %v3651, %v3464
      %v3660 = vsel %vm1402, %v3652, %v3466
      %v3661 = vsel %vm1402, %v3653, %v3468
      %v3662 = vsel %vm1402, %v3654, %v3470
      %v3663 = vsel %vm1435, %v3655, %v3488
      %v3664 = vsel %vm1435, %v3656, %v3490
      %v3665 = vsel %vm1435, %v3657, %v3492
      %v3666 = vsel %vm1435, %v3658, %v3494
      %v3667 = vsel %vm1435, %v3659, %v3496
      %v3668 = vsel %vm1435, %v3660, %v3498
      %v3669 = vsel %vm1435, %v3661, %v3500
      %v3670 = vsel %vm1435, %v3662, %v3502
      %v3671 = vsel %vm1460, %v3663, %v3520
      %v3672 = vsel %vm1460, %v3664, %v3522
      %v3673 = vsel %vm1460, %v3665, %v3524
      %v3674 = vsel %vm1460, %v3666, %v3526
      %v3675 = vsel %vm1460, %v3667, %v3528
      %v3676 = vsel %vm1460, %v3668, %v3530
      %v3677 = vsel %vm1460, %v3669, %v3532
      %v3678 = vsel %vm1460, %v3670, %v3534
      %v3679 = vsel %vm1493, %v3671, %v3552
      %v3680 = vsel %vm1493, %v3672, %v3554
      %v3681 = vsel %vm1493, %v3673, %v3556
      %v3682 = vsel %vm1493, %v3674, %v3558
      %v3683 = vsel %vm1493, %v3675, %v3560
      %v3684 = vsel %vm1493, %v3676, %v3562
      %v3685 = vsel %vm1493, %v3677, %v3564
      %v3686 = vsel %vm1493, %v3678, %v3566
      %v3687 = vsel %vm1526, %v3679, %v3584
      %v3688 = vsel %vm1526, %v3680, %v3586
      %v3689 = vsel %vm1526, %v3681, %v3588
      %v3690 = vsel %vm1526, %v3682, %v3590
      %v3691 = vsel %vm1526, %v3683, %v3592
      %v3692 = vsel %vm1526, %v3684, %v3594
      %v3693 = vsel %vm1526, %v3685, %v3596
      %v3694 = vsel %vm1526, %v3686, %v3598
      %v3695 = vsel %vm1551, %v3687, %v3616
      %v3696 = vsel %vm1551, %v3688, %v3618
      %v3697 = vsel %vm1551, %v3689, %v3620
      %v3698 = vsel %vm1551, %v3690, %v3622
      %v3699 = vsel %vm1551, %v3691, %v3624
      %v3700 = vsel %vm1551, %v3692, %v3626
      %v3701 = vsel %vm1551, %v3693, %v3628
      %v3702 = vsel %vm1551, %v3694, %v3630
      %v3703 = vpack.c.bf16 %v3696, %v3695
      %v3704 = vpack.c.bf16 %v3698, %v3697
      %v3705 = vpack.c.bf16 %v3700, %v3699
      %v3706 = vpack.c.bf16 %v3702, %v3701
      %v3707 = vld [vmem:[%s3] sm:$0x3]
      %v3708 = vld [vmem:[%s4] sm:$0xf]
      %3710 = vset.pattern.permute.xlu0 0
      %3711 = vperm.xlu0 %3710, %v3708
      %v3712 = vpop.permute.xlu0 %3711
      %v3715 = vsel %vm1720, %v3707, 0
      %v3718 = vsel %vm1720, %v3703, 0
      %v3721 = vsel %vm1720, %v3704, 0
      %v3724 = vsel %vm1720, %v3705, 0
      %v3727 = vsel %vm1720, %v3706, 0
      %3729 = vmatpush.bf16.xpose.msra.mxu0 0
      %3730 = vmatpush.bf16.xpose.msra.mxu0 0
      %3731 = vmatpush.bf16.xpose.msra.mxu0 0
      %3732 = vmatpush.bf16.xpose.msra.mxu0 0
      %3733 = vmatpush.bf16.xpose.msra.mxu0 %v3727
      %3734 = vmatpush.bf16.xpose.msra.mxu0 %v3724
      %3735 = vmatpush.bf16.xpose.msra.mxu0 %v3721
      %3736 = vmatpush.bf16.xpose.msra.mxu0 %v3718
      %3737 = vmatmul.bf16.gmra.mxu0 %v3715
      %v3738 = vpop.f32.mrf.mxu0
      %v3739 = vadd.f32 %v3712, %v3738
      %v3740 = vpop.f32.mrf.mxu0
      %3741 = vdwg.mxu0
      %vm3742 = vcmp.ge.f32.partialorder %v3739, 0.0
      %v3743 = vmul.f32 %v3739, 0.01
      %v3744 = vsel %vm3742, %v3739, %v3743
      %v3745 = vpack.c.bf16 %v3744, %v3744
      %vm3746 = vcmask 517120
      %3747 = vst.msk [vmem:[%s222] sm:$0x3] %vm3746, %v3745
      %p3748 = scmp.lt.s32.totalorder %s16, 1
      %s3749 = scalar_select %p3748, %s16, 1
      %s3750 = smul.addr %s3749, 2
      %s3751 = scalar_lea.vmem %s5, %s3750
      // Predicated region
      $region41: #{conv_block.1} parent=39 // pred_check
        %p3752 = pneg %p144
      $region42: #{conv_block.1} parent=39 // pred_check_branch
        %3754 = sbr.rel (%p3752) target = $region44
      $region43: #{conv_block.1} parent=39 // pred_region
        _
      $region44: #{conv_block.1} parent=39 // pred_fallthru
        _
    $region40: #{conv_block.1} parent=5 // pred_fallthru
      _
    %p3755 = scmp.le.s32.totalorder 2, %s11
    // Predicated region
    $region45: #{conv_block.1} parent=5 // pred_check
      %p3756 = pneg %p3755
    $region46: #{conv_block.1} parent=5 // pred_check_branch
      %3758 = sbr.rel (%p3756) target = $region48
    $region47: #{conv_block.1} parent=5 // pred_region
      %s3759 = ssub.s32 %s11, 2
      // Predicated region
      $region49: #{conv_block.1} parent=47 // pred_check
        %p3760 = pneg %p150
      $region50: #{conv_block.1} parent=47 // pred_check_branch
        %3762 = sbr.rel (%p3760) target = $region52
      $region51: #{conv_block.1} parent=47 // pred_region
        %p3763 = scmp.lt.s32.totalorder %s17, 1
        %s3764 = scalar_select %p3763, %s17, 1
        %s3765 = smul.addr %s3764, 2
        %s3766 = scalar_lea.vmem %s5, %s3765
      $region52: #{conv_block.1} parent=47 // pred_fallthru
        _
    $region48: #{conv_block.1} parent=5 // pred_fallthru
      _
  $region6: #{conv_block.1} parent=0 // loop_footer
    %s15 = sadd.s32 1, %s11
  $region7: #{conv_block.1} parent=0 // loop_footer_branch
    %10 = sbr.rel target = $region3
  $region8: #{conv_block.1} parent=0 // loop_exit
    _

</llo_original>
